<compile_context>
chip_gen: v7x
topology: tpu7x:2x2x1
jax: 0.10.0
libtpu: 0.0.40
codegen_flags: <defaults>
</compile_context>

<pallas_src>
import functools

import jax
import jax.numpy as jnp
from jax.experimental import pallas as pl
from jax.experimental.pallas import tpu as pltpu


def taenet_kernel(x_ref, w_are_ref, b_are_ref,
                  w_ih_g_ref, w_hh_g_ref, b_g_ref,
                  w_out_t_ref, b_out_ref,
                  out_ref,
                  *, seq_len, bb, res, alpha):
    """One batch block (BB sequences) of the TAEnet forward, all in VMEM.

    x_ref     : (T*BB, C)       interleaved time-major input, row index = t*BB + b
    w_are_ref : (T*BB, T*BB)    kron(W_ar, I_BB)  (AR weight, batch-expanded)
    b_are_ref : (T*BB, 1)       AR bias, repeated per batch row
    w_ih_g    : (4, C, H)       LSTM input weights, gate-major (i, f, g, o), pre-transposed
    w_hh_g    : (4, H, H)       LSTM hidden weights, gate-major, pre-transposed
    b_g       : (4, 1, H)       LSTM bias, gate-major (b_ih + b_hh folded)
    w_out_t   : (H, C)          output projection, pre-transposed
    b_out     : (1, C)          output projection bias
    out_ref   : (T*BB, C)       ar + rnn, same row indexing as x_ref
    """
    H = w_hh_g_ref.shape[-1]

    x2 = x_ref[...]                                                       # (T*BB, C)

    # ---- AR: one batch-expanded matmul over the whole block (off the serial path).
    ar2 = jnp.dot(w_are_ref[...], x2,
                  preferred_element_type=jnp.float32) + b_are_ref[...]    # (T*BB, C)

    # ---- Hoisted LSTM input projection: whole block, per gate (bias folded). ----
    gx = [
        jnp.dot(x2, w_ih_g_ref[g], preferred_element_type=jnp.float32) + b_g_ref[g]
        for g in range(4)                                                 # i, f, g, o
    ]                                                                     # each (T*BB, H)
    w_hh = [w_hh_g_ref[g] for g in range(4)]                              # four (H, H)

    # ---- Serial recurrence over time, batched over BB sequences at once. -------
    # Fully unrolled (T static & small); h/c stay in vregs; every gx slice is a
    # static, sublane-aligned row block.
    h = jnp.zeros((bb, H), jnp.float32)
    c = jnp.zeros((bb, H), jnp.float32)
    hs = []
    for t in range(seq_len):
        lo, hi = t * bb, (t + 1) * bb
        i_g = jax.nn.sigmoid(gx[0][lo:hi]
                             + jnp.dot(h, w_hh[0], preferred_element_type=jnp.float32))
        f_g = jax.nn.sigmoid(gx[1][lo:hi]
                             + jnp.dot(h, w_hh[1], preferred_element_type=jnp.float32))
        g_g = jnp.tanh(gx[2][lo:hi]
                       + jnp.dot(h, w_hh[2], preferred_element_type=jnp.float32))
        o_g = jax.nn.sigmoid(gx[3][lo:hi]
                             + jnp.dot(h, w_hh[3], preferred_element_type=jnp.float32))
        c = f_g * c + i_g * g_g
        h = o_g * jnp.tanh(c)
        if t >= res:                                   # alpha-weighted residual skip
            h = h + alpha * hs[t - res]
        hs.append(h)

    # ---- Hoisted output projection: ONE matmul over all timesteps & batch rows. -
    hist2 = jnp.concatenate(hs, axis=0)                                   # (T*BB, H)
    rnn2 = jnp.dot(hist2, w_out_t_ref[...],
                   preferred_element_type=jnp.float32) + b_out_ref[...]   # (T*BB, C)

    out_ref[...] = (ar2 + rnn2).astype(out_ref.dtype)


def _ceil_to(x, m):
    return -(-x // m) * m


def _vmem_bytes(shape, itemsize=4):
    """Crude (8, 128)-tile-padded VMEM footprint estimate for one buffer."""
    shape = tuple(shape)
    if len(shape) < 2:
        shape = (1,) * (2 - len(shape)) + shape
    lead = 1
    for d in shape[:-2]:
        lead *= d
    return lead * _ceil_to(shape[-2], 8) * _ceil_to(shape[-1], 128) * itemsize


def taenet_forward(x, params, *, res, alpha, batch_block=8):
    """x: (B, C, T) float32 (PyTorch layout). Returns (B, C, T) float32."""
    B, C, T = x.shape
    H = params["w_hh"].shape[1]
    BB = batch_block                       # 8 = one sublane tile; padding rows are free
    G = -(-B // BB)                        # number of batch blocks (grid size)
    Bpad = G * BB

    # ---- layout-only glue (no model compute): interleaved time-major input -----
    x_tm = jnp.transpose(x, (2, 0, 1))                                    # (T, B, C)
    if Bpad != B:
        x_tm = jnp.pad(x_tm, ((0, 0), (0, Bpad - B), (0, 0)))             # (T, Bpad, C)
    # per block g: row (t*BB + b_local) -> x[b = g*BB + b_local, :, t]
    x_blk = (x_tm.reshape(T, G, BB, C)
                 .transpose(1, 0, 2, 3)
                 .reshape(G * T * BB, C))                                 # (G*T*BB, C)

    # Batch-expanded AR weight (block-diagonal in the local batch index).
    eye = jnp.eye(BB, dtype=jnp.float32)
    w_are = jnp.kron(params["w_ar"].astype(jnp.float32), eye)             # (T*BB, T*BB)
    b_are = jnp.repeat(params["b_ar"].reshape(T, 1), BB, axis=0)          # (T*BB, 1)

    # Gate-major, pre-transposed LSTM weights.
    w_ih_g = jnp.transpose(params["w_ih"].reshape(4, H, C), (0, 2, 1))    # (4, C, H)
    w_hh_g = jnp.transpose(params["w_hh"].reshape(4, H, H), (0, 2, 1))    # (4, H, H)
    b_g = params["b_lstm"].reshape(4, 1, H)                               # (4, 1, H)
    w_out_t = params["w_out"].T                                           # (H, C)
    b_out = params["b_out"]                                               # (1, C)

    operands = (x_blk, w_are, b_are, w_ih_g, w_hh_g, b_g, w_out_t, b_out)

    # VMEM budget: resident weights + double-buffered per-block activations.
    est = sum(_vmem_bytes(op.shape) for op in operands[1:])               # weights
    est += 2 * 2 * _vmem_bytes((T * BB, C))                               # in/out blocks
    est += 2 * _vmem_bytes((T * BB, H))                                   # gx / hist values
    vmem_limit = int(min(max(2 * est, 32 * 1024 * 1024), 64 * 1024 * 1024))

    kernel = functools.partial(taenet_kernel, seq_len=T, bb=BB, res=res, alpha=alpha)

    out_blk = pl.pallas_call(
        kernel,
        out_shape=jax.ShapeDtypeStruct((G * T * BB, C), jnp.float32),
        grid=(G,),
        in_specs=[
            pl.BlockSpec((T * BB, C), lambda g: (g, 0)),          # x block (interleaved)
            pl.BlockSpec((T * BB, T * BB), lambda g: (0, 0)),     # kron(W_ar, I_BB)
            pl.BlockSpec((T * BB, 1), lambda g: (0, 0)),          # b_ar (expanded)
            pl.BlockSpec((4, C, H), lambda g: (0, 0, 0)),         # w_ih (gate-major)
            pl.BlockSpec((4, H, H), lambda g: (0, 0, 0)),         # w_hh (gate-major)
            pl.BlockSpec((4, 1, H), lambda g: (0, 0, 0)),         # b_lstm (gate-major)
            pl.BlockSpec((H, C), lambda g: (0, 0)),               # w_out^T
            pl.BlockSpec((1, C), lambda g: (0, 0)),               # b_out
        ],
        out_specs=pl.BlockSpec((T * BB, C), lambda g: (g, 0)),
        compiler_params=pltpu.CompilerParams(
            dimension_semantics=("parallel",),                    # batch blocks -> both TCs
            vmem_limit_bytes=vmem_limit),
    )(*operands)

    # Undo the interleaving (layout plumbing only) -> PyTorch (B, C, T) layout.
    out = (out_blk.reshape(G, T, BB, C)
                  .transpose(0, 2, 3, 1)
                  .reshape(Bpad, C, T))[:B]
    return out


def taenet_reference(x, params, *, res, alpha):
    """Pure-JAX reference with identical semantics (validation only)."""
    B, C, T = x.shape
    H = params["w_hh"].shape[1]

    ar = jnp.einsum("bct,ot->bco", x, params["w_ar"]) + params["b_ar"]     # (B, C, T)

    xt = jnp.transpose(x, (2, 0, 1))                                       # (T, B, C)
    w_ih_t = params["w_ih"].T
    w_hh_t = params["w_hh"].T
    h = jnp.zeros((B, H), jnp.float32)
    c = jnp.zeros((B, H), jnp.float32)
    hs = []
    for t in range(T):
        gates = xt[t] @ w_ih_t + h @ w_hh_t + params["b_lstm"]
        i_g = jax.nn.sigmoid(gates[:, 0:H])
        f_g = jax.nn.sigmoid(gates[:, H:2 * H])
        g_g = jnp.tanh(gates[:, 2 * H:3 * H])
        o_g = jax.nn.sigmoid(gates[:, 3 * H:4 * H])
        c = f_g * c + i_g * g_g
        h = o_g * jnp.tanh(c)
        if t >= res:
            h = h + alpha * hs[t - res]
        hs.append(h)
    hseq = jnp.stack(hs, axis=0)                                           # (T, B, H)
    rnn = jnp.einsum("tbh,ch->tbc", hseq, params["w_out"]) + params["b_out"]
    rnn = jnp.transpose(rnn, (1, 2, 0))                                    # (B, C, T)
    return ar + rnn


if __name__ == "__main__":
    # Small shapes consistent with forward(x: (batch, num_channels, seq_len)).
    B, C, T, H = 2, 4, 8, 32
    RES, ALPHA = 2, 0.5

    key = jax.random.PRNGKey(0)
    ks = jax.random.split(key, 8)

    x = jax.random.normal(ks[0], (B, C, T), jnp.float32)
    params = {
        "w_ar":   0.1 * jax.random.normal(ks[1], (T, T), jnp.float32),
        "b_ar":   0.1 * jax.random.normal(ks[2], (1, T), jnp.float32),
        "w_ih":   0.1 * jax.random.normal(ks[3], (4 * H, C), jnp.float32),
        "w_hh":   0.1 * jax.random.normal(ks[4], (4 * H, H), jnp.float32),
        "b_lstm": 0.1 * jax.random.normal(ks[5], (1, 4 * H), jnp.float32),
        "w_out":  0.1 * jax.random.normal(ks[6], (C, H), jnp.float32),
        "b_out":  0.1 * jax.random.normal(ks[7], (1, C), jnp.float32),
    }

    out = jax.block_until_ready(taenet_forward(x, params, res=RES, alpha=ALPHA))
    assert out.shape == (B, C, T) and out.dtype == jnp.float32

    ref = jax.block_until_ready(taenet_reference(x, params, res=RES, alpha=ALPHA))
    max_err = float(jnp.max(jnp.abs(out - ref)))
    assert max_err < 5e-3, f"max |err| = {max_err}"

    print("KERNEL_OK")
</pallas_src>

<mosaic_0001>
module attributes {stable_mosaic.version = 11 : i64} {
  func.func @taenet_kernel(%arg0: i32, %arg1: memref<64x4xf32, #tpu.memory_space<vmem>>, %arg2: memref<64x64xf32, #tpu.memory_space<vmem>>, %arg3: memref<64x1xf32, #tpu.memory_space<vmem>>, %arg4: memref<4x4x32xf32, #tpu.memory_space<vmem>>, %arg5: memref<4x32x32xf32, #tpu.memory_space<vmem>>, %arg6: memref<4x1x32xf32, #tpu.memory_space<vmem>>, %arg7: memref<32x4xf32, #tpu.memory_space<vmem>>, %arg8: memref<1x4xf32, #tpu.memory_space<vmem>>, %arg9: memref<64x4xf32, #tpu.memory_space<vmem>>) attributes {dimension_semantics = [#tpu.dimension_semantics<parallel>], iteration_bounds = array<i64: 1>, scalar_prefetch = 0 : i64, scratch_operands = 0 : i64, tpu.core_type = #tpu.core_type<tc>, window_params = [{transform_indices = @transform_0, window_bounds = array<i64: 64, 4>}, {pipeline_mode = #tpu.pipeline_mode<synchronous>, transform_indices = @transform_1, window_bounds = array<i64: 64, 64>}, {pipeline_mode = #tpu.pipeline_mode<synchronous>, transform_indices = @transform_2, window_bounds = array<i64: 64, 1>}, {pipeline_mode = #tpu.pipeline_mode<synchronous>, transform_indices = @transform_3, window_bounds = array<i64: 4, 4, 32>}, {pipeline_mode = #tpu.pipeline_mode<synchronous>, transform_indices = @transform_4, window_bounds = array<i64: 4, 32, 32>}, {pipeline_mode = #tpu.pipeline_mode<synchronous>, transform_indices = @transform_5, window_bounds = array<i64: 4, 1, 32>}, {pipeline_mode = #tpu.pipeline_mode<synchronous>, transform_indices = @transform_6, window_bounds = array<i64: 32, 4>}, {pipeline_mode = #tpu.pipeline_mode<synchronous>, transform_indices = @transform_7, window_bounds = array<i64: 1, 4>}, {transform_indices = @transform_8, window_bounds = array<i64: 64, 4>}]} {
    %c0 = arith.constant 0 : index
    %c0_0 = arith.constant 0 : index
    %0 = vector.load %arg1[%c0, %c0_0] : memref<64x4xf32, #tpu.memory_space<vmem>>, vector<64x4xf32>
    %c0_1 = arith.constant 0 : index
    %c0_2 = arith.constant 0 : index
    %1 = vector.load %arg2[%c0_1, %c0_2] : memref<64x64xf32, #tpu.memory_space<vmem>>, vector<64x64xf32>
    %cst = arith.constant dense<0.000000e+00> : vector<64x4xf32>
    %2 = tpu.matmul %1, %0, %cst {dimension_numbers = #tpu.dot_dimension_numbers<[1], [0], [0], [1], [0, 0, 1, 1], [], []>} : vector<64x64xf32>, vector<64x4xf32>, vector<64x4xf32> -> vector<64x4xf32>
    %c0_3 = arith.constant 0 : index
    %c0_4 = arith.constant 0 : index
    %3 = vector.load %arg3[%c0_3, %c0_4] : memref<64x1xf32, #tpu.memory_space<vmem>>, vector<64x1xf32>
    %4 = vector.broadcast %3 : vector<64x1xf32> to vector<64x4xf32>
    %5 = arith.addf %2, %4 : vector<64x4xf32>
    %c0_5 = arith.constant 0 : index
    %c0_6 = arith.constant 0 : index
    %c0_7 = arith.constant 0 : index
    %6 = vector.load %arg4[%c0_5, %c0_6, %c0_7] : memref<4x4x32xf32, #tpu.memory_space<vmem>>, vector<1x4x32xf32>
    %7 = vector.shape_cast %6 : vector<1x4x32xf32> to vector<4x32xf32>
    %cst_8 = arith.constant dense<0.000000e+00> : vector<64x32xf32>
    %8 = tpu.matmul %0, %7, %cst_8 {dimension_numbers = #tpu.dot_dimension_numbers<[1], [0], [0], [1], [0, 0, 1, 1], [], []>} : vector<64x4xf32>, vector<4x32xf32>, vector<64x32xf32> -> vector<64x32xf32>
    %c0_9 = arith.constant 0 : index
    %c0_10 = arith.constant 0 : index
    %c0_11 = arith.constant 0 : index
    %9 = vector.load %arg6[%c0_9, %c0_10, %c0_11] : memref<4x1x32xf32, #tpu.memory_space<vmem>>, vector<1x1x32xf32>
    %10 = vector.shape_cast %9 : vector<1x1x32xf32> to vector<1x32xf32>
    %11 = vector.broadcast %10 : vector<1x32xf32> to vector<64x32xf32>
    %12 = arith.addf %8, %11 : vector<64x32xf32>
    %c1 = arith.constant 1 : index
    %c0_12 = arith.constant 0 : index
    %c0_13 = arith.constant 0 : index
    %13 = vector.load %arg4[%c1, %c0_12, %c0_13] : memref<4x4x32xf32, #tpu.memory_space<vmem>>, vector<1x4x32xf32>
    %14 = vector.shape_cast %13 : vector<1x4x32xf32> to vector<4x32xf32>
    %cst_14 = arith.constant dense<0.000000e+00> : vector<64x32xf32>
    %15 = tpu.matmul %0, %14, %cst_14 {dimension_numbers = #tpu.dot_dimension_numbers<[1], [0], [0], [1], [0, 0, 1, 1], [], []>} : vector<64x4xf32>, vector<4x32xf32>, vector<64x32xf32> -> vector<64x32xf32>
    %c1_15 = arith.constant 1 : index
    %c0_16 = arith.constant 0 : index
    %c0_17 = arith.constant 0 : index
    %16 = vector.load %arg6[%c1_15, %c0_16, %c0_17] : memref<4x1x32xf32, #tpu.memory_space<vmem>>, vector<1x1x32xf32>
    %17 = vector.shape_cast %16 : vector<1x1x32xf32> to vector<1x32xf32>
    %18 = vector.broadcast %17 : vector<1x32xf32> to vector<64x32xf32>
    %19 = arith.addf %15, %18 : vector<64x32xf32>
    %c2 = arith.constant 2 : index
    %c0_18 = arith.constant 0 : index
    %c0_19 = arith.constant 0 : index
    %20 = vector.load %arg4[%c2, %c0_18, %c0_19] : memref<4x4x32xf32, #tpu.memory_space<vmem>>, vector<1x4x32xf32>
    %21 = vector.shape_cast %20 : vector<1x4x32xf32> to vector<4x32xf32>
    %cst_20 = arith.constant dense<0.000000e+00> : vector<64x32xf32>
    %22 = tpu.matmul %0, %21, %cst_20 {dimension_numbers = #tpu.dot_dimension_numbers<[1], [0], [0], [1], [0, 0, 1, 1], [], []>} : vector<64x4xf32>, vector<4x32xf32>, vector<64x32xf32> -> vector<64x32xf32>
    %c2_21 = arith.constant 2 : index
    %c0_22 = arith.constant 0 : index
    %c0_23 = arith.constant 0 : index
    %23 = vector.load %arg6[%c2_21, %c0_22, %c0_23] : memref<4x1x32xf32, #tpu.memory_space<vmem>>, vector<1x1x32xf32>
    %24 = vector.shape_cast %23 : vector<1x1x32xf32> to vector<1x32xf32>
    %25 = vector.broadcast %24 : vector<1x32xf32> to vector<64x32xf32>
    %26 = arith.addf %22, %25 : vector<64x32xf32>
    %c3 = arith.constant 3 : index
    %c0_24 = arith.constant 0 : index
    %c0_25 = arith.constant 0 : index
    %27 = vector.load %arg4[%c3, %c0_24, %c0_25] : memref<4x4x32xf32, #tpu.memory_space<vmem>>, vector<1x4x32xf32>
    %28 = vector.shape_cast %27 : vector<1x4x32xf32> to vector<4x32xf32>
    %cst_26 = arith.constant dense<0.000000e+00> : vector<64x32xf32>
    %29 = tpu.matmul %0, %28, %cst_26 {dimension_numbers = #tpu.dot_dimension_numbers<[1], [0], [0], [1], [0, 0, 1, 1], [], []>} : vector<64x4xf32>, vector<4x32xf32>, vector<64x32xf32> -> vector<64x32xf32>
    %c3_27 = arith.constant 3 : index
    %c0_28 = arith.constant 0 : index
    %c0_29 = arith.constant 0 : index
    %30 = vector.load %arg6[%c3_27, %c0_28, %c0_29] : memref<4x1x32xf32, #tpu.memory_space<vmem>>, vector<1x1x32xf32>
    %31 = vector.shape_cast %30 : vector<1x1x32xf32> to vector<1x32xf32>
    %32 = vector.broadcast %31 : vector<1x32xf32> to vector<64x32xf32>
    %33 = arith.addf %29, %32 : vector<64x32xf32>
    %c0_30 = arith.constant 0 : index
    %c0_31 = arith.constant 0 : index
    %c0_32 = arith.constant 0 : index
    %34 = vector.load %arg5[%c0_30, %c0_31, %c0_32] : memref<4x32x32xf32, #tpu.memory_space<vmem>>, vector<1x32x32xf32>
    %35 = vector.shape_cast %34 : vector<1x32x32xf32> to vector<32x32xf32>
    %c1_33 = arith.constant 1 : index
    %c0_34 = arith.constant 0 : index
    %c0_35 = arith.constant 0 : index
    %36 = vector.load %arg5[%c1_33, %c0_34, %c0_35] : memref<4x32x32xf32, #tpu.memory_space<vmem>>, vector<1x32x32xf32>
    %37 = vector.shape_cast %36 : vector<1x32x32xf32> to vector<32x32xf32>
    %c2_36 = arith.constant 2 : index
    %c0_37 = arith.constant 0 : index
    %c0_38 = arith.constant 0 : index
    %38 = vector.load %arg5[%c2_36, %c0_37, %c0_38] : memref<4x32x32xf32, #tpu.memory_space<vmem>>, vector<1x32x32xf32>
    %39 = vector.shape_cast %38 : vector<1x32x32xf32> to vector<32x32xf32>
    %c3_39 = arith.constant 3 : index
    %c0_40 = arith.constant 0 : index
    %c0_41 = arith.constant 0 : index
    %40 = vector.load %arg5[%c3_39, %c0_40, %c0_41] : memref<4x32x32xf32, #tpu.memory_space<vmem>>, vector<1x32x32xf32>
    %41 = vector.shape_cast %40 : vector<1x32x32xf32> to vector<32x32xf32>
    %cst_42 = arith.constant 0.000000e+00 : f32
    %42 = vector.broadcast %cst_42 : f32 to vector<8x32xf32>
    %cst_43 = arith.constant 0.000000e+00 : f32
    %43 = vector.broadcast %cst_43 : f32 to vector<8x32xf32>
    %44 = vector.extract_strided_slice %12 {offsets = [0, 0], sizes = [8, 32], strides = [1, 1]} : vector<64x32xf32> to vector<8x32xf32>
    %cst_44 = arith.constant dense<0.000000e+00> : vector<8x32xf32>
    %45 = tpu.matmul %42, %35, %cst_44 {dimension_numbers = #tpu.dot_dimension_numbers<[1], [0], [0], [1], [0, 0, 1, 1], [], []>} : vector<8x32xf32>, vector<32x32xf32>, vector<8x32xf32> -> vector<8x32xf32>
    %46 = arith.addf %44, %45 : vector<8x32xf32>
    %47 = arith.negf %46 : vector<8x32xf32>
    %48 = math.exp %47 : vector<8x32xf32>
    %cst_45 = arith.constant 1.000000e+00 : f32
    %49 = vector.broadcast %cst_45 : f32 to vector<8x32xf32>
    %50 = arith.addf %49, %48 : vector<8x32xf32>
    %51 = arith.divf %49, %50 : vector<8x32xf32>
    %52 = vector.extract_strided_slice %19 {offsets = [0, 0], sizes = [8, 32], strides = [1, 1]} : vector<64x32xf32> to vector<8x32xf32>
    %cst_46 = arith.constant dense<0.000000e+00> : vector<8x32xf32>
    %53 = tpu.matmul %42, %37, %cst_46 {dimension_numbers = #tpu.dot_dimension_numbers<[1], [0], [0], [1], [0, 0, 1, 1], [], []>} : vector<8x32xf32>, vector<32x32xf32>, vector<8x32xf32> -> vector<8x32xf32>
    %54 = arith.addf %52, %53 : vector<8x32xf32>
    %55 = arith.negf %54 : vector<8x32xf32>
    %56 = math.exp %55 : vector<8x32xf32>
    %cst_47 = arith.constant 1.000000e+00 : f32
    %57 = vector.broadcast %cst_47 : f32 to vector<8x32xf32>
    %58 = arith.addf %57, %56 : vector<8x32xf32>
    %59 = arith.divf %57, %58 : vector<8x32xf32>
    %60 = vector.extract_strided_slice %26 {offsets = [0, 0], sizes = [8, 32], strides = [1, 1]} : vector<64x32xf32> to vector<8x32xf32>
    %cst_48 = arith.constant dense<0.000000e+00> : vector<8x32xf32>
    %61 = tpu.matmul %42, %39, %cst_48 {dimension_numbers = #tpu.dot_dimension_numbers<[1], [0], [0], [1], [0, 0, 1, 1], [], []>} : vector<8x32xf32>, vector<32x32xf32>, vector<8x32xf32> -> vector<8x32xf32>
    %62 = arith.addf %60, %61 : vector<8x32xf32>
    %63 = math.tanh %62 : vector<8x32xf32>
    %64 = vector.extract_strided_slice %33 {offsets = [0, 0], sizes = [8, 32], strides = [1, 1]} : vector<64x32xf32> to vector<8x32xf32>
    %cst_49 = arith.constant dense<0.000000e+00> : vector<8x32xf32>
    %65 = tpu.matmul %42, %41, %cst_49 {dimension_numbers = #tpu.dot_dimension_numbers<[1], [0], [0], [1], [0, 0, 1, 1], [], []>} : vector<8x32xf32>, vector<32x32xf32>, vector<8x32xf32> -> vector<8x32xf32>
    %66 = arith.addf %64, %65 : vector<8x32xf32>
    %67 = arith.negf %66 : vector<8x32xf32>
    %68 = math.exp %67 : vector<8x32xf32>
    %cst_50 = arith.constant 1.000000e+00 : f32
    %69 = vector.broadcast %cst_50 : f32 to vector<8x32xf32>
    %70 = arith.addf %69, %68 : vector<8x32xf32>
    %71 = arith.divf %69, %70 : vector<8x32xf32>
    %72 = arith.mulf %59, %43 : vector<8x32xf32>
    %73 = arith.mulf %51, %63 : vector<8x32xf32>
    %74 = arith.addf %72, %73 : vector<8x32xf32>
    %75 = math.tanh %74 : vector<8x32xf32>
    %76 = arith.mulf %71, %75 : vector<8x32xf32>
    %77 = vector.extract_strided_slice %12 {offsets = [8, 0], sizes = [8, 32], strides = [1, 1]} : vector<64x32xf32> to vector<8x32xf32>
    %cst_51 = arith.constant dense<0.000000e+00> : vector<8x32xf32>
    %78 = tpu.matmul %76, %35, %cst_51 {dimension_numbers = #tpu.dot_dimension_numbers<[1], [0], [0], [1], [0, 0, 1, 1], [], []>} : vector<8x32xf32>, vector<32x32xf32>, vector<8x32xf32> -> vector<8x32xf32>
    %79 = arith.addf %77, %78 : vector<8x32xf32>
    %80 = arith.negf %79 : vector<8x32xf32>
    %81 = math.exp %80 : vector<8x32xf32>
    %cst_52 = arith.constant 1.000000e+00 : f32
    %82 = vector.broadcast %cst_52 : f32 to vector<8x32xf32>
    %83 = arith.addf %82, %81 : vector<8x32xf32>
    %84 = arith.divf %82, %83 : vector<8x32xf32>
    %85 = vector.extract_strided_slice %19 {offsets = [8, 0], sizes = [8, 32], strides = [1, 1]} : vector<64x32xf32> to vector<8x32xf32>
    %cst_53 = arith.constant dense<0.000000e+00> : vector<8x32xf32>
    %86 = tpu.matmul %76, %37, %cst_53 {dimension_numbers = #tpu.dot_dimension_numbers<[1], [0], [0], [1], [0, 0, 1, 1], [], []>} : vector<8x32xf32>, vector<32x32xf32>, vector<8x32xf32> -> vector<8x32xf32>
    %87 = arith.addf %85, %86 : vector<8x32xf32>
    %88 = arith.negf %87 : vector<8x32xf32>
    %89 = math.exp %88 : vector<8x32xf32>
    %cst_54 = arith.constant 1.000000e+00 : f32
    %90 = vector.broadcast %cst_54 : f32 to vector<8x32xf32>
    %91 = arith.addf %90, %89 : vector<8x32xf32>
    %92 = arith.divf %90, %91 : vector<8x32xf32>
    %93 = vector.extract_strided_slice %26 {offsets = [8, 0], sizes = [8, 32], strides = [1, 1]} : vector<64x32xf32> to vector<8x32xf32>
    %cst_55 = arith.constant dense<0.000000e+00> : vector<8x32xf32>
    %94 = tpu.matmul %76, %39, %cst_55 {dimension_numbers = #tpu.dot_dimension_numbers<[1], [0], [0], [1], [0, 0, 1, 1], [], []>} : vector<8x32xf32>, vector<32x32xf32>, vector<8x32xf32> -> vector<8x32xf32>
    %95 = arith.addf %93, %94 : vector<8x32xf32>
    %96 = math.tanh %95 : vector<8x32xf32>
    %97 = vector.extract_strided_slice %33 {offsets = [8, 0], sizes = [8, 32], strides = [1, 1]} : vector<64x32xf32> to vector<8x32xf32>
    %cst_56 = arith.constant dense<0.000000e+00> : vector<8x32xf32>
    %98 = tpu.matmul %76, %41, %cst_56 {dimension_numbers = #tpu.dot_dimension_numbers<[1], [0], [0], [1], [0, 0, 1, 1], [], []>} : vector<8x32xf32>, vector<32x32xf32>, vector<8x32xf32> -> vector<8x32xf32>
    %99 = arith.addf %97, %98 : vector<8x32xf32>
    %100 = arith.negf %99 : vector<8x32xf32>
    %101 = math.exp %100 : vector<8x32xf32>
    %cst_57 = arith.constant 1.000000e+00 : f32
    %102 = vector.broadcast %cst_57 : f32 to vector<8x32xf32>
    %103 = arith.addf %102, %101 : vector<8x32xf32>
    %104 = arith.divf %102, %103 : vector<8x32xf32>
    %105 = arith.mulf %92, %74 : vector<8x32xf32>
    %106 = arith.mulf %84, %96 : vector<8x32xf32>
    %107 = arith.addf %105, %106 : vector<8x32xf32>
    %108 = math.tanh %107 : vector<8x32xf32>
    %109 = arith.mulf %104, %108 : vector<8x32xf32>
    %110 = vector.extract_strided_slice %12 {offsets = [16, 0], sizes = [8, 32], strides = [1, 1]} : vector<64x32xf32> to vector<8x32xf32>
    %cst_58 = arith.constant dense<0.000000e+00> : vector<8x32xf32>
    %111 = tpu.matmul %109, %35, %cst_58 {dimension_numbers = #tpu.dot_dimension_numbers<[1], [0], [0], [1], [0, 0, 1, 1], [], []>} : vector<8x32xf32>, vector<32x32xf32>, vector<8x32xf32> -> vector<8x32xf32>
    %112 = arith.addf %110, %111 : vector<8x32xf32>
    %113 = arith.negf %112 : vector<8x32xf32>
    %114 = math.exp %113 : vector<8x32xf32>
    %cst_59 = arith.constant 1.000000e+00 : f32
    %115 = vector.broadcast %cst_59 : f32 to vector<8x32xf32>
    %116 = arith.addf %115, %114 : vector<8x32xf32>
    %117 = arith.divf %115, %116 : vector<8x32xf32>
    %118 = vector.extract_strided_slice %19 {offsets = [16, 0], sizes = [8, 32], strides = [1, 1]} : vector<64x32xf32> to vector<8x32xf32>
    %cst_60 = arith.constant dense<0.000000e+00> : vector<8x32xf32>
    %119 = tpu.matmul %109, %37, %cst_60 {dimension_numbers = #tpu.dot_dimension_numbers<[1], [0], [0], [1], [0, 0, 1, 1], [], []>} : vector<8x32xf32>, vector<32x32xf32>, vector<8x32xf32> -> vector<8x32xf32>
    %120 = arith.addf %118, %119 : vector<8x32xf32>
    %121 = arith.negf %120 : vector<8x32xf32>
    %122 = math.exp %121 : vector<8x32xf32>
    %cst_61 = arith.constant 1.000000e+00 : f32
    %123 = vector.broadcast %cst_61 : f32 to vector<8x32xf32>
    %124 = arith.addf %123, %122 : vector<8x32xf32>
    %125 = arith.divf %123, %124 : vector<8x32xf32>
    %126 = vector.extract_strided_slice %26 {offsets = [16, 0], sizes = [8, 32], strides = [1, 1]} : vector<64x32xf32> to vector<8x32xf32>
    %cst_62 = arith.constant dense<0.000000e+00> : vector<8x32xf32>
    %127 = tpu.matmul %109, %39, %cst_62 {dimension_numbers = #tpu.dot_dimension_numbers<[1], [0], [0], [1], [0, 0, 1, 1], [], []>} : vector<8x32xf32>, vector<32x32xf32>, vector<8x32xf32> -> vector<8x32xf32>
    %128 = arith.addf %126, %127 : vector<8x32xf32>
    %129 = math.tanh %128 : vector<8x32xf32>
    %130 = vector.extract_strided_slice %33 {offsets = [16, 0], sizes = [8, 32], strides = [1, 1]} : vector<64x32xf32> to vector<8x32xf32>
    %cst_63 = arith.constant dense<0.000000e+00> : vector<8x32xf32>
    %131 = tpu.matmul %109, %41, %cst_63 {dimension_numbers = #tpu.dot_dimension_numbers<[1], [0], [0], [1], [0, 0, 1, 1], [], []>} : vector<8x32xf32>, vector<32x32xf32>, vector<8x32xf32> -> vector<8x32xf32>
    %132 = arith.addf %130, %131 : vector<8x32xf32>
    %133 = arith.negf %132 : vector<8x32xf32>
    %134 = math.exp %133 : vector<8x32xf32>
    %cst_64 = arith.constant 1.000000e+00 : f32
    %135 = vector.broadcast %cst_64 : f32 to vector<8x32xf32>
    %136 = arith.addf %135, %134 : vector<8x32xf32>
    %137 = arith.divf %135, %136 : vector<8x32xf32>
    %138 = arith.mulf %125, %107 : vector<8x32xf32>
    %139 = arith.mulf %117, %129 : vector<8x32xf32>
    %140 = arith.addf %138, %139 : vector<8x32xf32>
    %141 = math.tanh %140 : vector<8x32xf32>
    %142 = arith.mulf %137, %141 : vector<8x32xf32>
    %cst_65 = arith.constant 5.000000e-01 : f32
    %143 = vector.broadcast %cst_65 : f32 to vector<8x32xf32>
    %144 = arith.mulf %143, %76 : vector<8x32xf32>
    %145 = arith.addf %142, %144 : vector<8x32xf32>
    %146 = vector.extract_strided_slice %12 {offsets = [24, 0], sizes = [8, 32], strides = [1, 1]} : vector<64x32xf32> to vector<8x32xf32>
    %cst_66 = arith.constant dense<0.000000e+00> : vector<8x32xf32>
    %147 = tpu.matmul %145, %35, %cst_66 {dimension_numbers = #tpu.dot_dimension_numbers<[1], [0], [0], [1], [0, 0, 1, 1], [], []>} : vector<8x32xf32>, vector<32x32xf32>, vector<8x32xf32> -> vector<8x32xf32>
    %148 = arith.addf %146, %147 : vector<8x32xf32>
    %149 = arith.negf %148 : vector<8x32xf32>
    %150 = math.exp %149 : vector<8x32xf32>
    %cst_67 = arith.constant 1.000000e+00 : f32
    %151 = vector.broadcast %cst_67 : f32 to vector<8x32xf32>
    %152 = arith.addf %151, %150 : vector<8x32xf32>
    %153 = arith.divf %151, %152 : vector<8x32xf32>
    %154 = vector.extract_strided_slice %19 {offsets = [24, 0], sizes = [8, 32], strides = [1, 1]} : vector<64x32xf32> to vector<8x32xf32>
    %cst_68 = arith.constant dense<0.000000e+00> : vector<8x32xf32>
    %155 = tpu.matmul %145, %37, %cst_68 {dimension_numbers = #tpu.dot_dimension_numbers<[1], [0], [0], [1], [0, 0, 1, 1], [], []>} : vector<8x32xf32>, vector<32x32xf32>, vector<8x32xf32> -> vector<8x32xf32>
    %156 = arith.addf %154, %155 : vector<8x32xf32>
    %157 = arith.negf %156 : vector<8x32xf32>
    %158 = math.exp %157 : vector<8x32xf32>
    %cst_69 = arith.constant 1.000000e+00 : f32
    %159 = vector.broadcast %cst_69 : f32 to vector<8x32xf32>
    %160 = arith.addf %159, %158 : vector<8x32xf32>
    %161 = arith.divf %159, %160 : vector<8x32xf32>
    %162 = vector.extract_strided_slice %26 {offsets = [24, 0], sizes = [8, 32], strides = [1, 1]} : vector<64x32xf32> to vector<8x32xf32>
    %cst_70 = arith.constant dense<0.000000e+00> : vector<8x32xf32>
    %163 = tpu.matmul %145, %39, %cst_70 {dimension_numbers = #tpu.dot_dimension_numbers<[1], [0], [0], [1], [0, 0, 1, 1], [], []>} : vector<8x32xf32>, vector<32x32xf32>, vector<8x32xf32> -> vector<8x32xf32>
    %164 = arith.addf %162, %163 : vector<8x32xf32>
    %165 = math.tanh %164 : vector<8x32xf32>
    %166 = vector.extract_strided_slice %33 {offsets = [24, 0], sizes = [8, 32], strides = [1, 1]} : vector<64x32xf32> to vector<8x32xf32>
    %cst_71 = arith.constant dense<0.000000e+00> : vector<8x32xf32>
    %167 = tpu.matmul %145, %41, %cst_71 {dimension_numbers = #tpu.dot_dimension_numbers<[1], [0], [0], [1], [0, 0, 1, 1], [], []>} : vector<8x32xf32>, vector<32x32xf32>, vector<8x32xf32> -> vector<8x32xf32>
    %168 = arith.addf %166, %167 : vector<8x32xf32>
    %169 = arith.negf %168 : vector<8x32xf32>
    %170 = math.exp %169 : vector<8x32xf32>
    %cst_72 = arith.constant 1.000000e+00 : f32
    %171 = vector.broadcast %cst_72 : f32 to vector<8x32xf32>
    %172 = arith.addf %171, %170 : vector<8x32xf32>
    %173 = arith.divf %171, %172 : vector<8x32xf32>
    %174 = arith.mulf %161, %140 : vector<8x32xf32>
    %175 = arith.mulf %153, %165 : vector<8x32xf32>
    %176 = arith.addf %174, %175 : vector<8x32xf32>
    %177 = math.tanh %176 : vector<8x32xf32>
    %178 = arith.mulf %173, %177 : vector<8x32xf32>
    %cst_73 = arith.constant 5.000000e-01 : f32
    %179 = vector.broadcast %cst_73 : f32 to vector<8x32xf32>
    %180 = arith.mulf %179, %109 : vector<8x32xf32>
    %181 = arith.addf %178, %180 : vector<8x32xf32>
    %182 = vector.extract_strided_slice %12 {offsets = [32, 0], sizes = [8, 32], strides = [1, 1]} : vector<64x32xf32> to vector<8x32xf32>
    %cst_74 = arith.constant dense<0.000000e+00> : vector<8x32xf32>
    %183 = tpu.matmul %181, %35, %cst_74 {dimension_numbers = #tpu.dot_dimension_numbers<[1], [0], [0], [1], [0, 0, 1, 1], [], []>} : vector<8x32xf32>, vector<32x32xf32>, vector<8x32xf32> -> vector<8x32xf32>
    %184 = arith.addf %182, %183 : vector<8x32xf32>
    %185 = arith.negf %184 : vector<8x32xf32>
    %186 = math.exp %185 : vector<8x32xf32>
    %cst_75 = arith.constant 1.000000e+00 : f32
    %187 = vector.broadcast %cst_75 : f32 to vector<8x32xf32>
    %188 = arith.addf %187, %186 : vector<8x32xf32>
    %189 = arith.divf %187, %188 : vector<8x32xf32>
    %190 = vector.extract_strided_slice %19 {offsets = [32, 0], sizes = [8, 32], strides = [1, 1]} : vector<64x32xf32> to vector<8x32xf32>
    %cst_76 = arith.constant dense<0.000000e+00> : vector<8x32xf32>
    %191 = tpu.matmul %181, %37, %cst_76 {dimension_numbers = #tpu.dot_dimension_numbers<[1], [0], [0], [1], [0, 0, 1, 1], [], []>} : vector<8x32xf32>, vector<32x32xf32>, vector<8x32xf32> -> vector<8x32xf32>
    %192 = arith.addf %190, %191 : vector<8x32xf32>
    %193 = arith.negf %192 : vector<8x32xf32>
    %194 = math.exp %193 : vector<8x32xf32>
    %cst_77 = arith.constant 1.000000e+00 : f32
    %195 = vector.broadcast %cst_77 : f32 to vector<8x32xf32>
    %196 = arith.addf %195, %194 : vector<8x32xf32>
    %197 = arith.divf %195, %196 : vector<8x32xf32>
    %198 = vector.extract_strided_slice %26 {offsets = [32, 0], sizes = [8, 32], strides = [1, 1]} : vector<64x32xf32> to vector<8x32xf32>
    %cst_78 = arith.constant dense<0.000000e+00> : vector<8x32xf32>
    %199 = tpu.matmul %181, %39, %cst_78 {dimension_numbers = #tpu.dot_dimension_numbers<[1], [0], [0], [1], [0, 0, 1, 1], [], []>} : vector<8x32xf32>, vector<32x32xf32>, vector<8x32xf32> -> vector<8x32xf32>
    %200 = arith.addf %198, %199 : vector<8x32xf32>
    %201 = math.tanh %200 : vector<8x32xf32>
    %202 = vector.extract_strided_slice %33 {offsets = [32, 0], sizes = [8, 32], strides = [1, 1]} : vector<64x32xf32> to vector<8x32xf32>
    %cst_79 = arith.constant dense<0.000000e+00> : vector<8x32xf32>
    %203 = tpu.matmul %181, %41, %cst_79 {dimension_numbers = #tpu.dot_dimension_numbers<[1], [0], [0], [1], [0, 0, 1, 1], [], []>} : vector<8x32xf32>, vector<32x32xf32>, vector<8x32xf32> -> vector<8x32xf32>
    %204 = arith.addf %202, %203 : vector<8x32xf32>
    %205 = arith.negf %204 : vector<8x32xf32>
    %206 = math.exp %205 : vector<8x32xf32>
    %cst_80 = arith.constant 1.000000e+00 : f32
    %207 = vector.broadcast %cst_80 : f32 to vector<8x32xf32>
    %208 = arith.addf %207, %206 : vector<8x32xf32>
    %209 = arith.divf %207, %208 : vector<8x32xf32>
    %210 = arith.mulf %197, %176 : vector<8x32xf32>
    %211 = arith.mulf %189, %201 : vector<8x32xf32>
    %212 = arith.addf %210, %211 : vector<8x32xf32>
    %213 = math.tanh %212 : vector<8x32xf32>
    %214 = arith.mulf %209, %213 : vector<8x32xf32>
    %cst_81 = arith.constant 5.000000e-01 : f32
    %215 = vector.broadcast %cst_81 : f32 to vector<8x32xf32>
    %216 = arith.mulf %215, %145 : vector<8x32xf32>
    %217 = arith.addf %214, %216 : vector<8x32xf32>
    %218 = vector.extract_strided_slice %12 {offsets = [40, 0], sizes = [8, 32], strides = [1, 1]} : vector<64x32xf32> to vector<8x32xf32>
    %cst_82 = arith.constant dense<0.000000e+00> : vector<8x32xf32>
    %219 = tpu.matmul %217, %35, %cst_82 {dimension_numbers = #tpu.dot_dimension_numbers<[1], [0], [0], [1], [0, 0, 1, 1], [], []>} : vector<8x32xf32>, vector<32x32xf32>, vector<8x32xf32> -> vector<8x32xf32>
    %220 = arith.addf %218, %219 : vector<8x32xf32>
    %221 = arith.negf %220 : vector<8x32xf32>
    %222 = math.exp %221 : vector<8x32xf32>
    %cst_83 = arith.constant 1.000000e+00 : f32
    %223 = vector.broadcast %cst_83 : f32 to vector<8x32xf32>
    %224 = arith.addf %223, %222 : vector<8x32xf32>
    %225 = arith.divf %223, %224 : vector<8x32xf32>
    %226 = vector.extract_strided_slice %19 {offsets = [40, 0], sizes = [8, 32], strides = [1, 1]} : vector<64x32xf32> to vector<8x32xf32>
    %cst_84 = arith.constant dense<0.000000e+00> : vector<8x32xf32>
    %227 = tpu.matmul %217, %37, %cst_84 {dimension_numbers = #tpu.dot_dimension_numbers<[1], [0], [0], [1], [0, 0, 1, 1], [], []>} : vector<8x32xf32>, vector<32x32xf32>, vector<8x32xf32> -> vector<8x32xf32>
    %228 = arith.addf %226, %227 : vector<8x32xf32>
    %229 = arith.negf %228 : vector<8x32xf32>
    %230 = math.exp %229 : vector<8x32xf32>
    %cst_85 = arith.constant 1.000000e+00 : f32
    %231 = vector.broadcast %cst_85 : f32 to vector<8x32xf32>
    %232 = arith.addf %231, %230 : vector<8x32xf32>
    %233 = arith.divf %231, %232 : vector<8x32xf32>
    %234 = vector.extract_strided_slice %26 {offsets = [40, 0], sizes = [8, 32], strides = [1, 1]} : vector<64x32xf32> to vector<8x32xf32>
    %cst_86 = arith.constant dense<0.000000e+00> : vector<8x32xf32>
    %235 = tpu.matmul %217, %39, %cst_86 {dimension_numbers = #tpu.dot_dimension_numbers<[1], [0], [0], [1], [0, 0, 1, 1], [], []>} : vector<8x32xf32>, vector<32x32xf32>, vector<8x32xf32> -> vector<8x32xf32>
    %236 = arith.addf %234, %235 : vector<8x32xf32>
    %237 = math.tanh %236 : vector<8x32xf32>
    %238 = vector.extract_strided_slice %33 {offsets = [40, 0], sizes = [8, 32], strides = [1, 1]} : vector<64x32xf32> to vector<8x32xf32>
    %cst_87 = arith.constant dense<0.000000e+00> : vector<8x32xf32>
    %239 = tpu.matmul %217, %41, %cst_87 {dimension_numbers = #tpu.dot_dimension_numbers<[1], [0], [0], [1], [0, 0, 1, 1], [], []>} : vector<8x32xf32>, vector<32x32xf32>, vector<8x32xf32> -> vector<8x32xf32>
    %240 = arith.addf %238, %239 : vector<8x32xf32>
    %241 = arith.negf %240 : vector<8x32xf32>
    %242 = math.exp %241 : vector<8x32xf32>
    %cst_88 = arith.constant 1.000000e+00 : f32
    %243 = vector.broadcast %cst_88 : f32 to vector<8x32xf32>
    %244 = arith.addf %243, %242 : vector<8x32xf32>
    %245 = arith.divf %243, %244 : vector<8x32xf32>
    %246 = arith.mulf %233, %212 : vector<8x32xf32>
    %247 = arith.mulf %225, %237 : vector<8x32xf32>
    %248 = arith.addf %246, %247 : vector<8x32xf32>
    %249 = math.tanh %248 : vector<8x32xf32>
    %250 = arith.mulf %245, %249 : vector<8x32xf32>
    %cst_89 = arith.constant 5.000000e-01 : f32
    %251 = vector.broadcast %cst_89 : f32 to vector<8x32xf32>
    %252 = arith.mulf %251, %181 : vector<8x32xf32>
    %253 = arith.addf %250, %252 : vector<8x32xf32>
    %254 = vector.extract_strided_slice %12 {offsets = [48, 0], sizes = [8, 32], strides = [1, 1]} : vector<64x32xf32> to vector<8x32xf32>
    %cst_90 = arith.constant dense<0.000000e+00> : vector<8x32xf32>
    %255 = tpu.matmul %253, %35, %cst_90 {dimension_numbers = #tpu.dot_dimension_numbers<[1], [0], [0], [1], [0, 0, 1, 1], [], []>} : vector<8x32xf32>, vector<32x32xf32>, vector<8x32xf32> -> vector<8x32xf32>
    %256 = arith.addf %254, %255 : vector<8x32xf32>
    %257 = arith.negf %256 : vector<8x32xf32>
    %258 = math.exp %257 : vector<8x32xf32>
    %cst_91 = arith.constant 1.000000e+00 : f32
    %259 = vector.broadcast %cst_91 : f32 to vector<8x32xf32>
    %260 = arith.addf %259, %258 : vector<8x32xf32>
    %261 = arith.divf %259, %260 : vector<8x32xf32>
    %262 = vector.extract_strided_slice %19 {offsets = [48, 0], sizes = [8, 32], strides = [1, 1]} : vector<64x32xf32> to vector<8x32xf32>
    %cst_92 = arith.constant dense<0.000000e+00> : vector<8x32xf32>
    %263 = tpu.matmul %253, %37, %cst_92 {dimension_numbers = #tpu.dot_dimension_numbers<[1], [0], [0], [1], [0, 0, 1, 1], [], []>} : vector<8x32xf32>, vector<32x32xf32>, vector<8x32xf32> -> vector<8x32xf32>
    %264 = arith.addf %262, %263 : vector<8x32xf32>
    %265 = arith.negf %264 : vector<8x32xf32>
    %266 = math.exp %265 : vector<8x32xf32>
    %cst_93 = arith.constant 1.000000e+00 : f32
    %267 = vector.broadcast %cst_93 : f32 to vector<8x32xf32>
    %268 = arith.addf %267, %266 : vector<8x32xf32>
    %269 = arith.divf %267, %268 : vector<8x32xf32>
    %270 = vector.extract_strided_slice %26 {offsets = [48, 0], sizes = [8, 32], strides = [1, 1]} : vector<64x32xf32> to vector<8x32xf32>
    %cst_94 = arith.constant dense<0.000000e+00> : vector<8x32xf32>
    %271 = tpu.matmul %253, %39, %cst_94 {dimension_numbers = #tpu.dot_dimension_numbers<[1], [0], [0], [1], [0, 0, 1, 1], [], []>} : vector<8x32xf32>, vector<32x32xf32>, vector<8x32xf32> -> vector<8x32xf32>
    %272 = arith.addf %270, %271 : vector<8x32xf32>
    %273 = math.tanh %272 : vector<8x32xf32>
    %274 = vector.extract_strided_slice %33 {offsets = [48, 0], sizes = [8, 32], strides = [1, 1]} : vector<64x32xf32> to vector<8x32xf32>
    %cst_95 = arith.constant dense<0.000000e+00> : vector<8x32xf32>
    %275 = tpu.matmul %253, %41, %cst_95 {dimension_numbers = #tpu.dot_dimension_numbers<[1], [0], [0], [1], [0, 0, 1, 1], [], []>} : vector<8x32xf32>, vector<32x32xf32>, vector<8x32xf32> -> vector<8x32xf32>
    %276 = arith.addf %274, %275 : vector<8x32xf32>
    %277 = arith.negf %276 : vector<8x32xf32>
    %278 = math.exp %277 : vector<8x32xf32>
    %cst_96 = arith.constant 1.000000e+00 : f32
    %279 = vector.broadcast %cst_96 : f32 to vector<8x32xf32>
    %280 = arith.addf %279, %278 : vector<8x32xf32>
    %281 = arith.divf %279, %280 : vector<8x32xf32>
    %282 = arith.mulf %269, %248 : vector<8x32xf32>
    %283 = arith.mulf %261, %273 : vector<8x32xf32>
    %284 = arith.addf %282, %283 : vector<8x32xf32>
    %285 = math.tanh %284 : vector<8x32xf32>
    %286 = arith.mulf %281, %285 : vector<8x32xf32>
    %cst_97 = arith.constant 5.000000e-01 : f32
    %287 = vector.broadcast %cst_97 : f32 to vector<8x32xf32>
    %288 = arith.mulf %287, %217 : vector<8x32xf32>
    %289 = arith.addf %286, %288 : vector<8x32xf32>
    %290 = vector.extract_strided_slice %12 {offsets = [56, 0], sizes = [8, 32], strides = [1, 1]} : vector<64x32xf32> to vector<8x32xf32>
    %cst_98 = arith.constant dense<0.000000e+00> : vector<8x32xf32>
    %291 = tpu.matmul %289, %35, %cst_98 {dimension_numbers = #tpu.dot_dimension_numbers<[1], [0], [0], [1], [0, 0, 1, 1], [], []>} : vector<8x32xf32>, vector<32x32xf32>, vector<8x32xf32> -> vector<8x32xf32>
    %292 = arith.addf %290, %291 : vector<8x32xf32>
    %293 = arith.negf %292 : vector<8x32xf32>
    %294 = math.exp %293 : vector<8x32xf32>
    %cst_99 = arith.constant 1.000000e+00 : f32
    %295 = vector.broadcast %cst_99 : f32 to vector<8x32xf32>
    %296 = arith.addf %295, %294 : vector<8x32xf32>
    %297 = arith.divf %295, %296 : vector<8x32xf32>
    %298 = vector.extract_strided_slice %19 {offsets = [56, 0], sizes = [8, 32], strides = [1, 1]} : vector<64x32xf32> to vector<8x32xf32>
    %cst_100 = arith.constant dense<0.000000e+00> : vector<8x32xf32>
    %299 = tpu.matmul %289, %37, %cst_100 {dimension_numbers = #tpu.dot_dimension_numbers<[1], [0], [0], [1], [0, 0, 1, 1], [], []>} : vector<8x32xf32>, vector<32x32xf32>, vector<8x32xf32> -> vector<8x32xf32>
    %300 = arith.addf %298, %299 : vector<8x32xf32>
    %301 = arith.negf %300 : vector<8x32xf32>
    %302 = math.exp %301 : vector<8x32xf32>
    %cst_101 = arith.constant 1.000000e+00 : f32
    %303 = vector.broadcast %cst_101 : f32 to vector<8x32xf32>
    %304 = arith.addf %303, %302 : vector<8x32xf32>
    %305 = arith.divf %303, %304 : vector<8x32xf32>
    %306 = vector.extract_strided_slice %26 {offsets = [56, 0], sizes = [8, 32], strides = [1, 1]} : vector<64x32xf32> to vector<8x32xf32>
    %cst_102 = arith.constant dense<0.000000e+00> : vector<8x32xf32>
    %307 = tpu.matmul %289, %39, %cst_102 {dimension_numbers = #tpu.dot_dimension_numbers<[1], [0], [0], [1], [0, 0, 1, 1], [], []>} : vector<8x32xf32>, vector<32x32xf32>, vector<8x32xf32> -> vector<8x32xf32>
    %308 = arith.addf %306, %307 : vector<8x32xf32>
    %309 = math.tanh %308 : vector<8x32xf32>
    %310 = vector.extract_strided_slice %33 {offsets = [56, 0], sizes = [8, 32], strides = [1, 1]} : vector<64x32xf32> to vector<8x32xf32>
    %cst_103 = arith.constant dense<0.000000e+00> : vector<8x32xf32>
    %311 = tpu.matmul %289, %41, %cst_103 {dimension_numbers = #tpu.dot_dimension_numbers<[1], [0], [0], [1], [0, 0, 1, 1], [], []>} : vector<8x32xf32>, vector<32x32xf32>, vector<8x32xf32> -> vector<8x32xf32>
    %312 = arith.addf %310, %311 : vector<8x32xf32>
    %313 = arith.negf %312 : vector<8x32xf32>
    %314 = math.exp %313 : vector<8x32xf32>
    %cst_104 = arith.constant 1.000000e+00 : f32
    %315 = vector.broadcast %cst_104 : f32 to vector<8x32xf32>
    %316 = arith.addf %315, %314 : vector<8x32xf32>
    %317 = arith.divf %315, %316 : vector<8x32xf32>
    %318 = arith.mulf %305, %284 : vector<8x32xf32>
    %319 = arith.mulf %297, %309 : vector<8x32xf32>
    %320 = arith.addf %318, %319 : vector<8x32xf32>
    %321 = math.tanh %320 : vector<8x32xf32>
    %322 = arith.mulf %317, %321 : vector<8x32xf32>
    %cst_105 = arith.constant 5.000000e-01 : f32
    %323 = vector.broadcast %cst_105 : f32 to vector<8x32xf32>
    %324 = arith.mulf %323, %253 : vector<8x32xf32>
    %325 = arith.addf %322, %324 : vector<8x32xf32>
    %326 = tpu.concatenate %76, %109, %145, %181, %217, %253, %289, %325 in 0 : vector<8x32xf32>, vector<8x32xf32>, vector<8x32xf32>, vector<8x32xf32>, vector<8x32xf32>, vector<8x32xf32>, vector<8x32xf32>, vector<8x32xf32> -> vector<64x32xf32>
    %c0_106 = arith.constant 0 : index
    %c0_107 = arith.constant 0 : index
    %327 = vector.load %arg7[%c0_106, %c0_107] : memref<32x4xf32, #tpu.memory_space<vmem>>, vector<32x4xf32>
    %cst_108 = arith.constant dense<0.000000e+00> : vector<64x4xf32>
    %328 = tpu.matmul %326, %327, %cst_108 {dimension_numbers = #tpu.dot_dimension_numbers<[1], [0], [0], [1], [0, 0, 1, 1], [], []>} : vector<64x32xf32>, vector<32x4xf32>, vector<64x4xf32> -> vector<64x4xf32>
    %c0_109 = arith.constant 0 : index
    %c0_110 = arith.constant 0 : index
    %329 = vector.load %arg8[%c0_109, %c0_110] : memref<1x4xf32, #tpu.memory_space<vmem>>, vector<1x4xf32>
    %330 = vector.broadcast %329 : vector<1x4xf32> to vector<64x4xf32>
    %331 = arith.addf %328, %330 : vector<64x4xf32>
    %332 = arith.addf %5, %331 : vector<64x4xf32>
    %c0_111 = arith.constant 0 : index
    %c0_112 = arith.constant 0 : index
    %333 = vector.load %arg9[%c0_111, %c0_112] : memref<64x4xf32, #tpu.memory_space<vmem>>, vector<64x4xf32>
    tpu.vector_store %arg9[%c0_111, %c0_112], %332 {strides = array<i32>} : memref<64x4xf32, #tpu.memory_space<vmem>>, vector<64x4xf32>,
    return
  }
  func.func @transform_0(%arg0: i32) -> (i32, i32) {
    %c0_i32 = arith.constant 0 : i32
    %c0_i32_0 = arith.constant 0 : i32
    return %arg0, %c0_i32 : i32, i32
  }
  func.func @transform_1(%arg0: i32) -> (i32, i32) {
    %c0_i32 = arith.constant 0 : i32
    %c0_i32_0 = arith.constant 0 : i32
    %c0_i32_1 = arith.constant 0 : i32
    return %c0_i32, %c0_i32_0 : i32, i32
  }
  func.func @transform_2(%arg0: i32) -> (i32, i32) {
    %c0_i32 = arith.constant 0 : i32
    %c0_i32_0 = arith.constant 0 : i32
    %c0_i32_1 = arith.constant 0 : i32
    return %c0_i32, %c0_i32_0 : i32, i32
  }
  func.func @transform_3(%arg0: i32) -> (i32, i32, i32) {
    %c0_i32 = arith.constant 0 : i32
    %c0_i32_0 = arith.constant 0 : i32
    %c0_i32_1 = arith.constant 0 : i32
    %c0_i32_2 = arith.constant 0 : i32
    return %c0_i32, %c0_i32_0, %c0_i32_1 : i32, i32, i32
  }
  func.func @transform_4(%arg0: i32) -> (i32, i32, i32) {
    %c0_i32 = arith.constant 0 : i32
    %c0_i32_0 = arith.constant 0 : i32
    %c0_i32_1 = arith.constant 0 : i32
    %c0_i32_2 = arith.constant 0 : i32
    return %c0_i32, %c0_i32_0, %c0_i32_1 : i32, i32, i32
  }
  func.func @transform_5(%arg0: i32) -> (i32, i32, i32) {
    %c0_i32 = arith.constant 0 : i32
    %c0_i32_0 = arith.constant 0 : i32
    %c0_i32_1 = arith.constant 0 : i32
    %c0_i32_2 = arith.constant 0 : i32
    return %c0_i32, %c0_i32_0, %c0_i32_1 : i32, i32, i32
  }
  func.func @transform_6(%arg0: i32) -> (i32, i32) {
    %c0_i32 = arith.constant 0 : i32
    %c0_i32_0 = arith.constant 0 : i32
    %c0_i32_1 = arith.constant 0 : i32
    return %c0_i32, %c0_i32_0 : i32, i32
  }
  func.func @transform_7(%arg0: i32) -> (i32, i32) {
    %c0_i32 = arith.constant 0 : i32
    %c0_i32_0 = arith.constant 0 : i32
    %c0_i32_1 = arith.constant 0 : i32
    return %c0_i32, %c0_i32_0 : i32, i32
  }
  func.func @transform_8(%arg0: i32) -> (i32, i32) {
    %c0_i32 = arith.constant 0 : i32
    %c0_i32_0 = arith.constant 0 : i32
    return %arg0, %c0_i32 : i32, i32
  }
}

</mosaic_0001>

<llo_original>
// kernel: tpu_custom_call.1
$region0: #{tpu_custom_call.1}
  #allocation0 [shape = 'u32[]', space=smem, size = 0x4, offset = 0x4, fixed_abs, tag = 'smem constant byte address 0x4 - core index']
  #allocation1 [shape = 'u32[144,128]{1,0:T(1,128)}', space=vmem, size = 0x12000, scoped, tag = 'internal scratch']
  %s0 = inlined_call_operand.vmem [shape: f32[64,4], index: 0, kind: input, shape index: {}]
  %s1 = inlined_call_operand.hbm [shape: f32[64,64], index: 1, kind: input, shape index: {}]
  %s2 = inlined_call_operand.vmem [shape: f32[64,1], index: 2, kind: input, shape index: {}]
  %s3 = inlined_call_operand.vmem [shape: f32[4,4,32], index: 3, kind: input, shape index: {}]
  %s4 = inlined_call_operand.vmem [shape: f32[4,32,32], index: 4, kind: input, shape index: {}]
  %s5 = inlined_call_operand.vmem [shape: f32[4,1,32], index: 5, kind: input, shape index: {}]
  %s6 = inlined_call_operand.vmem [shape: f32[32,4], index: 6, kind: input, shape index: {}]
  %s7 = inlined_call_operand.vmem [shape: f32[1,4], index: 7, kind: input, shape index: {}]
  %s8 = inlined_call_operand.vmem [shape: f32[64,4], index: 8, kind: output, shape index: {}]
  %s9 = sld [smem:[#allocation0]]
  $region46: #{tpu_custom_call.1} parent=0
    _
  %s11 = ssub.s32 1, %s9
  %s12 = scalar_select 0, %s11, %s9
  $region1: #{tpu_custom_call.1} parent=0
    #allocation2 [shape = 'u8[32768]{0}', space=vmem, size = 0x8000, scoped, tag = 'input window, operand 1, single buffered']
    #allocation3 [shape = 's32[1]{0}', space=sflag, size = 0x4, scoped, tag = 'scoped memory for tpu_custom_call.1']
    %13 = vsyncpa [#allocation3], 0
    // Predicated region
    $region2: #{tpu_custom_call.1} parent=1 // pred_check
      _
    $region3: #{tpu_custom_call.1} parent=1 // pred_check_branch
      %15 = sbr.rel (0) target = $region5
    $region4: #{tpu_custom_call.1} parent=1 // pred_region
      _
    $region5: #{tpu_custom_call.1} parent=1 // pred_fallthru
      _
    // Predicated region
    $region6: #{tpu_custom_call.1} parent=1 // pred_check
      _
    $region7: #{tpu_custom_call.1} parent=1 // pred_check_branch
      %17 = sbr.rel (0) target = $region9
    $region8: #{tpu_custom_call.1} parent=1 // pred_region
      %s19 = ssub.s32 1024, 1024
      %20 = vsyncadd [#allocation3], %s19
      %s21 = sshll.u32 [#allocation2], 4
      %s22 = int_to_ptr.vmem [resolvable:$true] %s21
      %27 = dma.hbm_to_vmem [thread:$0]  %s1, 1024, %s22, [#allocation3], 128, 128, 8
    $region9: #{tpu_custom_call.1} parent=1 // pred_fallthru
      _
    // Predicated region
    $region10: #{tpu_custom_call.1} parent=1 // pred_check
      _
    $region11: #{tpu_custom_call.1} parent=1 // pred_check_branch
      %29 = sbr.rel (0) target = $region13
    $region12: #{tpu_custom_call.1} parent=1 // pred_region
      _
    $region13: #{tpu_custom_call.1} parent=1 // pred_fallthru
      _
    // Predicated region
    $region14: #{tpu_custom_call.1} parent=1 // pred_check
      _
    $region15: #{tpu_custom_call.1} parent=1 // pred_check_branch
      %31 = sbr.rel (0) target = $region17
    $region16: #{tpu_custom_call.1} parent=1 // pred_region
      _
    $region17: #{tpu_custom_call.1} parent=1 // pred_fallthru
      _
    // Predicated region
    $region18: #{tpu_custom_call.1} parent=1 // pred_check
      _
    $region19: #{tpu_custom_call.1} parent=1 // pred_check_branch
      %33 = sbr.rel (0) target = $region21
    $region20: #{tpu_custom_call.1} parent=1 // pred_region
      _
    $region21: #{tpu_custom_call.1} parent=1 // pred_fallthru
      _
    // Predicated region
    $region22: #{tpu_custom_call.1} parent=1 // pred_check
      _
    $region23: #{tpu_custom_call.1} parent=1 // pred_check_branch
      %35 = sbr.rel (0) target = $region25
    $region24: #{tpu_custom_call.1} parent=1 // pred_region
      _
    $region25: #{tpu_custom_call.1} parent=1 // pred_fallthru
      _
    // Predicated region
    $region26: #{tpu_custom_call.1} parent=1 // pred_check
      _
    $region27: #{tpu_custom_call.1} parent=1 // pred_check_branch
      %37 = sbr.rel (0) target = $region29
    $region28: #{tpu_custom_call.1} parent=1 // pred_region
      _
    $region29: #{tpu_custom_call.1} parent=1 // pred_fallthru
      _
    // Predicated region
    $region30: #{tpu_custom_call.1} parent=1 // pred_check
      _
    $region31: #{tpu_custom_call.1} parent=1 // pred_check_branch
      %39 = sbr.rel (0) target = $region33
    $region32: #{tpu_custom_call.1} parent=1 // pred_region
      _
    $region33: #{tpu_custom_call.1} parent=1 // pred_fallthru
      _
    // Predicated region
    $region34: #{tpu_custom_call.1} parent=1 // pred_check
      _
    $region35: #{tpu_custom_call.1} parent=1 // pred_check_branch
      %41 = sbr.rel (0) target = $region37
    $region36: #{tpu_custom_call.1} parent=1 // pred_region
      %42 = dma.done [#allocation3], 1024
    $region37: #{tpu_custom_call.1} parent=1 // pred_fallthru
      _
    %v43 = vld [vmem:[%s0] sm:$0xff]
    %v44 = vld [vmem:[%s0 + $0x8] sm:$0xff]
    %v45 = vld [vmem:[%s0 + $0x10] sm:$0xff]
    %v46 = vld [vmem:[%s0 + $0x18] sm:$0xff]
    %v47 = vld [vmem:[%s0 + $0x20] sm:$0xff]
    %v48 = vld [vmem:[%s0 + $0x28] sm:$0xff]
    %v49 = vld [vmem:[%s0 + $0x30] sm:$0xff]
    %v50 = vld [vmem:[%s0 + $0x38] sm:$0xff]
    %v51 = vld [vmem:[#allocation2] sm:$0xff]
    %v52 = vld [vmem:[#allocation2 + $0x8] sm:$0xff]
    %v53 = vld [vmem:[#allocation2 + $0x10] sm:$0xff]
    %v54 = vld [vmem:[#allocation2 + $0x18] sm:$0xff]
    %v55 = vld [vmem:[#allocation2 + $0x20] sm:$0xff]
    %v56 = vld [vmem:[#allocation2 + $0x28] sm:$0xff]
    %v57 = vld [vmem:[#allocation2 + $0x30] sm:$0xff]
    %v58 = vld [vmem:[#allocation2 + $0x38] sm:$0xff]
    %v59 = vld [vmem:[%s2] sm:$0xff]
    %v60 = vld [vmem:[%s2 + $0x8] sm:$0xff]
    %v61 = vld [vmem:[%s2 + $0x10] sm:$0xff]
    %v62 = vld [vmem:[%s2 + $0x18] sm:$0xff]
    %v63 = vld [vmem:[%s2 + $0x20] sm:$0xff]
    %v64 = vld [vmem:[%s2 + $0x28] sm:$0xff]
    %v65 = vld [vmem:[%s2 + $0x30] sm:$0xff]
    %v66 = vld [vmem:[%s2 + $0x38] sm:$0xff]
    %68 = vset.pattern.permute.xlu0 0
    %69 = vperm.xlu0 %68, %v59
    %v70 = vpop.permute.xlu0 %69
    %73 = vset.pattern.permute.xlu0 0
    %74 = vperm.xlu0 %73, %v60
    %v75 = vpop.permute.xlu0 %74
    %78 = vset.pattern.permute.xlu0 0
    %79 = vperm.xlu0 %78, %v61
    %v80 = vpop.permute.xlu0 %79
    %83 = vset.pattern.permute.xlu0 0
    %84 = vperm.xlu0 %83, %v62
    %v85 = vpop.permute.xlu0 %84
    %88 = vset.pattern.permute.xlu0 0
    %89 = vperm.xlu0 %88, %v63
    %v90 = vpop.permute.xlu0 %89
    %93 = vset.pattern.permute.xlu0 0
    %94 = vperm.xlu0 %93, %v64
    %v95 = vpop.permute.xlu0 %94
    %98 = vset.pattern.permute.xlu0 0
    %99 = vperm.xlu0 %98, %v65
    %v100 = vpop.permute.xlu0 %99
    %103 = vset.pattern.permute.xlu0 0
    %104 = vperm.xlu0 %103, %v66
    %v105 = vpop.permute.xlu0 %104
    %vm107 = vcmask 523264
    %v109 = vsel %vm107, %v51, 0
    %v112 = vsel %vm107, %v52, 0
    %v115 = vsel %vm107, %v53, 0
    %v118 = vsel %vm107, %v54, 0
    %v121 = vsel %vm107, %v55, 0
    %v124 = vsel %vm107, %v56, 0
    %v127 = vsel %vm107, %v57, 0
    %v130 = vsel %vm107, %v58, 0
    %132 = vmatprep.subr.mxu0 0.0
    %133 = vmatpush1.msra.mxu0 %v43
    %134 = vmatprep.subr.mxu0 0.0
    %135 = vmatpush1.msra.mxu0 %v44
    %136 = vmatprep.subr.mxu0 0.0
    %137 = vmatpush1.msra.mxu0 %v45
    %138 = vmatprep.subr.mxu0 0.0
    %139 = vmatpush1.msra.mxu0 %v46
    %140 = vmatprep.subr.mxu0 0.0
    %141 = vmatpush1.msra.mxu0 %v47
    %142 = vmatprep.subr.mxu0 0.0
    %143 = vmatpush1.msra.mxu0 %v48
    %144 = vmatprep.subr.mxu0 0.0
    %145 = vmatpush1.msra.mxu0 %v49
    %146 = vmatprep.subr.mxu0 0.0
    %147 = vmatpush1.msra.mxu0 %v50
    %148 = vmatprep.subr.mxu0 0.0
    %149 = vmatpush1.msra.mxu0 0.0
    %150 = vmatprep.subr.mxu0 0.0
    %151 = vmatpush1.msra.mxu0 0.0
    %152 = vmatprep.subr.mxu0 0.0
    %153 = vmatpush1.msra.mxu0 0.0
    %154 = vmatprep.subr.mxu0 0.0
    %155 = vmatpush1.msra.mxu0 0.0
    %156 = vmatprep.subr.mxu0 0.0
    %157 = vmatpush1.msra.mxu0 0.0
    %158 = vmatprep.subr.mxu0 0.0
    %159 = vmatpush1.msra.mxu0 0.0
    %160 = vmatprep.subr.mxu0 0.0
    %161 = vmatpush1.msra.mxu0 0.0
    %162 = vmatprep.subr.mxu0 0.0
    %163 = vmatpush1.msra.mxu0 0.0
    %164 = vmatprep.subr.mxu0 0.0
    %165 = vmatpush1.msra.mxu0 0.0
    %166 = vmatprep.subr.mxu0 0.0
    %167 = vmatpush1.msra.mxu0 0.0
    %168 = vmatprep.subr.mxu0 0.0
    %169 = vmatpush1.msra.mxu0 0.0
    %170 = vmatprep.subr.mxu0 0.0
    %171 = vmatpush1.msra.mxu0 0.0
    %172 = vmatprep.subr.mxu0 0.0
    %173 = vmatpush1.msra.mxu0 0.0
    %174 = vmatprep.subr.mxu0 0.0
    %175 = vmatpush1.msra.mxu0 0.0
    %176 = vmatprep.subr.mxu0 0.0
    %177 = vmatpush1.msra.mxu0 0.0
    %178 = vmatprep.subr.mxu0 0.0
    %179 = vmatpush1.msra.mxu0 0.0
    %180 = vmatprep.subr.mxu0 0.0
    %181 = vmatpush1.msra.mxu0 0.0
    %182 = vmatprep.subr.mxu0 0.0
    %183 = vmatpush1.msra.mxu0 0.0
    %184 = vmatprep.subr.mxu0 0.0
    %185 = vmatpush1.msra.mxu0 0.0
    %186 = vmatprep.subr.mxu0 0.0
    %187 = vmatpush1.msra.mxu0 0.0
    %188 = vmatprep.subr.mxu0 0.0
    %189 = vmatpush1.msra.mxu0 0.0
    %190 = vmatprep.subr.mxu0 0.0
    %191 = vmatpush1.msra.mxu0 0.0
    %192 = vmatprep.subr.mxu0 0.0
    %193 = vmatpush1.msra.mxu0 0.0
    %194 = vmatprep.subr.mxu0 0.0
    %195 = vmatpush1.msra.mxu0 0.0
    %196 = vmatprep.mubr.f32.mxu0 0.0
    %197 = vmatmul.mubr.f32.gmra.mrb[0].mxu0 %v109
    %v198 = vpop.f32.mrb[0].mxu0
    %v199 = vadd.f32 %v70, %v198
    %v200 = vpop.f32.mrb[0].mxu0
    %201 = vmatprep.mubr.f32.mxu0 0.0
    %202 = vmatmul.mubr.f32.gmra.mrb[0].mxu0 %v112
    %v203 = vpop.f32.mrb[0].mxu0
    %v204 = vadd.f32 %v75, %v203
    %v205 = vpop.f32.mrb[0].mxu0
    %206 = vmatprep.mubr.f32.mxu0 0.0
    %207 = vmatmul.mubr.f32.gmra.mrb[0].mxu0 %v115
    %v208 = vpop.f32.mrb[0].mxu0
    %v209 = vadd.f32 %v80, %v208
    %v210 = vpop.f32.mrb[0].mxu0
    %211 = vmatprep.mubr.f32.mxu0 0.0
    %212 = vmatmul.mubr.f32.gmra.mrb[0].mxu0 %v118
    %v213 = vpop.f32.mrb[0].mxu0
    %v214 = vadd.f32 %v85, %v213
    %v215 = vpop.f32.mrb[0].mxu0
    %216 = vmatprep.mubr.f32.mxu0 0.0
    %217 = vmatmul.mubr.f32.gmra.mrb[0].mxu0 %v121
    %v218 = vpop.f32.mrb[0].mxu0
    %v219 = vadd.f32 %v90, %v218
    %v220 = vpop.f32.mrb[0].mxu0
    %221 = vmatprep.mubr.f32.mxu0 0.0
    %222 = vmatmul.mubr.f32.gmra.mrb[0].mxu0 %v124
    %v223 = vpop.f32.mrb[0].mxu0
    %v224 = vadd.f32 %v95, %v223
    %v225 = vpop.f32.mrb[0].mxu0
    %226 = vmatprep.mubr.f32.mxu0 0.0
    %227 = vmatmul.mubr.f32.gmra.mrb[0].mxu0 %v127
    %v228 = vpop.f32.mrb[0].mxu0
    %v229 = vadd.f32 %v100, %v228
    %v230 = vpop.f32.mrb[0].mxu0
    %231 = vmatprep.mubr.f32.mxu0 0.0
    %232 = vmatmul.mubr.f32.gmra.mrb[0].mxu0 %v130
    %v233 = vpop.f32.mrb[0].mxu0
    %v234 = vadd.f32 %v105, %v233
    %v235 = vpop.f32.mrb[0].mxu0
    %236 = vdwg.mxu0
    %v237 = vld [vmem:[%s3] sm:$0xf]
    %v238 = vld [vmem:[%s5] sm:$0x1]
    %v240 = vlaneseq
    %v241 = vshrl.u32 %v240, 7
    %v242 = vsub.s32 0, %v241
    %v243 = vrot.slane %v238, %v242
    %vm245 = vcmask 31744
    %v247 = vsel %vm245, %v43, 0
    %v250 = vsel %vm245, %v44, 0
    %v253 = vsel %vm245, %v45, 0
    %v256 = vsel %vm245, %v46, 0
    %v259 = vsel %vm245, %v47, 0
    %v262 = vsel %vm245, %v48, 0
    %v265 = vsel %vm245, %v49, 0
    %v268 = vsel %vm245, %v50, 0
    %vm270 = vcmask 1043456
    %v272 = vsel %vm270, %v237, 0
    %274 = vmatprep.subr.mxu0 0.0
    %275 = vmatpush1.msra.mxu0 %v272
    %276 = vmatprep.subr.mxu0 0.0
    %277 = vmatpush1.msra.mxu0 0.0
    %278 = vmatprep.subr.mxu0 0.0
    %279 = vmatpush1.msra.mxu0 0.0
    %280 = vmatprep.subr.mxu0 0.0
    %281 = vmatpush1.msra.mxu0 0.0
    %282 = vmatprep.subr.mxu0 0.0
    %283 = vmatpush1.msra.mxu0 0.0
    %284 = vmatprep.subr.mxu0 0.0
    %285 = vmatpush1.msra.mxu0 0.0
    %286 = vmatprep.subr.mxu0 0.0
    %287 = vmatpush1.msra.mxu0 0.0
    %288 = vmatprep.subr.mxu0 0.0
    %289 = vmatpush1.msra.mxu0 0.0
    %290 = vmatprep.subr.mxu0 0.0
    %291 = vmatpush1.msra.mxu0 0.0
    %292 = vmatprep.subr.mxu0 0.0
    %293 = vmatpush1.msra.mxu0 0.0
    %294 = vmatprep.subr.mxu0 0.0
    %295 = vmatpush1.msra.mxu0 0.0
    %296 = vmatprep.subr.mxu0 0.0
    %297 = vmatpush1.msra.mxu0 0.0
    %298 = vmatprep.subr.mxu0 0.0
    %299 = vmatpush1.msra.mxu0 0.0
    %300 = vmatprep.subr.mxu0 0.0
    %301 = vmatpush1.msra.mxu0 0.0
    %302 = vmatprep.subr.mxu0 0.0
    %303 = vmatpush1.msra.mxu0 0.0
    %304 = vmatprep.subr.mxu0 0.0
    %305 = vmatpush1.msra.mxu0 0.0
    %306 = vmatprep.subr.mxu0 0.0
    %307 = vmatpush1.msra.mxu0 0.0
    %308 = vmatprep.subr.mxu0 0.0
    %309 = vmatpush1.msra.mxu0 0.0
    %310 = vmatprep.subr.mxu0 0.0
    %311 = vmatpush1.msra.mxu0 0.0
    %312 = vmatprep.subr.mxu0 0.0
    %313 = vmatpush1.msra.mxu0 0.0
    %314 = vmatprep.subr.mxu0 0.0
    %315 = vmatpush1.msra.mxu0 0.0
    %316 = vmatprep.subr.mxu0 0.0
    %317 = vmatpush1.msra.mxu0 0.0
    %318 = vmatprep.subr.mxu0 0.0
    %319 = vmatpush1.msra.mxu0 0.0
    %320 = vmatprep.subr.mxu0 0.0
    %321 = vmatpush1.msra.mxu0 0.0
    %322 = vmatprep.subr.mxu0 0.0
    %323 = vmatpush1.msra.mxu0 0.0
    %324 = vmatprep.subr.mxu0 0.0
    %325 = vmatpush1.msra.mxu0 0.0
    %326 = vmatprep.subr.mxu0 0.0
    %327 = vmatpush1.msra.mxu0 0.0
    %328 = vmatprep.subr.mxu0 0.0
    %329 = vmatpush1.msra.mxu0 0.0
    %330 = vmatprep.subr.mxu0 0.0
    %331 = vmatpush1.msra.mxu0 0.0
    %332 = vmatprep.subr.mxu0 0.0
    %333 = vmatpush1.msra.mxu0 0.0
    %334 = vmatprep.subr.mxu0 0.0
    %335 = vmatpush1.msra.mxu0 0.0
    %336 = vmatprep.subr.mxu0 0.0
    %337 = vmatpush1.msra.mxu0 0.0
    %338 = vmatprep.mubr.f32.mxu0 0.0
    %339 = vmatmul.mubr.f32.gmra.mrb[0].mxu0 %v247
    %v340 = vpop.f32.mrb[0].mxu0
    %v341 = vadd.f32 %v243, %v340
    %v342 = vpop.f32.mrb[0].mxu0
    %343 = vmatprep.mubr.f32.mxu0 0.0
    %344 = vmatmul.mubr.f32.gmra.mrb[0].mxu0 %v250
    %v345 = vpop.f32.mrb[0].mxu0
    %v346 = vadd.f32 %v243, %v345
    %v347 = vpop.f32.mrb[0].mxu0
    %348 = vmatprep.mubr.f32.mxu0 0.0
    %349 = vmatmul.mubr.f32.gmra.mrb[0].mxu0 %v253
    %v350 = vpop.f32.mrb[0].mxu0
    %v351 = vadd.f32 %v243, %v350
    %v352 = vpop.f32.mrb[0].mxu0
    %353 = vmatprep.mubr.f32.mxu0 0.0
    %354 = vmatmul.mubr.f32.gmra.mrb[0].mxu0 %v256
    %v355 = vpop.f32.mrb[0].mxu0
    %v356 = vadd.f32 %v243, %v355
    %v357 = vpop.f32.mrb[0].mxu0
    %358 = vmatprep.mubr.f32.mxu0 0.0
    %359 = vmatmul.mubr.f32.gmra.mrb[0].mxu0 %v259
    %v360 = vpop.f32.mrb[0].mxu0
    %v361 = vadd.f32 %v243, %v360
    %v362 = vpop.f32.mrb[0].mxu0
    %363 = vmatprep.mubr.f32.mxu0 0.0
    %364 = vmatmul.mubr.f32.gmra.mrb[0].mxu0 %v262
    %v365 = vpop.f32.mrb[0].mxu0
    %v366 = vadd.f32 %v243, %v365
    %v367 = vpop.f32.mrb[0].mxu0
    %368 = vmatprep.mubr.f32.mxu0 0.0
    %369 = vmatmul.mubr.f32.gmra.mrb[0].mxu0 %v265
    %v370 = vpop.f32.mrb[0].mxu0
    %v371 = vadd.f32 %v243, %v370
    %v372 = vpop.f32.mrb[0].mxu0
    %373 = vmatprep.mubr.f32.mxu0 0.0
    %374 = vmatmul.mubr.f32.gmra.mrb[0].mxu0 %v268
    %v375 = vpop.f32.mrb[0].mxu0
    %v376 = vadd.f32 %v243, %v375
    %v377 = vpop.f32.mrb[0].mxu0
    %378 = vdwg.mxu0
    %s379 = scalar_lea.vmem %s3, 4
    %v380 = vld [vmem:[%s379] sm:$0xf]
    %s381 = scalar_lea.vmem %s5, 1
    %v382 = vld [vmem:[%s381] sm:$0x1]
    %v384 = vlaneseq
    %v385 = vshrl.u32 %v384, 7
    %v386 = vsub.s32 0, %v385
    %v387 = vrot.slane %v382, %v386
    %v390 = vsel %vm270, %v380, 0
    %392 = vmatprep.subr.mxu0 0.0
    %393 = vmatpush1.msra.mxu0 %v390
    %394 = vmatprep.subr.mxu0 0.0
    %395 = vmatpush1.msra.mxu0 0.0
    %396 = vmatprep.subr.mxu0 0.0
    %397 = vmatpush1.msra.mxu0 0.0
    %398 = vmatprep.subr.mxu0 0.0
    %399 = vmatpush1.msra.mxu0 0.0
    %400 = vmatprep.subr.mxu0 0.0
    %401 = vmatpush1.msra.mxu0 0.0
    %402 = vmatprep.subr.mxu0 0.0
    %403 = vmatpush1.msra.mxu0 0.0
    %404 = vmatprep.subr.mxu0 0.0
    %405 = vmatpush1.msra.mxu0 0.0
    %406 = vmatprep.subr.mxu0 0.0
    %407 = vmatpush1.msra.mxu0 0.0
    %408 = vmatprep.subr.mxu0 0.0
    %409 = vmatpush1.msra.mxu0 0.0
    %410 = vmatprep.subr.mxu0 0.0
    %411 = vmatpush1.msra.mxu0 0.0
    %412 = vmatprep.subr.mxu0 0.0
    %413 = vmatpush1.msra.mxu0 0.0
    %414 = vmatprep.subr.mxu0 0.0
    %415 = vmatpush1.msra.mxu0 0.0
    %416 = vmatprep.subr.mxu0 0.0
    %417 = vmatpush1.msra.mxu0 0.0
    %418 = vmatprep.subr.mxu0 0.0
    %419 = vmatpush1.msra.mxu0 0.0
    %420 = vmatprep.subr.mxu0 0.0
    %421 = vmatpush1.msra.mxu0 0.0
    %422 = vmatprep.subr.mxu0 0.0
    %423 = vmatpush1.msra.mxu0 0.0
    %424 = vmatprep.subr.mxu0 0.0
    %425 = vmatpush1.msra.mxu0 0.0
    %426 = vmatprep.subr.mxu0 0.0
    %427 = vmatpush1.msra.mxu0 0.0
    %428 = vmatprep.subr.mxu0 0.0
    %429 = vmatpush1.msra.mxu0 0.0
    %430 = vmatprep.subr.mxu0 0.0
    %431 = vmatpush1.msra.mxu0 0.0
    %432 = vmatprep.subr.mxu0 0.0
    %433 = vmatpush1.msra.mxu0 0.0
    %434 = vmatprep.subr.mxu0 0.0
    %435 = vmatpush1.msra.mxu0 0.0
    %436 = vmatprep.subr.mxu0 0.0
    %437 = vmatpush1.msra.mxu0 0.0
    %438 = vmatprep.subr.mxu0 0.0
    %439 = vmatpush1.msra.mxu0 0.0
    %440 = vmatprep.subr.mxu0 0.0
    %441 = vmatpush1.msra.mxu0 0.0
    %442 = vmatprep.subr.mxu0 0.0
    %443 = vmatpush1.msra.mxu0 0.0
    %444 = vmatprep.subr.mxu0 0.0
    %445 = vmatpush1.msra.mxu0 0.0
    %446 = vmatprep.subr.mxu0 0.0
    %447 = vmatpush1.msra.mxu0 0.0
    %448 = vmatprep.subr.mxu0 0.0
    %449 = vmatpush1.msra.mxu0 0.0
    %450 = vmatprep.subr.mxu0 0.0
    %451 = vmatpush1.msra.mxu0 0.0
    %452 = vmatprep.subr.mxu0 0.0
    %453 = vmatpush1.msra.mxu0 0.0
    %454 = vmatprep.subr.mxu0 0.0
    %455 = vmatpush1.msra.mxu0 0.0
    %456 = vmatprep.mubr.f32.mxu0 0.0
    %457 = vmatmul.mubr.f32.gmra.mrb[0].mxu0 %v247
    %v458 = vpop.f32.mrb[0].mxu0
    %v459 = vadd.f32 %v387, %v458
    %v460 = vpop.f32.mrb[0].mxu0
    %461 = vmatprep.mubr.f32.mxu0 0.0
    %462 = vmatmul.mubr.f32.gmra.mrb[0].mxu0 %v250
    %v463 = vpop.f32.mrb[0].mxu0
    %v464 = vadd.f32 %v387, %v463
    %v465 = vpop.f32.mrb[0].mxu0
    %466 = vmatprep.mubr.f32.mxu0 0.0
    %467 = vmatmul.mubr.f32.gmra.mrb[0].mxu0 %v253
    %v468 = vpop.f32.mrb[0].mxu0
    %v469 = vadd.f32 %v387, %v468
    %v470 = vpop.f32.mrb[0].mxu0
    %471 = vmatprep.mubr.f32.mxu0 0.0
    %472 = vmatmul.mubr.f32.gmra.mrb[0].mxu0 %v256
    %v473 = vpop.f32.mrb[0].mxu0
    %v474 = vadd.f32 %v387, %v473
    %v475 = vpop.f32.mrb[0].mxu0
    %476 = vmatprep.mubr.f32.mxu0 0.0
    %477 = vmatmul.mubr.f32.gmra.mrb[0].mxu0 %v259
    %v478 = vpop.f32.mrb[0].mxu0
    %v479 = vadd.f32 %v387, %v478
    %v480 = vpop.f32.mrb[0].mxu0
    %481 = vmatprep.mubr.f32.mxu0 0.0
    %482 = vmatmul.mubr.f32.gmra.mrb[0].mxu0 %v262
    %v483 = vpop.f32.mrb[0].mxu0
    %v484 = vadd.f32 %v387, %v483
    %v485 = vpop.f32.mrb[0].mxu0
    %486 = vmatprep.mubr.f32.mxu0 0.0
    %487 = vmatmul.mubr.f32.gmra.mrb[0].mxu0 %v265
    %v488 = vpop.f32.mrb[0].mxu0
    %v489 = vadd.f32 %v387, %v488
    %v490 = vpop.f32.mrb[0].mxu0
    %491 = vmatprep.mubr.f32.mxu0 0.0
    %492 = vmatmul.mubr.f32.gmra.mrb[0].mxu0 %v268
    %v493 = vpop.f32.mrb[0].mxu0
    %v494 = vadd.f32 %v387, %v493
    %v495 = vpop.f32.mrb[0].mxu0
    %496 = vdwg.mxu0
    %s497 = scalar_lea.vmem %s3, 8
    %v498 = vld [vmem:[%s497] sm:$0xf]
    %s499 = scalar_lea.vmem %s5, 2
    %v500 = vld [vmem:[%s499] sm:$0x1]
    %v502 = vlaneseq
    %v503 = vshrl.u32 %v502, 7
    %v504 = vsub.s32 0, %v503
    %v505 = vrot.slane %v500, %v504
    %v508 = vsel %vm270, %v498, 0
    %510 = vmatprep.subr.mxu0 0.0
    %511 = vmatpush1.msra.mxu0 %v508
    %512 = vmatprep.subr.mxu0 0.0
    %513 = vmatpush1.msra.mxu0 0.0
    %514 = vmatprep.subr.mxu0 0.0
    %515 = vmatpush1.msra.mxu0 0.0
    %516 = vmatprep.subr.mxu0 0.0
    %517 = vmatpush1.msra.mxu0 0.0
    %518 = vmatprep.subr.mxu0 0.0
    %519 = vmatpush1.msra.mxu0 0.0
    %520 = vmatprep.subr.mxu0 0.0
    %521 = vmatpush1.msra.mxu0 0.0
    %522 = vmatprep.subr.mxu0 0.0
    %523 = vmatpush1.msra.mxu0 0.0
    %524 = vmatprep.subr.mxu0 0.0
    %525 = vmatpush1.msra.mxu0 0.0
    %526 = vmatprep.subr.mxu0 0.0
    %527 = vmatpush1.msra.mxu0 0.0
    %528 = vmatprep.subr.mxu0 0.0
    %529 = vmatpush1.msra.mxu0 0.0
    %530 = vmatprep.subr.mxu0 0.0
    %531 = vmatpush1.msra.mxu0 0.0
    %532 = vmatprep.subr.mxu0 0.0
    %533 = vmatpush1.msra.mxu0 0.0
    %534 = vmatprep.subr.mxu0 0.0
    %535 = vmatpush1.msra.mxu0 0.0
    %536 = vmatprep.subr.mxu0 0.0
    %537 = vmatpush1.msra.mxu0 0.0
    %538 = vmatprep.subr.mxu0 0.0
    %539 = vmatpush1.msra.mxu0 0.0
    %540 = vmatprep.subr.mxu0 0.0
    %541 = vmatpush1.msra.mxu0 0.0
    %542 = vmatprep.subr.mxu0 0.0
    %543 = vmatpush1.msra.mxu0 0.0
    %544 = vmatprep.subr.mxu0 0.0
    %545 = vmatpush1.msra.mxu0 0.0
    %546 = vmatprep.subr.mxu0 0.0
    %547 = vmatpush1.msra.mxu0 0.0
    %548 = vmatprep.subr.mxu0 0.0
    %549 = vmatpush1.msra.mxu0 0.0
    %550 = vmatprep.subr.mxu0 0.0
    %551 = vmatpush1.msra.mxu0 0.0
    %552 = vmatprep.subr.mxu0 0.0
    %553 = vmatpush1.msra.mxu0 0.0
    %554 = vmatprep.subr.mxu0 0.0
    %555 = vmatpush1.msra.mxu0 0.0
    %556 = vmatprep.subr.mxu0 0.0
    %557 = vmatpush1.msra.mxu0 0.0
    %558 = vmatprep.subr.mxu0 0.0
    %559 = vmatpush1.msra.mxu0 0.0
    %560 = vmatprep.subr.mxu0 0.0
    %561 = vmatpush1.msra.mxu0 0.0
    %562 = vmatprep.subr.mxu0 0.0
    %563 = vmatpush1.msra.mxu0 0.0
    %564 = vmatprep.subr.mxu0 0.0
    %565 = vmatpush1.msra.mxu0 0.0
    %566 = vmatprep.subr.mxu0 0.0
    %567 = vmatpush1.msra.mxu0 0.0
    %568 = vmatprep.subr.mxu0 0.0
    %569 = vmatpush1.msra.mxu0 0.0
    %570 = vmatprep.subr.mxu0 0.0
    %571 = vmatpush1.msra.mxu0 0.0
    %572 = vmatprep.subr.mxu0 0.0
    %573 = vmatpush1.msra.mxu0 0.0
    %574 = vmatprep.mubr.f32.mxu0 0.0
    %575 = vmatmul.mubr.f32.gmra.mrb[0].mxu0 %v247
    %v576 = vpop.f32.mrb[0].mxu0
    %v577 = vadd.f32 %v505, %v576
    %v578 = vpop.f32.mrb[0].mxu0
    %579 = vmatprep.mubr.f32.mxu0 0.0
    %580 = vmatmul.mubr.f32.gmra.mrb[0].mxu0 %v250
    %v581 = vpop.f32.mrb[0].mxu0
    %v582 = vadd.f32 %v505, %v581
    %v583 = vpop.f32.mrb[0].mxu0
    %584 = vmatprep.mubr.f32.mxu0 0.0
    %585 = vmatmul.mubr.f32.gmra.mrb[0].mxu0 %v253
    %v586 = vpop.f32.mrb[0].mxu0
    %v587 = vadd.f32 %v505, %v586
    %v588 = vpop.f32.mrb[0].mxu0
    %589 = vmatprep.mubr.f32.mxu0 0.0
    %590 = vmatmul.mubr.f32.gmra.mrb[0].mxu0 %v256
    %v591 = vpop.f32.mrb[0].mxu0
    %v592 = vadd.f32 %v505, %v591
    %v593 = vpop.f32.mrb[0].mxu0
    %594 = vmatprep.mubr.f32.mxu0 0.0
    %595 = vmatmul.mubr.f32.gmra.mrb[0].mxu0 %v259
    %v596 = vpop.f32.mrb[0].mxu0
    %v597 = vadd.f32 %v505, %v596
    %v598 = vpop.f32.mrb[0].mxu0
    %599 = vmatprep.mubr.f32.mxu0 0.0
    %600 = vmatmul.mubr.f32.gmra.mrb[0].mxu0 %v262
    %v601 = vpop.f32.mrb[0].mxu0
    %v602 = vadd.f32 %v505, %v601
    %v603 = vpop.f32.mrb[0].mxu0
    %604 = vmatprep.mubr.f32.mxu0 0.0
    %605 = vmatmul.mubr.f32.gmra.mrb[0].mxu0 %v265
    %v606 = vpop.f32.mrb[0].mxu0
    %v607 = vadd.f32 %v505, %v606
    %v608 = vpop.f32.mrb[0].mxu0
    %609 = vmatprep.mubr.f32.mxu0 0.0
    %610 = vmatmul.mubr.f32.gmra.mrb[0].mxu0 %v268
    %v611 = vpop.f32.mrb[0].mxu0
    %v612 = vadd.f32 %v505, %v611
    %v613 = vpop.f32.mrb[0].mxu0
    %614 = vdwg.mxu0
    %s615 = scalar_lea.vmem %s3, 12
    %v616 = vld [vmem:[%s615] sm:$0xf]
    %s617 = scalar_lea.vmem %s5, 3
    %v618 = vld [vmem:[%s617] sm:$0x1]
    %v620 = vlaneseq
    %v621 = vshrl.u32 %v620, 7
    %v622 = vsub.s32 0, %v621
    %v623 = vrot.slane %v618, %v622
    %v626 = vsel %vm270, %v616, 0
    %628 = vmatprep.subr.mxu0 0.0
    %629 = vmatpush1.msra.mxu0 %v626
    %630 = vmatprep.subr.mxu0 0.0
    %631 = vmatpush1.msra.mxu0 0.0
    %632 = vmatprep.subr.mxu0 0.0
    %633 = vmatpush1.msra.mxu0 0.0
    %634 = vmatprep.subr.mxu0 0.0
    %635 = vmatpush1.msra.mxu0 0.0
    %636 = vmatprep.subr.mxu0 0.0
    %637 = vmatpush1.msra.mxu0 0.0
    %638 = vmatprep.subr.mxu0 0.0
    %639 = vmatpush1.msra.mxu0 0.0
    %640 = vmatprep.subr.mxu0 0.0
    %641 = vmatpush1.msra.mxu0 0.0
    %642 = vmatprep.subr.mxu0 0.0
    %643 = vmatpush1.msra.mxu0 0.0
    %644 = vmatprep.subr.mxu0 0.0
    %645 = vmatpush1.msra.mxu0 0.0
    %646 = vmatprep.subr.mxu0 0.0
    %647 = vmatpush1.msra.mxu0 0.0
    %648 = vmatprep.subr.mxu0 0.0
    %649 = vmatpush1.msra.mxu0 0.0
    %650 = vmatprep.subr.mxu0 0.0
    %651 = vmatpush1.msra.mxu0 0.0
    %652 = vmatprep.subr.mxu0 0.0
    %653 = vmatpush1.msra.mxu0 0.0
    %654 = vmatprep.subr.mxu0 0.0
    %655 = vmatpush1.msra.mxu0 0.0
    %656 = vmatprep.subr.mxu0 0.0
    %657 = vmatpush1.msra.mxu0 0.0
    %658 = vmatprep.subr.mxu0 0.0
    %659 = vmatpush1.msra.mxu0 0.0
    %660 = vmatprep.subr.mxu0 0.0
    %661 = vmatpush1.msra.mxu0 0.0
    %662 = vmatprep.subr.mxu0 0.0
    %663 = vmatpush1.msra.mxu0 0.0
    %664 = vmatprep.subr.mxu0 0.0
    %665 = vmatpush1.msra.mxu0 0.0
    %666 = vmatprep.subr.mxu0 0.0
    %667 = vmatpush1.msra.mxu0 0.0
    %668 = vmatprep.subr.mxu0 0.0
    %669 = vmatpush1.msra.mxu0 0.0
    %670 = vmatprep.subr.mxu0 0.0
    %671 = vmatpush1.msra.mxu0 0.0
    %672 = vmatprep.subr.mxu0 0.0
    %673 = vmatpush1.msra.mxu0 0.0
    %674 = vmatprep.subr.mxu0 0.0
    %675 = vmatpush1.msra.mxu0 0.0
    %676 = vmatprep.subr.mxu0 0.0
    %677 = vmatpush1.msra.mxu0 0.0
    %678 = vmatprep.subr.mxu0 0.0
    %679 = vmatpush1.msra.mxu0 0.0
    %680 = vmatprep.subr.mxu0 0.0
    %681 = vmatpush1.msra.mxu0 0.0
    %682 = vmatprep.subr.mxu0 0.0
    %683 = vmatpush1.msra.mxu0 0.0
    %684 = vmatprep.subr.mxu0 0.0
    %685 = vmatpush1.msra.mxu0 0.0
    %686 = vmatprep.subr.mxu0 0.0
    %687 = vmatpush1.msra.mxu0 0.0
    %688 = vmatprep.subr.mxu0 0.0
    %689 = vmatpush1.msra.mxu0 0.0
    %690 = vmatprep.subr.mxu0 0.0
    %691 = vmatpush1.msra.mxu0 0.0
    %692 = vmatprep.mubr.f32.mxu0 0.0
    %693 = vmatmul.mubr.f32.gmra.mrb[0].mxu0 %v247
    %v694 = vpop.f32.mrb[0].mxu0
    %v695 = vadd.f32 %v623, %v694
    %v696 = vpop.f32.mrb[0].mxu0
    %697 = vmatprep.mubr.f32.mxu0 0.0
    %698 = vmatmul.mubr.f32.gmra.mrb[0].mxu0 %v250
    %v699 = vpop.f32.mrb[0].mxu0
    %v700 = vadd.f32 %v623, %v699
    %v701 = vpop.f32.mrb[0].mxu0
    %702 = vmatprep.mubr.f32.mxu0 0.0
    %703 = vmatmul.mubr.f32.gmra.mrb[0].mxu0 %v253
    %v704 = vpop.f32.mrb[0].mxu0
    %v705 = vadd.f32 %v623, %v704
    %v706 = vpop.f32.mrb[0].mxu0
    %707 = vmatprep.mubr.f32.mxu0 0.0
    %708 = vmatmul.mubr.f32.gmra.mrb[0].mxu0 %v256
    %v709 = vpop.f32.mrb[0].mxu0
    %v710 = vadd.f32 %v623, %v709
    %v711 = vpop.f32.mrb[0].mxu0
    %712 = vmatprep.mubr.f32.mxu0 0.0
    %713 = vmatmul.mubr.f32.gmra.mrb[0].mxu0 %v259
    %v714 = vpop.f32.mrb[0].mxu0
    %v715 = vadd.f32 %v623, %v714
    %v716 = vpop.f32.mrb[0].mxu0
    %717 = vmatprep.mubr.f32.mxu0 0.0
    %718 = vmatmul.mubr.f32.gmra.mrb[0].mxu0 %v262
    %v719 = vpop.f32.mrb[0].mxu0
    %v720 = vadd.f32 %v623, %v719
    %v721 = vpop.f32.mrb[0].mxu0
    %722 = vmatprep.mubr.f32.mxu0 0.0
    %723 = vmatmul.mubr.f32.gmra.mrb[0].mxu0 %v265
    %v724 = vpop.f32.mrb[0].mxu0
    %v725 = vadd.f32 %v623, %v724
    %v726 = vpop.f32.mrb[0].mxu0
    %727 = vmatprep.mubr.f32.mxu0 0.0
    %728 = vmatmul.mubr.f32.gmra.mrb[0].mxu0 %v268
    %v729 = vpop.f32.mrb[0].mxu0
    %v730 = vadd.f32 %v623, %v729
    %v731 = vpop.f32.mrb[0].mxu0
    %732 = vdwg.mxu0
    %v733 = vld [vmem:[%s4] sm:$0xff]
    %v734 = vld [vmem:[%s4 + $0x8] sm:$0xff]
    %v735 = vld [vmem:[%s4 + $0x10] sm:$0xff]
    %v736 = vld [vmem:[%s4 + $0x18] sm:$0xff]
    %s737 = scalar_lea.vmem %s4, 32
    %v738 = vld [vmem:[%s737] sm:$0xff]
    %v739 = vld [vmem:[%s737 + $0x8] sm:$0xff]
    %v740 = vld [vmem:[%s737 + $0x10] sm:$0xff]
    %v741 = vld [vmem:[%s737 + $0x18] sm:$0xff]
    %s742 = scalar_lea.vmem %s4, 64
    %v743 = vld [vmem:[%s742] sm:$0xff]
    %v744 = vld [vmem:[%s742 + $0x8] sm:$0xff]
    %v745 = vld [vmem:[%s742 + $0x10] sm:$0xff]
    %v746 = vld [vmem:[%s742 + $0x18] sm:$0xff]
    %s747 = scalar_lea.vmem %s4, 96
    %v748 = vld [vmem:[%s747] sm:$0xff]
    %v749 = vld [vmem:[%s747 + $0x8] sm:$0xff]
    %v750 = vld [vmem:[%s747 + $0x10] sm:$0xff]
    %v751 = vld [vmem:[%s747 + $0x18] sm:$0xff]
    %vm752 = vcmask 261120
    %v754 = vsel %vm752, 0.0, 0
    %756 = vmatprep.subr.mxu0 0.0
    %757 = vmatpush1.msra.mxu0 %v733
    %758 = vmatprep.subr.mxu0 0.0
    %759 = vmatpush1.msra.mxu0 %v734
    %760 = vmatprep.subr.mxu0 0.0
    %761 = vmatpush1.msra.mxu0 %v735
    %762 = vmatprep.subr.mxu0 0.0
    %763 = vmatpush1.msra.mxu0 %v736
    %764 = vmatprep.subr.mxu0 0.0
    %765 = vmatpush1.msra.mxu0 0.0
    %766 = vmatprep.subr.mxu0 0.0
    %767 = vmatpush1.msra.mxu0 0.0
    %768 = vmatprep.subr.mxu0 0.0
    %769 = vmatpush1.msra.mxu0 0.0
    %770 = vmatprep.subr.mxu0 0.0
    %771 = vmatpush1.msra.mxu0 0.0
    %772 = vmatprep.subr.mxu0 0.0
    %773 = vmatpush1.msra.mxu0 0.0
    %774 = vmatprep.subr.mxu0 0.0
    %775 = vmatpush1.msra.mxu0 0.0
    %776 = vmatprep.subr.mxu0 0.0
    %777 = vmatpush1.msra.mxu0 0.0
    %778 = vmatprep.subr.mxu0 0.0
    %779 = vmatpush1.msra.mxu0 0.0
    %780 = vmatprep.subr.mxu0 0.0
    %781 = vmatpush1.msra.mxu0 0.0
    %782 = vmatprep.subr.mxu0 0.0
    %783 = vmatpush1.msra.mxu0 0.0
    %784 = vmatprep.subr.mxu0 0.0
    %785 = vmatpush1.msra.mxu0 0.0
    %786 = vmatprep.subr.mxu0 0.0
    %787 = vmatpush1.msra.mxu0 0.0
    %788 = vmatprep.subr.mxu0 0.0
    %789 = vmatpush1.msra.mxu0 0.0
    %790 = vmatprep.subr.mxu0 0.0
    %791 = vmatpush1.msra.mxu0 0.0
    %792 = vmatprep.subr.mxu0 0.0
    %793 = vmatpush1.msra.mxu0 0.0
    %794 = vmatprep.subr.mxu0 0.0
    %795 = vmatpush1.msra.mxu0 0.0
    %796 = vmatprep.subr.mxu0 0.0
    %797 = vmatpush1.msra.mxu0 0.0
    %798 = vmatprep.subr.mxu0 0.0
    %799 = vmatpush1.msra.mxu0 0.0
    %800 = vmatprep.subr.mxu0 0.0
    %801 = vmatpush1.msra.mxu0 0.0
    %802 = vmatprep.subr.mxu0 0.0
    %803 = vmatpush1.msra.mxu0 0.0
    %804 = vmatprep.subr.mxu0 0.0
    %805 = vmatpush1.msra.mxu0 0.0
    %806 = vmatprep.subr.mxu0 0.0
    %807 = vmatpush1.msra.mxu0 0.0
    %808 = vmatprep.subr.mxu0 0.0
    %809 = vmatpush1.msra.mxu0 0.0
    %810 = vmatprep.subr.mxu0 0.0
    %811 = vmatpush1.msra.mxu0 0.0
    %812 = vmatprep.subr.mxu0 0.0
    %813 = vmatpush1.msra.mxu0 0.0
    %814 = vmatprep.subr.mxu0 0.0
    %815 = vmatpush1.msra.mxu0 0.0
    %816 = vmatprep.subr.mxu0 0.0
    %817 = vmatpush1.msra.mxu0 0.0
    %818 = vmatprep.subr.mxu0 0.0
    %819 = vmatpush1.msra.mxu0 0.0
    %820 = vmatprep.mubr.f32.mxu0 0.0
    %821 = vmatmul.mubr.f32.gmra.mrb[0].mxu0 %v754
    %v822 = vpop.f32.mrb[0].mxu0
    %v823 = vadd.f32 0.0, %v822
    %v824 = vpop.f32.mrb[0].mxu0
    %825 = vdwg.mxu0
    %v826 = vadd.f32 %v341, %v823
    %v827 = vxor.u32 %v826, 2147483648
    %v828 = vmul.f32 %v827, 1.442695
    %v829 = vpow.pop %v828
    %v830 = vadd.f32 %v829, 1.0
    %v831 = vrcp.pop %v830
    %v832 = vmul.f32 1.0, %v831
    %833 = vmatprep.subr.mxu0 0.0
    %834 = vmatpush1.msra.mxu0 %v738
    %835 = vmatprep.subr.mxu0 0.0
    %836 = vmatpush1.msra.mxu0 %v739
    %837 = vmatprep.subr.mxu0 0.0
    %838 = vmatpush1.msra.mxu0 %v740
    %839 = vmatprep.subr.mxu0 0.0
    %840 = vmatpush1.msra.mxu0 %v741
    %841 = vmatprep.subr.mxu0 0.0
    %842 = vmatpush1.msra.mxu0 0.0
    %843 = vmatprep.subr.mxu0 0.0
    %844 = vmatpush1.msra.mxu0 0.0
    %845 = vmatprep.subr.mxu0 0.0
    %846 = vmatpush1.msra.mxu0 0.0
    %847 = vmatprep.subr.mxu0 0.0
    %848 = vmatpush1.msra.mxu0 0.0
    %849 = vmatprep.subr.mxu0 0.0
    %850 = vmatpush1.msra.mxu0 0.0
    %851 = vmatprep.subr.mxu0 0.0
    %852 = vmatpush1.msra.mxu0 0.0
    %853 = vmatprep.subr.mxu0 0.0
    %854 = vmatpush1.msra.mxu0 0.0
    %855 = vmatprep.subr.mxu0 0.0
    %856 = vmatpush1.msra.mxu0 0.0
    %857 = vmatprep.subr.mxu0 0.0
    %858 = vmatpush1.msra.mxu0 0.0
    %859 = vmatprep.subr.mxu0 0.0
    %860 = vmatpush1.msra.mxu0 0.0
    %861 = vmatprep.subr.mxu0 0.0
    %862 = vmatpush1.msra.mxu0 0.0
    %863 = vmatprep.subr.mxu0 0.0
    %864 = vmatpush1.msra.mxu0 0.0
    %865 = vmatprep.subr.mxu0 0.0
    %866 = vmatpush1.msra.mxu0 0.0
    %867 = vmatprep.subr.mxu0 0.0
    %868 = vmatpush1.msra.mxu0 0.0
    %869 = vmatprep.subr.mxu0 0.0
    %870 = vmatpush1.msra.mxu0 0.0
    %871 = vmatprep.subr.mxu0 0.0
    %872 = vmatpush1.msra.mxu0 0.0
    %873 = vmatprep.subr.mxu0 0.0
    %874 = vmatpush1.msra.mxu0 0.0
    %875 = vmatprep.subr.mxu0 0.0
    %876 = vmatpush1.msra.mxu0 0.0
    %877 = vmatprep.subr.mxu0 0.0
    %878 = vmatpush1.msra.mxu0 0.0
    %879 = vmatprep.subr.mxu0 0.0
    %880 = vmatpush1.msra.mxu0 0.0
    %881 = vmatprep.subr.mxu0 0.0
    %882 = vmatpush1.msra.mxu0 0.0
    %883 = vmatprep.subr.mxu0 0.0
    %884 = vmatpush1.msra.mxu0 0.0
    %885 = vmatprep.subr.mxu0 0.0
    %886 = vmatpush1.msra.mxu0 0.0
    %887 = vmatprep.subr.mxu0 0.0
    %888 = vmatpush1.msra.mxu0 0.0
    %889 = vmatprep.subr.mxu0 0.0
    %890 = vmatpush1.msra.mxu0 0.0
    %891 = vmatprep.subr.mxu0 0.0
    %892 = vmatpush1.msra.mxu0 0.0
    %893 = vmatprep.subr.mxu0 0.0
    %894 = vmatpush1.msra.mxu0 0.0
    %895 = vmatprep.subr.mxu0 0.0
    %896 = vmatpush1.msra.mxu0 0.0
    %897 = vmatprep.mubr.f32.mxu0 0.0
    %898 = vmatmul.mubr.f32.gmra.mrb[0].mxu0 %v754
    %v899 = vpop.f32.mrb[0].mxu0
    %v900 = vadd.f32 0.0, %v899
    %v901 = vpop.f32.mrb[0].mxu0
    %902 = vdwg.mxu0
    %v903 = vadd.f32 %v459, %v900
    %v904 = vxor.u32 %v903, 2147483648
    %v905 = vmul.f32 %v904, 1.442695
    %v906 = vpow.pop %v905
    %v907 = vadd.f32 %v906, 1.0
    %v908 = vrcp.pop %v907
    %v909 = vmul.f32 1.0, %v908
    %910 = vmatprep.subr.mxu0 0.0
    %911 = vmatpush1.msra.mxu0 %v743
    %912 = vmatprep.subr.mxu0 0.0
    %913 = vmatpush1.msra.mxu0 %v744
    %914 = vmatprep.subr.mxu0 0.0
    %915 = vmatpush1.msra.mxu0 %v745
    %916 = vmatprep.subr.mxu0 0.0
    %917 = vmatpush1.msra.mxu0 %v746
    %918 = vmatprep.subr.mxu0 0.0
    %919 = vmatpush1.msra.mxu0 0.0
    %920 = vmatprep.subr.mxu0 0.0
    %921 = vmatpush1.msra.mxu0 0.0
    %922 = vmatprep.subr.mxu0 0.0
    %923 = vmatpush1.msra.mxu0 0.0
    %924 = vmatprep.subr.mxu0 0.0
    %925 = vmatpush1.msra.mxu0 0.0
    %926 = vmatprep.subr.mxu0 0.0
    %927 = vmatpush1.msra.mxu0 0.0
    %928 = vmatprep.subr.mxu0 0.0
    %929 = vmatpush1.msra.mxu0 0.0
    %930 = vmatprep.subr.mxu0 0.0
    %931 = vmatpush1.msra.mxu0 0.0
    %932 = vmatprep.subr.mxu0 0.0
    %933 = vmatpush1.msra.mxu0 0.0
    %934 = vmatprep.subr.mxu0 0.0
    %935 = vmatpush1.msra.mxu0 0.0
    %936 = vmatprep.subr.mxu0 0.0
    %937 = vmatpush1.msra.mxu0 0.0
    %938 = vmatprep.subr.mxu0 0.0
    %939 = vmatpush1.msra.mxu0 0.0
    %940 = vmatprep.subr.mxu0 0.0
    %941 = vmatpush1.msra.mxu0 0.0
    %942 = vmatprep.subr.mxu0 0.0
    %943 = vmatpush1.msra.mxu0 0.0
    %944 = vmatprep.subr.mxu0 0.0
    %945 = vmatpush1.msra.mxu0 0.0
    %946 = vmatprep.subr.mxu0 0.0
    %947 = vmatpush1.msra.mxu0 0.0
    %948 = vmatprep.subr.mxu0 0.0
    %949 = vmatpush1.msra.mxu0 0.0
    %950 = vmatprep.subr.mxu0 0.0
    %951 = vmatpush1.msra.mxu0 0.0
    %952 = vmatprep.subr.mxu0 0.0
    %953 = vmatpush1.msra.mxu0 0.0
    %954 = vmatprep.subr.mxu0 0.0
    %955 = vmatpush1.msra.mxu0 0.0
    %956 = vmatprep.subr.mxu0 0.0
    %957 = vmatpush1.msra.mxu0 0.0
    %958 = vmatprep.subr.mxu0 0.0
    %959 = vmatpush1.msra.mxu0 0.0
    %960 = vmatprep.subr.mxu0 0.0
    %961 = vmatpush1.msra.mxu0 0.0
    %962 = vmatprep.subr.mxu0 0.0
    %963 = vmatpush1.msra.mxu0 0.0
    %964 = vmatprep.subr.mxu0 0.0
    %965 = vmatpush1.msra.mxu0 0.0
    %966 = vmatprep.subr.mxu0 0.0
    %967 = vmatpush1.msra.mxu0 0.0
    %968 = vmatprep.subr.mxu0 0.0
    %969 = vmatpush1.msra.mxu0 0.0
    %970 = vmatprep.subr.mxu0 0.0
    %971 = vmatpush1.msra.mxu0 0.0
    %972 = vmatprep.subr.mxu0 0.0
    %973 = vmatpush1.msra.mxu0 0.0
    %974 = vmatprep.mubr.f32.mxu0 0.0
    %975 = vmatmul.mubr.f32.gmra.mrb[0].mxu0 %v754
    %v976 = vpop.f32.mrb[0].mxu0
    %v977 = vadd.f32 0.0, %v976
    %v978 = vpop.f32.mrb[0].mxu0
    %979 = vdwg.mxu0
    %v980 = vadd.f32 %v577, %v977
    %v981 = vtanh.pop %v980
    %982 = vmatprep.subr.mxu0 0.0
    %983 = vmatpush1.msra.mxu0 %v748
    %984 = vmatprep.subr.mxu0 0.0
    %985 = vmatpush1.msra.mxu0 %v749
    %986 = vmatprep.subr.mxu0 0.0
    %987 = vmatpush1.msra.mxu0 %v750
    %988 = vmatprep.subr.mxu0 0.0
    %989 = vmatpush1.msra.mxu0 %v751
    %990 = vmatprep.subr.mxu0 0.0
    %991 = vmatpush1.msra.mxu0 0.0
    %992 = vmatprep.subr.mxu0 0.0
    %993 = vmatpush1.msra.mxu0 0.0
    %994 = vmatprep.subr.mxu0 0.0
    %995 = vmatpush1.msra.mxu0 0.0
    %996 = vmatprep.subr.mxu0 0.0
    %997 = vmatpush1.msra.mxu0 0.0
    %998 = vmatprep.subr.mxu0 0.0
    %999 = vmatpush1.msra.mxu0 0.0
    %1000 = vmatprep.subr.mxu0 0.0
    %1001 = vmatpush1.msra.mxu0 0.0
    %1002 = vmatprep.subr.mxu0 0.0
    %1003 = vmatpush1.msra.mxu0 0.0
    %1004 = vmatprep.subr.mxu0 0.0
    %1005 = vmatpush1.msra.mxu0 0.0
    %1006 = vmatprep.subr.mxu0 0.0
    %1007 = vmatpush1.msra.mxu0 0.0
    %1008 = vmatprep.subr.mxu0 0.0
    %1009 = vmatpush1.msra.mxu0 0.0
    %1010 = vmatprep.subr.mxu0 0.0
    %1011 = vmatpush1.msra.mxu0 0.0
    %1012 = vmatprep.subr.mxu0 0.0
    %1013 = vmatpush1.msra.mxu0 0.0
    %1014 = vmatprep.subr.mxu0 0.0
    %1015 = vmatpush1.msra.mxu0 0.0
    %1016 = vmatprep.subr.mxu0 0.0
    %1017 = vmatpush1.msra.mxu0 0.0
    %1018 = vmatprep.subr.mxu0 0.0
    %1019 = vmatpush1.msra.mxu0 0.0
    %1020 = vmatprep.subr.mxu0 0.0
    %1021 = vmatpush1.msra.mxu0 0.0
    %1022 = vmatprep.subr.mxu0 0.0
    %1023 = vmatpush1.msra.mxu0 0.0
    %1024 = vmatprep.subr.mxu0 0.0
    %1025 = vmatpush1.msra.mxu0 0.0
    %1026 = vmatprep.subr.mxu0 0.0
    %1027 = vmatpush1.msra.mxu0 0.0
    %1028 = vmatprep.subr.mxu0 0.0
    %1029 = vmatpush1.msra.mxu0 0.0
    %1030 = vmatprep.subr.mxu0 0.0
    %1031 = vmatpush1.msra.mxu0 0.0
    %1032 = vmatprep.subr.mxu0 0.0
    %1033 = vmatpush1.msra.mxu0 0.0
    %1034 = vmatprep.subr.mxu0 0.0
    %1035 = vmatpush1.msra.mxu0 0.0
    %1036 = vmatprep.subr.mxu0 0.0
    %1037 = vmatpush1.msra.mxu0 0.0
    %1038 = vmatprep.subr.mxu0 0.0
    %1039 = vmatpush1.msra.mxu0 0.0
    %1040 = vmatprep.subr.mxu0 0.0
    %1041 = vmatpush1.msra.mxu0 0.0
    %1042 = vmatprep.subr.mxu0 0.0
    %1043 = vmatpush1.msra.mxu0 0.0
    %1044 = vmatprep.subr.mxu0 0.0
    %1045 = vmatpush1.msra.mxu0 0.0
    %1046 = vmatprep.mubr.f32.mxu0 0.0
    %1047 = vmatmul.mubr.f32.gmra.mrb[0].mxu0 %v754
    %v1048 = vpop.f32.mrb[0].mxu0
    %v1049 = vadd.f32 0.0, %v1048
    %v1050 = vpop.f32.mrb[0].mxu0
    %1051 = vdwg.mxu0
    %v1052 = vadd.f32 %v695, %v1049
    %v1053 = vxor.u32 %v1052, 2147483648
    %v1054 = vmul.f32 %v1053, 1.442695
    %v1055 = vpow.pop %v1054
    %v1056 = vadd.f32 %v1055, 1.0
    %v1057 = vrcp.pop %v1056
    %v1058 = vmul.f32 1.0, %v1057
    %v1059 = vmul.f32 %v909, 0.0
    %v1060 = vmul.f32 %v832, %v981
    %v1061 = vadd.f32 %v1059, %v1060
    %v1062 = vtanh.pop %v1061
    %v1063 = vmul.f32 %v1058, %v1062
    %v1065 = vsel %vm752, %v1063, 0
    %1067 = vmatprep.subr.mxu0 0.0
    %1068 = vmatpush1.msra.mxu0 %v733
    %1069 = vmatprep.subr.mxu0 0.0
    %1070 = vmatpush1.msra.mxu0 %v734
    %1071 = vmatprep.subr.mxu0 0.0
    %1072 = vmatpush1.msra.mxu0 %v735
    %1073 = vmatprep.subr.mxu0 0.0
    %1074 = vmatpush1.msra.mxu0 %v736
    %1075 = vmatprep.subr.mxu0 0.0
    %1076 = vmatpush1.msra.mxu0 0.0
    %1077 = vmatprep.subr.mxu0 0.0
    %1078 = vmatpush1.msra.mxu0 0.0
    %1079 = vmatprep.subr.mxu0 0.0
    %1080 = vmatpush1.msra.mxu0 0.0
    %1081 = vmatprep.subr.mxu0 0.0
    %1082 = vmatpush1.msra.mxu0 0.0
    %1083 = vmatprep.subr.mxu0 0.0
    %1084 = vmatpush1.msra.mxu0 0.0
    %1085 = vmatprep.subr.mxu0 0.0
    %1086 = vmatpush1.msra.mxu0 0.0
    %1087 = vmatprep.subr.mxu0 0.0
    %1088 = vmatpush1.msra.mxu0 0.0
    %1089 = vmatprep.subr.mxu0 0.0
    %1090 = vmatpush1.msra.mxu0 0.0
    %1091 = vmatprep.subr.mxu0 0.0
    %1092 = vmatpush1.msra.mxu0 0.0
    %1093 = vmatprep.subr.mxu0 0.0
    %1094 = vmatpush1.msra.mxu0 0.0
    %1095 = vmatprep.subr.mxu0 0.0
    %1096 = vmatpush1.msra.mxu0 0.0
    %1097 = vmatprep.subr.mxu0 0.0
    %1098 = vmatpush1.msra.mxu0 0.0
    %1099 = vmatprep.subr.mxu0 0.0
    %1100 = vmatpush1.msra.mxu0 0.0
    %1101 = vmatprep.subr.mxu0 0.0
    %1102 = vmatpush1.msra.mxu0 0.0
    %1103 = vmatprep.subr.mxu0 0.0
    %1104 = vmatpush1.msra.mxu0 0.0
    %1105 = vmatprep.subr.mxu0 0.0
    %1106 = vmatpush1.msra.mxu0 0.0
    %1107 = vmatprep.subr.mxu0 0.0
    %1108 = vmatpush1.msra.mxu0 0.0
    %1109 = vmatprep.subr.mxu0 0.0
    %1110 = vmatpush1.msra.mxu0 0.0
    %1111 = vmatprep.subr.mxu0 0.0
    %1112 = vmatpush1.msra.mxu0 0.0
    %1113 = vmatprep.subr.mxu0 0.0
    %1114 = vmatpush1.msra.mxu0 0.0
    %1115 = vmatprep.subr.mxu0 0.0
    %1116 = vmatpush1.msra.mxu0 0.0
    %1117 = vmatprep.subr.mxu0 0.0
    %1118 = vmatpush1.msra.mxu0 0.0
    %1119 = vmatprep.subr.mxu0 0.0
    %1120 = vmatpush1.msra.mxu0 0.0
    %1121 = vmatprep.subr.mxu0 0.0
    %1122 = vmatpush1.msra.mxu0 0.0
    %1123 = vmatprep.subr.mxu0 0.0
    %1124 = vmatpush1.msra.mxu0 0.0
    %1125 = vmatprep.subr.mxu0 0.0
    %1126 = vmatpush1.msra.mxu0 0.0
    %1127 = vmatprep.subr.mxu0 0.0
    %1128 = vmatpush1.msra.mxu0 0.0
    %1129 = vmatprep.subr.mxu0 0.0
    %1130 = vmatpush1.msra.mxu0 0.0
    %1131 = vmatprep.mubr.f32.mxu0 0.0
    %1132 = vmatmul.mubr.f32.gmra.mrb[0].mxu0 %v1065
    %v1133 = vpop.f32.mrb[0].mxu0
    %v1134 = vadd.f32 0.0, %v1133
    %v1135 = vpop.f32.mrb[0].mxu0
    %1136 = vdwg.mxu0
    %v1137 = vadd.f32 %v346, %v1134
    %v1138 = vxor.u32 %v1137, 2147483648
    %v1139 = vmul.f32 %v1138, 1.442695
    %v1140 = vpow.pop %v1139
    %v1141 = vadd.f32 %v1140, 1.0
    %v1142 = vrcp.pop %v1141
    %v1143 = vmul.f32 1.0, %v1142
    %1144 = vmatprep.subr.mxu0 0.0
    %1145 = vmatpush1.msra.mxu0 %v738
    %1146 = vmatprep.subr.mxu0 0.0
    %1147 = vmatpush1.msra.mxu0 %v739
    %1148 = vmatprep.subr.mxu0 0.0
    %1149 = vmatpush1.msra.mxu0 %v740
    %1150 = vmatprep.subr.mxu0 0.0
    %1151 = vmatpush1.msra.mxu0 %v741
    %1152 = vmatprep.subr.mxu0 0.0
    %1153 = vmatpush1.msra.mxu0 0.0
    %1154 = vmatprep.subr.mxu0 0.0
    %1155 = vmatpush1.msra.mxu0 0.0
    %1156 = vmatprep.subr.mxu0 0.0
    %1157 = vmatpush1.msra.mxu0 0.0
    %1158 = vmatprep.subr.mxu0 0.0
    %1159 = vmatpush1.msra.mxu0 0.0
    %1160 = vmatprep.subr.mxu0 0.0
    %1161 = vmatpush1.msra.mxu0 0.0
    %1162 = vmatprep.subr.mxu0 0.0
    %1163 = vmatpush1.msra.mxu0 0.0
    %1164 = vmatprep.subr.mxu0 0.0
    %1165 = vmatpush1.msra.mxu0 0.0
    %1166 = vmatprep.subr.mxu0 0.0
    %1167 = vmatpush1.msra.mxu0 0.0
    %1168 = vmatprep.subr.mxu0 0.0
    %1169 = vmatpush1.msra.mxu0 0.0
    %1170 = vmatprep.subr.mxu0 0.0
    %1171 = vmatpush1.msra.mxu0 0.0
    %1172 = vmatprep.subr.mxu0 0.0
    %1173 = vmatpush1.msra.mxu0 0.0
    %1174 = vmatprep.subr.mxu0 0.0
    %1175 = vmatpush1.msra.mxu0 0.0
    %1176 = vmatprep.subr.mxu0 0.0
    %1177 = vmatpush1.msra.mxu0 0.0
    %1178 = vmatprep.subr.mxu0 0.0
    %1179 = vmatpush1.msra.mxu0 0.0
    %1180 = vmatprep.subr.mxu0 0.0
    %1181 = vmatpush1.msra.mxu0 0.0
    %1182 = vmatprep.subr.mxu0 0.0
    %1183 = vmatpush1.msra.mxu0 0.0
    %1184 = vmatprep.subr.mxu0 0.0
    %1185 = vmatpush1.msra.mxu0 0.0
    %1186 = vmatprep.subr.mxu0 0.0
    %1187 = vmatpush1.msra.mxu0 0.0
    %1188 = vmatprep.subr.mxu0 0.0
    %1189 = vmatpush1.msra.mxu0 0.0
    %1190 = vmatprep.subr.mxu0 0.0
    %1191 = vmatpush1.msra.mxu0 0.0
    %1192 = vmatprep.subr.mxu0 0.0
    %1193 = vmatpush1.msra.mxu0 0.0
    %1194 = vmatprep.subr.mxu0 0.0
    %1195 = vmatpush1.msra.mxu0 0.0
    %1196 = vmatprep.subr.mxu0 0.0
    %1197 = vmatpush1.msra.mxu0 0.0
    %1198 = vmatprep.subr.mxu0 0.0
    %1199 = vmatpush1.msra.mxu0 0.0
    %1200 = vmatprep.subr.mxu0 0.0
    %1201 = vmatpush1.msra.mxu0 0.0
    %1202 = vmatprep.subr.mxu0 0.0
    %1203 = vmatpush1.msra.mxu0 0.0
    %1204 = vmatprep.subr.mxu0 0.0
    %1205 = vmatpush1.msra.mxu0 0.0
    %1206 = vmatprep.subr.mxu0 0.0
    %1207 = vmatpush1.msra.mxu0 0.0
    %1208 = vmatprep.mubr.f32.mxu0 0.0
    %1209 = vmatmul.mubr.f32.gmra.mrb[0].mxu0 %v1065
    %v1210 = vpop.f32.mrb[0].mxu0
    %v1211 = vadd.f32 0.0, %v1210
    %v1212 = vpop.f32.mrb[0].mxu0
    %1213 = vdwg.mxu0
    %v1214 = vadd.f32 %v464, %v1211
    %v1215 = vxor.u32 %v1214, 2147483648
    %v1216 = vmul.f32 %v1215, 1.442695
    %v1217 = vpow.pop %v1216
    %v1218 = vadd.f32 %v1217, 1.0
    %v1219 = vrcp.pop %v1218
    %v1220 = vmul.f32 1.0, %v1219
    %1221 = vmatprep.subr.mxu0 0.0
    %1222 = vmatpush1.msra.mxu0 %v743
    %1223 = vmatprep.subr.mxu0 0.0
    %1224 = vmatpush1.msra.mxu0 %v744
    %1225 = vmatprep.subr.mxu0 0.0
    %1226 = vmatpush1.msra.mxu0 %v745
    %1227 = vmatprep.subr.mxu0 0.0
    %1228 = vmatpush1.msra.mxu0 %v746
    %1229 = vmatprep.subr.mxu0 0.0
    %1230 = vmatpush1.msra.mxu0 0.0
    %1231 = vmatprep.subr.mxu0 0.0
    %1232 = vmatpush1.msra.mxu0 0.0
    %1233 = vmatprep.subr.mxu0 0.0
    %1234 = vmatpush1.msra.mxu0 0.0
    %1235 = vmatprep.subr.mxu0 0.0
    %1236 = vmatpush1.msra.mxu0 0.0
    %1237 = vmatprep.subr.mxu0 0.0
    %1238 = vmatpush1.msra.mxu0 0.0
    %1239 = vmatprep.subr.mxu0 0.0
    %1240 = vmatpush1.msra.mxu0 0.0
    %1241 = vmatprep.subr.mxu0 0.0
    %1242 = vmatpush1.msra.mxu0 0.0
    %1243 = vmatprep.subr.mxu0 0.0
    %1244 = vmatpush1.msra.mxu0 0.0
    %1245 = vmatprep.subr.mxu0 0.0
    %1246 = vmatpush1.msra.mxu0 0.0
    %1247 = vmatprep.subr.mxu0 0.0
    %1248 = vmatpush1.msra.mxu0 0.0
    %1249 = vmatprep.subr.mxu0 0.0
    %1250 = vmatpush1.msra.mxu0 0.0
    %1251 = vmatprep.subr.mxu0 0.0
    %1252 = vmatpush1.msra.mxu0 0.0
    %1253 = vmatprep.subr.mxu0 0.0
    %1254 = vmatpush1.msra.mxu0 0.0
    %1255 = vmatprep.subr.mxu0 0.0
    %1256 = vmatpush1.msra.mxu0 0.0
    %1257 = vmatprep.subr.mxu0 0.0
    %1258 = vmatpush1.msra.mxu0 0.0
    %1259 = vmatprep.subr.mxu0 0.0
    %1260 = vmatpush1.msra.mxu0 0.0
    %1261 = vmatprep.subr.mxu0 0.0
    %1262 = vmatpush1.msra.mxu0 0.0
    %1263 = vmatprep.subr.mxu0 0.0
    %1264 = vmatpush1.msra.mxu0 0.0
    %1265 = vmatprep.subr.mxu0 0.0
    %1266 = vmatpush1.msra.mxu0 0.0
    %1267 = vmatprep.subr.mxu0 0.0
    %1268 = vmatpush1.msra.mxu0 0.0
    %1269 = vmatprep.subr.mxu0 0.0
    %1270 = vmatpush1.msra.mxu0 0.0
    %1271 = vmatprep.subr.mxu0 0.0
    %1272 = vmatpush1.msra.mxu0 0.0
    %1273 = vmatprep.subr.mxu0 0.0
    %1274 = vmatpush1.msra.mxu0 0.0
    %1275 = vmatprep.subr.mxu0 0.0
    %1276 = vmatpush1.msra.mxu0 0.0
    %1277 = vmatprep.subr.mxu0 0.0
    %1278 = vmatpush1.msra.mxu0 0.0
    %1279 = vmatprep.subr.mxu0 0.0
    %1280 = vmatpush1.msra.mxu0 0.0
    %1281 = vmatprep.subr.mxu0 0.0
    %1282 = vmatpush1.msra.mxu0 0.0
    %1283 = vmatprep.subr.mxu0 0.0
    %1284 = vmatpush1.msra.mxu0 0.0
    %1285 = vmatprep.mubr.f32.mxu0 0.0
    %1286 = vmatmul.mubr.f32.gmra.mrb[0].mxu0 %v1065
    %v1287 = vpop.f32.mrb[0].mxu0
    %v1288 = vadd.f32 0.0, %v1287
    %v1289 = vpop.f32.mrb[0].mxu0
    %1290 = vdwg.mxu0
    %v1291 = vadd.f32 %v582, %v1288
    %v1292 = vtanh.pop %v1291
    %1293 = vmatprep.subr.mxu0 0.0
    %1294 = vmatpush1.msra.mxu0 %v748
    %1295 = vmatprep.subr.mxu0 0.0
    %1296 = vmatpush1.msra.mxu0 %v749
    %1297 = vmatprep.subr.mxu0 0.0
    %1298 = vmatpush1.msra.mxu0 %v750
    %1299 = vmatprep.subr.mxu0 0.0
    %1300 = vmatpush1.msra.mxu0 %v751
    %1301 = vmatprep.subr.mxu0 0.0
    %1302 = vmatpush1.msra.mxu0 0.0
    %1303 = vmatprep.subr.mxu0 0.0
    %1304 = vmatpush1.msra.mxu0 0.0
    %1305 = vmatprep.subr.mxu0 0.0
    %1306 = vmatpush1.msra.mxu0 0.0
    %1307 = vmatprep.subr.mxu0 0.0
    %1308 = vmatpush1.msra.mxu0 0.0
    %1309 = vmatprep.subr.mxu0 0.0
    %1310 = vmatpush1.msra.mxu0 0.0
    %1311 = vmatprep.subr.mxu0 0.0
    %1312 = vmatpush1.msra.mxu0 0.0
    %1313 = vmatprep.subr.mxu0 0.0
    %1314 = vmatpush1.msra.mxu0 0.0
    %1315 = vmatprep.subr.mxu0 0.0
    %1316 = vmatpush1.msra.mxu0 0.0
    %1317 = vmatprep.subr.mxu0 0.0
    %1318 = vmatpush1.msra.mxu0 0.0
    %1319 = vmatprep.subr.mxu0 0.0
    %1320 = vmatpush1.msra.mxu0 0.0
    %1321 = vmatprep.subr.mxu0 0.0
    %1322 = vmatpush1.msra.mxu0 0.0
    %1323 = vmatprep.subr.mxu0 0.0
    %1324 = vmatpush1.msra.mxu0 0.0
    %1325 = vmatprep.subr.mxu0 0.0
    %1326 = vmatpush1.msra.mxu0 0.0
    %1327 = vmatprep.subr.mxu0 0.0
    %1328 = vmatpush1.msra.mxu0 0.0
    %1329 = vmatprep.subr.mxu0 0.0
    %1330 = vmatpush1.msra.mxu0 0.0
    %1331 = vmatprep.subr.mxu0 0.0
    %1332 = vmatpush1.msra.mxu0 0.0
    %1333 = vmatprep.subr.mxu0 0.0
    %1334 = vmatpush1.msra.mxu0 0.0
    %1335 = vmatprep.subr.mxu0 0.0
    %1336 = vmatpush1.msra.mxu0 0.0
    %1337 = vmatprep.subr.mxu0 0.0
    %1338 = vmatpush1.msra.mxu0 0.0
    %1339 = vmatprep.subr.mxu0 0.0
    %1340 = vmatpush1.msra.mxu0 0.0
    %1341 = vmatprep.subr.mxu0 0.0
    %1342 = vmatpush1.msra.mxu0 0.0
    %1343 = vmatprep.subr.mxu0 0.0
    %1344 = vmatpush1.msra.mxu0 0.0
    %1345 = vmatprep.subr.mxu0 0.0
    %1346 = vmatpush1.msra.mxu0 0.0
    %1347 = vmatprep.subr.mxu0 0.0
    %1348 = vmatpush1.msra.mxu0 0.0
    %1349 = vmatprep.subr.mxu0 0.0
    %1350 = vmatpush1.msra.mxu0 0.0
    %1351 = vmatprep.subr.mxu0 0.0
    %1352 = vmatpush1.msra.mxu0 0.0
    %1353 = vmatprep.subr.mxu0 0.0
    %1354 = vmatpush1.msra.mxu0 0.0
    %1355 = vmatprep.subr.mxu0 0.0
    %1356 = vmatpush1.msra.mxu0 0.0
    %1357 = vmatprep.mubr.f32.mxu0 0.0
    %1358 = vmatmul.mubr.f32.gmra.mrb[0].mxu0 %v1065
    %v1359 = vpop.f32.mrb[0].mxu0
    %v1360 = vadd.f32 0.0, %v1359
    %v1361 = vpop.f32.mrb[0].mxu0
    %1362 = vdwg.mxu0
    %v1363 = vadd.f32 %v700, %v1360
    %v1364 = vxor.u32 %v1363, 2147483648
    %v1365 = vmul.f32 %v1364, 1.442695
    %v1366 = vpow.pop %v1365
    %v1367 = vadd.f32 %v1366, 1.0
    %v1368 = vrcp.pop %v1367
    %v1369 = vmul.f32 1.0, %v1368
    %v1370 = vmul.f32 %v1220, %v1061
    %v1371 = vmul.f32 %v1143, %v1292
    %v1372 = vadd.f32 %v1370, %v1371
    %v1373 = vtanh.pop %v1372
    %v1374 = vmul.f32 %v1369, %v1373
    %v1376 = vsel %vm752, %v1374, 0
    %1378 = vmatprep.subr.mxu0 0.0
    %1379 = vmatpush1.msra.mxu0 %v733
    %1380 = vmatprep.subr.mxu0 0.0
    %1381 = vmatpush1.msra.mxu0 %v734
    %1382 = vmatprep.subr.mxu0 0.0
    %1383 = vmatpush1.msra.mxu0 %v735
    %1384 = vmatprep.subr.mxu0 0.0
    %1385 = vmatpush1.msra.mxu0 %v736
    %1386 = vmatprep.subr.mxu0 0.0
    %1387 = vmatpush1.msra.mxu0 0.0
    %1388 = vmatprep.subr.mxu0 0.0
    %1389 = vmatpush1.msra.mxu0 0.0
    %1390 = vmatprep.subr.mxu0 0.0
    %1391 = vmatpush1.msra.mxu0 0.0
    %1392 = vmatprep.subr.mxu0 0.0
    %1393 = vmatpush1.msra.mxu0 0.0
    %1394 = vmatprep.subr.mxu0 0.0
    %1395 = vmatpush1.msra.mxu0 0.0
    %1396 = vmatprep.subr.mxu0 0.0
    %1397 = vmatpush1.msra.mxu0 0.0
    %1398 = vmatprep.subr.mxu0 0.0
    %1399 = vmatpush1.msra.mxu0 0.0
    %1400 = vmatprep.subr.mxu0 0.0
    %1401 = vmatpush1.msra.mxu0 0.0
    %1402 = vmatprep.subr.mxu0 0.0
    %1403 = vmatpush1.msra.mxu0 0.0
    %1404 = vmatprep.subr.mxu0 0.0
    %1405 = vmatpush1.msra.mxu0 0.0
    %1406 = vmatprep.subr.mxu0 0.0
    %1407 = vmatpush1.msra.mxu0 0.0
    %1408 = vmatprep.subr.mxu0 0.0
    %1409 = vmatpush1.msra.mxu0 0.0
    %1410 = vmatprep.subr.mxu0 0.0
    %1411 = vmatpush1.msra.mxu0 0.0
    %1412 = vmatprep.subr.mxu0 0.0
    %1413 = vmatpush1.msra.mxu0 0.0
    %1414 = vmatprep.subr.mxu0 0.0
    %1415 = vmatpush1.msra.mxu0 0.0
    %1416 = vmatprep.subr.mxu0 0.0
    %1417 = vmatpush1.msra.mxu0 0.0
    %1418 = vmatprep.subr.mxu0 0.0
    %1419 = vmatpush1.msra.mxu0 0.0
    %1420 = vmatprep.subr.mxu0 0.0
    %1421 = vmatpush1.msra.mxu0 0.0
    %1422 = vmatprep.subr.mxu0 0.0
    %1423 = vmatpush1.msra.mxu0 0.0
    %1424 = vmatprep.subr.mxu0 0.0
    %1425 = vmatpush1.msra.mxu0 0.0
    %1426 = vmatprep.subr.mxu0 0.0
    %1427 = vmatpush1.msra.mxu0 0.0
    %1428 = vmatprep.subr.mxu0 0.0
    %1429 = vmatpush1.msra.mxu0 0.0
    %1430 = vmatprep.subr.mxu0 0.0
    %1431 = vmatpush1.msra.mxu0 0.0
    %1432 = vmatprep.subr.mxu0 0.0
    %1433 = vmatpush1.msra.mxu0 0.0
    %1434 = vmatprep.subr.mxu0 0.0
    %1435 = vmatpush1.msra.mxu0 0.0
    %1436 = vmatprep.subr.mxu0 0.0
    %1437 = vmatpush1.msra.mxu0 0.0
    %1438 = vmatprep.subr.mxu0 0.0
    %1439 = vmatpush1.msra.mxu0 0.0
    %1440 = vmatprep.subr.mxu0 0.0
    %1441 = vmatpush1.msra.mxu0 0.0
    %1442 = vmatprep.mubr.f32.mxu0 0.0
    %1443 = vmatmul.mubr.f32.gmra.mrb[0].mxu0 %v1376
    %v1444 = vpop.f32.mrb[0].mxu0
    %v1445 = vadd.f32 0.0, %v1444
    %v1446 = vpop.f32.mrb[0].mxu0
    %1447 = vdwg.mxu0
    %v1448 = vadd.f32 %v351, %v1445
    %v1449 = vxor.u32 %v1448, 2147483648
    %v1450 = vmul.f32 %v1449, 1.442695
    %v1451 = vpow.pop %v1450
    %v1452 = vadd.f32 %v1451, 1.0
    %v1453 = vrcp.pop %v1452
    %v1454 = vmul.f32 1.0, %v1453
    %1455 = vmatprep.subr.mxu0 0.0
    %1456 = vmatpush1.msra.mxu0 %v738
    %1457 = vmatprep.subr.mxu0 0.0
    %1458 = vmatpush1.msra.mxu0 %v739
    %1459 = vmatprep.subr.mxu0 0.0
    %1460 = vmatpush1.msra.mxu0 %v740
    %1461 = vmatprep.subr.mxu0 0.0
    %1462 = vmatpush1.msra.mxu0 %v741
    %1463 = vmatprep.subr.mxu0 0.0
    %1464 = vmatpush1.msra.mxu0 0.0
    %1465 = vmatprep.subr.mxu0 0.0
    %1466 = vmatpush1.msra.mxu0 0.0
    %1467 = vmatprep.subr.mxu0 0.0
    %1468 = vmatpush1.msra.mxu0 0.0
    %1469 = vmatprep.subr.mxu0 0.0
    %1470 = vmatpush1.msra.mxu0 0.0
    %1471 = vmatprep.subr.mxu0 0.0
    %1472 = vmatpush1.msra.mxu0 0.0
    %1473 = vmatprep.subr.mxu0 0.0
    %1474 = vmatpush1.msra.mxu0 0.0
    %1475 = vmatprep.subr.mxu0 0.0
    %1476 = vmatpush1.msra.mxu0 0.0
    %1477 = vmatprep.subr.mxu0 0.0
    %1478 = vmatpush1.msra.mxu0 0.0
    %1479 = vmatprep.subr.mxu0 0.0
    %1480 = vmatpush1.msra.mxu0 0.0
    %1481 = vmatprep.subr.mxu0 0.0
    %1482 = vmatpush1.msra.mxu0 0.0
    %1483 = vmatprep.subr.mxu0 0.0
    %1484 = vmatpush1.msra.mxu0 0.0
    %1485 = vmatprep.subr.mxu0 0.0
    %1486 = vmatpush1.msra.mxu0 0.0
    %1487 = vmatprep.subr.mxu0 0.0
    %1488 = vmatpush1.msra.mxu0 0.0
    %1489 = vmatprep.subr.mxu0 0.0
    %1490 = vmatpush1.msra.mxu0 0.0
    %1491 = vmatprep.subr.mxu0 0.0
    %1492 = vmatpush1.msra.mxu0 0.0
    %1493 = vmatprep.subr.mxu0 0.0
    %1494 = vmatpush1.msra.mxu0 0.0
    %1495 = vmatprep.subr.mxu0 0.0
    %1496 = vmatpush1.msra.mxu0 0.0
    %1497 = vmatprep.subr.mxu0 0.0
    %1498 = vmatpush1.msra.mxu0 0.0
    %1499 = vmatprep.subr.mxu0 0.0
    %1500 = vmatpush1.msra.mxu0 0.0
    %1501 = vmatprep.subr.mxu0 0.0
    %1502 = vmatpush1.msra.mxu0 0.0
    %1503 = vmatprep.subr.mxu0 0.0
    %1504 = vmatpush1.msra.mxu0 0.0
    %1505 = vmatprep.subr.mxu0 0.0
    %1506 = vmatpush1.msra.mxu0 0.0
    %1507 = vmatprep.subr.mxu0 0.0
    %1508 = vmatpush1.msra.mxu0 0.0
    %1509 = vmatprep.subr.mxu0 0.0
    %1510 = vmatpush1.msra.mxu0 0.0
    %1511 = vmatprep.subr.mxu0 0.0
    %1512 = vmatpush1.msra.mxu0 0.0
    %1513 = vmatprep.subr.mxu0 0.0
    %1514 = vmatpush1.msra.mxu0 0.0
    %1515 = vmatprep.subr.mxu0 0.0
    %1516 = vmatpush1.msra.mxu0 0.0
    %1517 = vmatprep.subr.mxu0 0.0
    %1518 = vmatpush1.msra.mxu0 0.0
    %1519 = vmatprep.mubr.f32.mxu0 0.0
    %1520 = vmatmul.mubr.f32.gmra.mrb[0].mxu0 %v1376
    %v1521 = vpop.f32.mrb[0].mxu0
    %v1522 = vadd.f32 0.0, %v1521
    %v1523 = vpop.f32.mrb[0].mxu0
    %1524 = vdwg.mxu0
    %v1525 = vadd.f32 %v469, %v1522
    %v1526 = vxor.u32 %v1525, 2147483648
    %v1527 = vmul.f32 %v1526, 1.442695
    %v1528 = vpow.pop %v1527
    %v1529 = vadd.f32 %v1528, 1.0
    %v1530 = vrcp.pop %v1529
    %v1531 = vmul.f32 1.0, %v1530
    %1532 = vmatprep.subr.mxu0 0.0
    %1533 = vmatpush1.msra.mxu0 %v743
    %1534 = vmatprep.subr.mxu0 0.0
    %1535 = vmatpush1.msra.mxu0 %v744
    %1536 = vmatprep.subr.mxu0 0.0
    %1537 = vmatpush1.msra.mxu0 %v745
    %1538 = vmatprep.subr.mxu0 0.0
    %1539 = vmatpush1.msra.mxu0 %v746
    %1540 = vmatprep.subr.mxu0 0.0
    %1541 = vmatpush1.msra.mxu0 0.0
    %1542 = vmatprep.subr.mxu0 0.0
    %1543 = vmatpush1.msra.mxu0 0.0
    %1544 = vmatprep.subr.mxu0 0.0
    %1545 = vmatpush1.msra.mxu0 0.0
    %1546 = vmatprep.subr.mxu0 0.0
    %1547 = vmatpush1.msra.mxu0 0.0
    %1548 = vmatprep.subr.mxu0 0.0
    %1549 = vmatpush1.msra.mxu0 0.0
    %1550 = vmatprep.subr.mxu0 0.0
    %1551 = vmatpush1.msra.mxu0 0.0
    %1552 = vmatprep.subr.mxu0 0.0
    %1553 = vmatpush1.msra.mxu0 0.0
    %1554 = vmatprep.subr.mxu0 0.0
    %1555 = vmatpush1.msra.mxu0 0.0
    %1556 = vmatprep.subr.mxu0 0.0
    %1557 = vmatpush1.msra.mxu0 0.0
    %1558 = vmatprep.subr.mxu0 0.0
    %1559 = vmatpush1.msra.mxu0 0.0
    %1560 = vmatprep.subr.mxu0 0.0
    %1561 = vmatpush1.msra.mxu0 0.0
    %1562 = vmatprep.subr.mxu0 0.0
    %1563 = vmatpush1.msra.mxu0 0.0
    %1564 = vmatprep.subr.mxu0 0.0
    %1565 = vmatpush1.msra.mxu0 0.0
    %1566 = vmatprep.subr.mxu0 0.0
    %1567 = vmatpush1.msra.mxu0 0.0
    %1568 = vmatprep.subr.mxu0 0.0
    %1569 = vmatpush1.msra.mxu0 0.0
    %1570 = vmatprep.subr.mxu0 0.0
    %1571 = vmatpush1.msra.mxu0 0.0
    %1572 = vmatprep.subr.mxu0 0.0
    %1573 = vmatpush1.msra.mxu0 0.0
    %1574 = vmatprep.subr.mxu0 0.0
    %1575 = vmatpush1.msra.mxu0 0.0
    %1576 = vmatprep.subr.mxu0 0.0
    %1577 = vmatpush1.msra.mxu0 0.0
    %1578 = vmatprep.subr.mxu0 0.0
    %1579 = vmatpush1.msra.mxu0 0.0
    %1580 = vmatprep.subr.mxu0 0.0
    %1581 = vmatpush1.msra.mxu0 0.0
    %1582 = vmatprep.subr.mxu0 0.0
    %1583 = vmatpush1.msra.mxu0 0.0
    %1584 = vmatprep.subr.mxu0 0.0
    %1585 = vmatpush1.msra.mxu0 0.0
    %1586 = vmatprep.subr.mxu0 0.0
    %1587 = vmatpush1.msra.mxu0 0.0
    %1588 = vmatprep.subr.mxu0 0.0
    %1589 = vmatpush1.msra.mxu0 0.0
    %1590 = vmatprep.subr.mxu0 0.0
    %1591 = vmatpush1.msra.mxu0 0.0
    %1592 = vmatprep.subr.mxu0 0.0
    %1593 = vmatpush1.msra.mxu0 0.0
    %1594 = vmatprep.subr.mxu0 0.0
    %1595 = vmatpush1.msra.mxu0 0.0
    %1596 = vmatprep.mubr.f32.mxu0 0.0
    %1597 = vmatmul.mubr.f32.gmra.mrb[0].mxu0 %v1376
    %v1598 = vpop.f32.mrb[0].mxu0
    %v1599 = vadd.f32 0.0, %v1598
    %v1600 = vpop.f32.mrb[0].mxu0
    %1601 = vdwg.mxu0
    %v1602 = vadd.f32 %v587, %v1599
    %v1603 = vtanh.pop %v1602
    %1604 = vmatprep.subr.mxu0 0.0
    %1605 = vmatpush1.msra.mxu0 %v748
    %1606 = vmatprep.subr.mxu0 0.0
    %1607 = vmatpush1.msra.mxu0 %v749
    %1608 = vmatprep.subr.mxu0 0.0
    %1609 = vmatpush1.msra.mxu0 %v750
    %1610 = vmatprep.subr.mxu0 0.0
    %1611 = vmatpush1.msra.mxu0 %v751
    %1612 = vmatprep.subr.mxu0 0.0
    %1613 = vmatpush1.msra.mxu0 0.0
    %1614 = vmatprep.subr.mxu0 0.0
    %1615 = vmatpush1.msra.mxu0 0.0
    %1616 = vmatprep.subr.mxu0 0.0
    %1617 = vmatpush1.msra.mxu0 0.0
    %1618 = vmatprep.subr.mxu0 0.0
    %1619 = vmatpush1.msra.mxu0 0.0
    %1620 = vmatprep.subr.mxu0 0.0
    %1621 = vmatpush1.msra.mxu0 0.0
    %1622 = vmatprep.subr.mxu0 0.0
    %1623 = vmatpush1.msra.mxu0 0.0
    %1624 = vmatprep.subr.mxu0 0.0
    %1625 = vmatpush1.msra.mxu0 0.0
    %1626 = vmatprep.subr.mxu0 0.0
    %1627 = vmatpush1.msra.mxu0 0.0
    %1628 = vmatprep.subr.mxu0 0.0
    %1629 = vmatpush1.msra.mxu0 0.0
    %1630 = vmatprep.subr.mxu0 0.0
    %1631 = vmatpush1.msra.mxu0 0.0
    %1632 = vmatprep.subr.mxu0 0.0
    %1633 = vmatpush1.msra.mxu0 0.0
    %1634 = vmatprep.subr.mxu0 0.0
    %1635 = vmatpush1.msra.mxu0 0.0
    %1636 = vmatprep.subr.mxu0 0.0
    %1637 = vmatpush1.msra.mxu0 0.0
    %1638 = vmatprep.subr.mxu0 0.0
    %1639 = vmatpush1.msra.mxu0 0.0
    %1640 = vmatprep.subr.mxu0 0.0
    %1641 = vmatpush1.msra.mxu0 0.0
    %1642 = vmatprep.subr.mxu0 0.0
    %1643 = vmatpush1.msra.mxu0 0.0
    %1644 = vmatprep.subr.mxu0 0.0
    %1645 = vmatpush1.msra.mxu0 0.0
    %1646 = vmatprep.subr.mxu0 0.0
    %1647 = vmatpush1.msra.mxu0 0.0
    %1648 = vmatprep.subr.mxu0 0.0
    %1649 = vmatpush1.msra.mxu0 0.0
    %1650 = vmatprep.subr.mxu0 0.0
    %1651 = vmatpush1.msra.mxu0 0.0
    %1652 = vmatprep.subr.mxu0 0.0
    %1653 = vmatpush1.msra.mxu0 0.0
    %1654 = vmatprep.subr.mxu0 0.0
    %1655 = vmatpush1.msra.mxu0 0.0
    %1656 = vmatprep.subr.mxu0 0.0
    %1657 = vmatpush1.msra.mxu0 0.0
    %1658 = vmatprep.subr.mxu0 0.0
    %1659 = vmatpush1.msra.mxu0 0.0
    %1660 = vmatprep.subr.mxu0 0.0
    %1661 = vmatpush1.msra.mxu0 0.0
    %1662 = vmatprep.subr.mxu0 0.0
    %1663 = vmatpush1.msra.mxu0 0.0
    %1664 = vmatprep.subr.mxu0 0.0
    %1665 = vmatpush1.msra.mxu0 0.0
    %1666 = vmatprep.subr.mxu0 0.0
    %1667 = vmatpush1.msra.mxu0 0.0
    %1668 = vmatprep.mubr.f32.mxu0 0.0
    %1669 = vmatmul.mubr.f32.gmra.mrb[0].mxu0 %v1376
    %v1670 = vpop.f32.mrb[0].mxu0
    %v1671 = vadd.f32 0.0, %v1670
    %v1672 = vpop.f32.mrb[0].mxu0
    %1673 = vdwg.mxu0
    %v1674 = vadd.f32 %v705, %v1671
    %v1675 = vxor.u32 %v1674, 2147483648
    %v1676 = vmul.f32 %v1675, 1.442695
    %v1677 = vpow.pop %v1676
    %v1678 = vadd.f32 %v1677, 1.0
    %v1679 = vrcp.pop %v1678
    %v1680 = vmul.f32 1.0, %v1679
    %v1681 = vmul.f32 %v1531, %v1372
    %v1682 = vmul.f32 %v1454, %v1603
    %v1683 = vadd.f32 %v1681, %v1682
    %v1684 = vtanh.pop %v1683
    %v1685 = vmul.f32 %v1680, %v1684
    %v1686 = vmul.f32 %v1063, 0.5
    %v1687 = vadd.f32 %v1685, %v1686
    %v1689 = vsel %vm752, %v1687, 0
    %1691 = vmatprep.subr.mxu0 0.0
    %1692 = vmatpush1.msra.mxu0 %v733
    %1693 = vmatprep.subr.mxu0 0.0
    %1694 = vmatpush1.msra.mxu0 %v734
    %1695 = vmatprep.subr.mxu0 0.0
    %1696 = vmatpush1.msra.mxu0 %v735
    %1697 = vmatprep.subr.mxu0 0.0
    %1698 = vmatpush1.msra.mxu0 %v736
    %1699 = vmatprep.subr.mxu0 0.0
    %1700 = vmatpush1.msra.mxu0 0.0
    %1701 = vmatprep.subr.mxu0 0.0
    %1702 = vmatpush1.msra.mxu0 0.0
    %1703 = vmatprep.subr.mxu0 0.0
    %1704 = vmatpush1.msra.mxu0 0.0
    %1705 = vmatprep.subr.mxu0 0.0
    %1706 = vmatpush1.msra.mxu0 0.0
    %1707 = vmatprep.subr.mxu0 0.0
    %1708 = vmatpush1.msra.mxu0 0.0
    %1709 = vmatprep.subr.mxu0 0.0
    %1710 = vmatpush1.msra.mxu0 0.0
    %1711 = vmatprep.subr.mxu0 0.0
    %1712 = vmatpush1.msra.mxu0 0.0
    %1713 = vmatprep.subr.mxu0 0.0
    %1714 = vmatpush1.msra.mxu0 0.0
    %1715 = vmatprep.subr.mxu0 0.0
    %1716 = vmatpush1.msra.mxu0 0.0
    %1717 = vmatprep.subr.mxu0 0.0
    %1718 = vmatpush1.msra.mxu0 0.0
    %1719 = vmatprep.subr.mxu0 0.0
    %1720 = vmatpush1.msra.mxu0 0.0
    %1721 = vmatprep.subr.mxu0 0.0
    %1722 = vmatpush1.msra.mxu0 0.0
    %1723 = vmatprep.subr.mxu0 0.0
    %1724 = vmatpush1.msra.mxu0 0.0
    %1725 = vmatprep.subr.mxu0 0.0
    %1726 = vmatpush1.msra.mxu0 0.0
    %1727 = vmatprep.subr.mxu0 0.0
    %1728 = vmatpush1.msra.mxu0 0.0
    %1729 = vmatprep.subr.mxu0 0.0
    %1730 = vmatpush1.msra.mxu0 0.0
    %1731 = vmatprep.subr.mxu0 0.0
    %1732 = vmatpush1.msra.mxu0 0.0
    %1733 = vmatprep.subr.mxu0 0.0
    %1734 = vmatpush1.msra.mxu0 0.0
    %1735 = vmatprep.subr.mxu0 0.0
    %1736 = vmatpush1.msra.mxu0 0.0
    %1737 = vmatprep.subr.mxu0 0.0
    %1738 = vmatpush1.msra.mxu0 0.0
    %1739 = vmatprep.subr.mxu0 0.0
    %1740 = vmatpush1.msra.mxu0 0.0
    %1741 = vmatprep.subr.mxu0 0.0
    %1742 = vmatpush1.msra.mxu0 0.0
    %1743 = vmatprep.subr.mxu0 0.0
    %1744 = vmatpush1.msra.mxu0 0.0
    %1745 = vmatprep.subr.mxu0 0.0
    %1746 = vmatpush1.msra.mxu0 0.0
    %1747 = vmatprep.subr.mxu0 0.0
    %1748 = vmatpush1.msra.mxu0 0.0
    %1749 = vmatprep.subr.mxu0 0.0
    %1750 = vmatpush1.msra.mxu0 0.0
    %1751 = vmatprep.subr.mxu0 0.0
    %1752 = vmatpush1.msra.mxu0 0.0
    %1753 = vmatprep.subr.mxu0 0.0
    %1754 = vmatpush1.msra.mxu0 0.0
    %1755 = vmatprep.mubr.f32.mxu0 0.0
    %1756 = vmatmul.mubr.f32.gmra.mrb[0].mxu0 %v1689
    %v1757 = vpop.f32.mrb[0].mxu0
    %v1758 = vadd.f32 0.0, %v1757
    %v1759 = vpop.f32.mrb[0].mxu0
    %1760 = vdwg.mxu0
    %v1761 = vadd.f32 %v356, %v1758
    %v1762 = vxor.u32 %v1761, 2147483648
    %v1763 = vmul.f32 %v1762, 1.442695
    %v1764 = vpow.pop %v1763
    %v1765 = vadd.f32 %v1764, 1.0
    %v1766 = vrcp.pop %v1765
    %v1767 = vmul.f32 1.0, %v1766
    %1768 = vmatprep.subr.mxu0 0.0
    %1769 = vmatpush1.msra.mxu0 %v738
    %1770 = vmatprep.subr.mxu0 0.0
    %1771 = vmatpush1.msra.mxu0 %v739
    %1772 = vmatprep.subr.mxu0 0.0
    %1773 = vmatpush1.msra.mxu0 %v740
    %1774 = vmatprep.subr.mxu0 0.0
    %1775 = vmatpush1.msra.mxu0 %v741
    %1776 = vmatprep.subr.mxu0 0.0
    %1777 = vmatpush1.msra.mxu0 0.0
    %1778 = vmatprep.subr.mxu0 0.0
    %1779 = vmatpush1.msra.mxu0 0.0
    %1780 = vmatprep.subr.mxu0 0.0
    %1781 = vmatpush1.msra.mxu0 0.0
    %1782 = vmatprep.subr.mxu0 0.0
    %1783 = vmatpush1.msra.mxu0 0.0
    %1784 = vmatprep.subr.mxu0 0.0
    %1785 = vmatpush1.msra.mxu0 0.0
    %1786 = vmatprep.subr.mxu0 0.0
    %1787 = vmatpush1.msra.mxu0 0.0
    %1788 = vmatprep.subr.mxu0 0.0
    %1789 = vmatpush1.msra.mxu0 0.0
    %1790 = vmatprep.subr.mxu0 0.0
    %1791 = vmatpush1.msra.mxu0 0.0
    %1792 = vmatprep.subr.mxu0 0.0
    %1793 = vmatpush1.msra.mxu0 0.0
    %1794 = vmatprep.subr.mxu0 0.0
    %1795 = vmatpush1.msra.mxu0 0.0
    %1796 = vmatprep.subr.mxu0 0.0
    %1797 = vmatpush1.msra.mxu0 0.0
    %1798 = vmatprep.subr.mxu0 0.0
    %1799 = vmatpush1.msra.mxu0 0.0
    %1800 = vmatprep.subr.mxu0 0.0
    %1801 = vmatpush1.msra.mxu0 0.0
    %1802 = vmatprep.subr.mxu0 0.0
    %1803 = vmatpush1.msra.mxu0 0.0
    %1804 = vmatprep.subr.mxu0 0.0
    %1805 = vmatpush1.msra.mxu0 0.0
    %1806 = vmatprep.subr.mxu0 0.0
    %1807 = vmatpush1.msra.mxu0 0.0
    %1808 = vmatprep.subr.mxu0 0.0
    %1809 = vmatpush1.msra.mxu0 0.0
    %1810 = vmatprep.subr.mxu0 0.0
    %1811 = vmatpush1.msra.mxu0 0.0
    %1812 = vmatprep.subr.mxu0 0.0
    %1813 = vmatpush1.msra.mxu0 0.0
    %1814 = vmatprep.subr.mxu0 0.0
    %1815 = vmatpush1.msra.mxu0 0.0
    %1816 = vmatprep.subr.mxu0 0.0
    %1817 = vmatpush1.msra.mxu0 0.0
    %1818 = vmatprep.subr.mxu0 0.0
    %1819 = vmatpush1.msra.mxu0 0.0
    %1820 = vmatprep.subr.mxu0 0.0
    %1821 = vmatpush1.msra.mxu0 0.0
    %1822 = vmatprep.subr.mxu0 0.0
    %1823 = vmatpush1.msra.mxu0 0.0
    %1824 = vmatprep.subr.mxu0 0.0
    %1825 = vmatpush1.msra.mxu0 0.0
    %1826 = vmatprep.subr.mxu0 0.0
    %1827 = vmatpush1.msra.mxu0 0.0
    %1828 = vmatprep.subr.mxu0 0.0
    %1829 = vmatpush1.msra.mxu0 0.0
    %1830 = vmatprep.subr.mxu0 0.0
    %1831 = vmatpush1.msra.mxu0 0.0
    %1832 = vmatprep.mubr.f32.mxu0 0.0
    %1833 = vmatmul.mubr.f32.gmra.mrb[0].mxu0 %v1689
    %v1834 = vpop.f32.mrb[0].mxu0
    %v1835 = vadd.f32 0.0, %v1834
    %v1836 = vpop.f32.mrb[0].mxu0
    %1837 = vdwg.mxu0
    %v1838 = vadd.f32 %v474, %v1835
    %v1839 = vxor.u32 %v1838, 2147483648
    %v1840 = vmul.f32 %v1839, 1.442695
    %v1841 = vpow.pop %v1840
    %v1842 = vadd.f32 %v1841, 1.0
    %v1843 = vrcp.pop %v1842
    %v1844 = vmul.f32 1.0, %v1843
    %1845 = vmatprep.subr.mxu0 0.0
    %1846 = vmatpush1.msra.mxu0 %v743
    %1847 = vmatprep.subr.mxu0 0.0
    %1848 = vmatpush1.msra.mxu0 %v744
    %1849 = vmatprep.subr.mxu0 0.0
    %1850 = vmatpush1.msra.mxu0 %v745
    %1851 = vmatprep.subr.mxu0 0.0
    %1852 = vmatpush1.msra.mxu0 %v746
    %1853 = vmatprep.subr.mxu0 0.0
    %1854 = vmatpush1.msra.mxu0 0.0
    %1855 = vmatprep.subr.mxu0 0.0
    %1856 = vmatpush1.msra.mxu0 0.0
    %1857 = vmatprep.subr.mxu0 0.0
    %1858 = vmatpush1.msra.mxu0 0.0
    %1859 = vmatprep.subr.mxu0 0.0
    %1860 = vmatpush1.msra.mxu0 0.0
    %1861 = vmatprep.subr.mxu0 0.0
    %1862 = vmatpush1.msra.mxu0 0.0
    %1863 = vmatprep.subr.mxu0 0.0
    %1864 = vmatpush1.msra.mxu0 0.0
    %1865 = vmatprep.subr.mxu0 0.0
    %1866 = vmatpush1.msra.mxu0 0.0
    %1867 = vmatprep.subr.mxu0 0.0
    %1868 = vmatpush1.msra.mxu0 0.0
    %1869 = vmatprep.subr.mxu0 0.0
    %1870 = vmatpush1.msra.mxu0 0.0
    %1871 = vmatprep.subr.mxu0 0.0
    %1872 = vmatpush1.msra.mxu0 0.0
    %1873 = vmatprep.subr.mxu0 0.0
    %1874 = vmatpush1.msra.mxu0 0.0
    %1875 = vmatprep.subr.mxu0 0.0
    %1876 = vmatpush1.msra.mxu0 0.0
    %1877 = vmatprep.subr.mxu0 0.0
    %1878 = vmatpush1.msra.mxu0 0.0
    %1879 = vmatprep.subr.mxu0 0.0
    %1880 = vmatpush1.msra.mxu0 0.0
    %1881 = vmatprep.subr.mxu0 0.0
    %1882 = vmatpush1.msra.mxu0 0.0
    %1883 = vmatprep.subr.mxu0 0.0
    %1884 = vmatpush1.msra.mxu0 0.0
    %1885 = vmatprep.subr.mxu0 0.0
    %1886 = vmatpush1.msra.mxu0 0.0
    %1887 = vmatprep.subr.mxu0 0.0
    %1888 = vmatpush1.msra.mxu0 0.0
    %1889 = vmatprep.subr.mxu0 0.0
    %1890 = vmatpush1.msra.mxu0 0.0
    %1891 = vmatprep.subr.mxu0 0.0
    %1892 = vmatpush1.msra.mxu0 0.0
    %1893 = vmatprep.subr.mxu0 0.0
    %1894 = vmatpush1.msra.mxu0 0.0
    %1895 = vmatprep.subr.mxu0 0.0
    %1896 = vmatpush1.msra.mxu0 0.0
    %1897 = vmatprep.subr.mxu0 0.0
    %1898 = vmatpush1.msra.mxu0 0.0
    %1899 = vmatprep.subr.mxu0 0.0
    %1900 = vmatpush1.msra.mxu0 0.0
    %1901 = vmatprep.subr.mxu0 0.0
    %1902 = vmatpush1.msra.mxu0 0.0
    %1903 = vmatprep.subr.mxu0 0.0
    %1904 = vmatpush1.msra.mxu0 0.0
    %1905 = vmatprep.subr.mxu0 0.0
    %1906 = vmatpush1.msra.mxu0 0.0
    %1907 = vmatprep.subr.mxu0 0.0
    %1908 = vmatpush1.msra.mxu0 0.0
    %1909 = vmatprep.mubr.f32.mxu0 0.0
    %1910 = vmatmul.mubr.f32.gmra.mrb[0].mxu0 %v1689
    %v1911 = vpop.f32.mrb[0].mxu0
    %v1912 = vadd.f32 0.0, %v1911
    %v1913 = vpop.f32.mrb[0].mxu0
    %1914 = vdwg.mxu0
    %v1915 = vadd.f32 %v592, %v1912
    %v1916 = vtanh.pop %v1915
    %1917 = vmatprep.subr.mxu0 0.0
    %1918 = vmatpush1.msra.mxu0 %v748
    %1919 = vmatprep.subr.mxu0 0.0
    %1920 = vmatpush1.msra.mxu0 %v749
    %1921 = vmatprep.subr.mxu0 0.0
    %1922 = vmatpush1.msra.mxu0 %v750
    %1923 = vmatprep.subr.mxu0 0.0
    %1924 = vmatpush1.msra.mxu0 %v751
    %1925 = vmatprep.subr.mxu0 0.0
    %1926 = vmatpush1.msra.mxu0 0.0
    %1927 = vmatprep.subr.mxu0 0.0
    %1928 = vmatpush1.msra.mxu0 0.0
    %1929 = vmatprep.subr.mxu0 0.0
    %1930 = vmatpush1.msra.mxu0 0.0
    %1931 = vmatprep.subr.mxu0 0.0
    %1932 = vmatpush1.msra.mxu0 0.0
    %1933 = vmatprep.subr.mxu0 0.0
    %1934 = vmatpush1.msra.mxu0 0.0
    %1935 = vmatprep.subr.mxu0 0.0
    %1936 = vmatpush1.msra.mxu0 0.0
    %1937 = vmatprep.subr.mxu0 0.0
    %1938 = vmatpush1.msra.mxu0 0.0
    %1939 = vmatprep.subr.mxu0 0.0
    %1940 = vmatpush1.msra.mxu0 0.0
    %1941 = vmatprep.subr.mxu0 0.0
    %1942 = vmatpush1.msra.mxu0 0.0
    %1943 = vmatprep.subr.mxu0 0.0
    %1944 = vmatpush1.msra.mxu0 0.0
    %1945 = vmatprep.subr.mxu0 0.0
    %1946 = vmatpush1.msra.mxu0 0.0
    %1947 = vmatprep.subr.mxu0 0.0
    %1948 = vmatpush1.msra.mxu0 0.0
    %1949 = vmatprep.subr.mxu0 0.0
    %1950 = vmatpush1.msra.mxu0 0.0
    %1951 = vmatprep.subr.mxu0 0.0
    %1952 = vmatpush1.msra.mxu0 0.0
    %1953 = vmatprep.subr.mxu0 0.0
    %1954 = vmatpush1.msra.mxu0 0.0
    %1955 = vmatprep.subr.mxu0 0.0
    %1956 = vmatpush1.msra.mxu0 0.0
    %1957 = vmatprep.subr.mxu0 0.0
    %1958 = vmatpush1.msra.mxu0 0.0
    %1959 = vmatprep.subr.mxu0 0.0
    %1960 = vmatpush1.msra.mxu0 0.0
    %1961 = vmatprep.subr.mxu0 0.0
    %1962 = vmatpush1.msra.mxu0 0.0
    %1963 = vmatprep.subr.mxu0 0.0
    %1964 = vmatpush1.msra.mxu0 0.0
    %1965 = vmatprep.subr.mxu0 0.0
    %1966 = vmatpush1.msra.mxu0 0.0
    %1967 = vmatprep.subr.mxu0 0.0
    %1968 = vmatpush1.msra.mxu0 0.0
    %1969 = vmatprep.subr.mxu0 0.0
    %1970 = vmatpush1.msra.mxu0 0.0
    %1971 = vmatprep.subr.mxu0 0.0
    %1972 = vmatpush1.msra.mxu0 0.0
    %1973 = vmatprep.subr.mxu0 0.0
    %1974 = vmatpush1.msra.mxu0 0.0
    %1975 = vmatprep.subr.mxu0 0.0
    %1976 = vmatpush1.msra.mxu0 0.0
    %1977 = vmatprep.subr.mxu0 0.0
    %1978 = vmatpush1.msra.mxu0 0.0
    %1979 = vmatprep.subr.mxu0 0.0
    %1980 = vmatpush1.msra.mxu0 0.0
    %1981 = vmatprep.mubr.f32.mxu0 0.0
    %1982 = vmatmul.mubr.f32.gmra.mrb[0].mxu0 %v1689
    %v1983 = vpop.f32.mrb[0].mxu0
    %v1984 = vadd.f32 0.0, %v1983
    %v1985 = vpop.f32.mrb[0].mxu0
    %1986 = vdwg.mxu0
    %v1987 = vadd.f32 %v710, %v1984
    %v1988 = vxor.u32 %v1987, 2147483648
    %v1989 = vmul.f32 %v1988, 1.442695
    %v1990 = vpow.pop %v1989
    %v1991 = vadd.f32 %v1990, 1.0
    %v1992 = vrcp.pop %v1991
    %v1993 = vmul.f32 1.0, %v1992
    %v1994 = vmul.f32 %v1844, %v1683
    %v1995 = vmul.f32 %v1767, %v1916
    %v1996 = vadd.f32 %v1994, %v1995
    %v1997 = vtanh.pop %v1996
    %v1998 = vmul.f32 %v1993, %v1997
    %v1999 = vmul.f32 %v1374, 0.5
    %v2000 = vadd.f32 %v1998, %v1999
    %v2002 = vsel %vm752, %v2000, 0
    %2004 = vmatprep.subr.mxu0 0.0
    %2005 = vmatpush1.msra.mxu0 %v733
    %2006 = vmatprep.subr.mxu0 0.0
    %2007 = vmatpush1.msra.mxu0 %v734
    %2008 = vmatprep.subr.mxu0 0.0
    %2009 = vmatpush1.msra.mxu0 %v735
    %2010 = vmatprep.subr.mxu0 0.0
    %2011 = vmatpush1.msra.mxu0 %v736
    %2012 = vmatprep.subr.mxu0 0.0
    %2013 = vmatpush1.msra.mxu0 0.0
    %2014 = vmatprep.subr.mxu0 0.0
    %2015 = vmatpush1.msra.mxu0 0.0
    %2016 = vmatprep.subr.mxu0 0.0
    %2017 = vmatpush1.msra.mxu0 0.0
    %2018 = vmatprep.subr.mxu0 0.0
    %2019 = vmatpush1.msra.mxu0 0.0
    %2020 = vmatprep.subr.mxu0 0.0
    %2021 = vmatpush1.msra.mxu0 0.0
    %2022 = vmatprep.subr.mxu0 0.0
    %2023 = vmatpush1.msra.mxu0 0.0
    %2024 = vmatprep.subr.mxu0 0.0
    %2025 = vmatpush1.msra.mxu0 0.0
    %2026 = vmatprep.subr.mxu0 0.0
    %2027 = vmatpush1.msra.mxu0 0.0
    %2028 = vmatprep.subr.mxu0 0.0
    %2029 = vmatpush1.msra.mxu0 0.0
    %2030 = vmatprep.subr.mxu0 0.0
    %2031 = vmatpush1.msra.mxu0 0.0
    %2032 = vmatprep.subr.mxu0 0.0
    %2033 = vmatpush1.msra.mxu0 0.0
    %2034 = vmatprep.subr.mxu0 0.0
    %2035 = vmatpush1.msra.mxu0 0.0
    %2036 = vmatprep.subr.mxu0 0.0
    %2037 = vmatpush1.msra.mxu0 0.0
    %2038 = vmatprep.subr.mxu0 0.0
    %2039 = vmatpush1.msra.mxu0 0.0
    %2040 = vmatprep.subr.mxu0 0.0
    %2041 = vmatpush1.msra.mxu0 0.0
    %2042 = vmatprep.subr.mxu0 0.0
    %2043 = vmatpush1.msra.mxu0 0.0
    %2044 = vmatprep.subr.mxu0 0.0
    %2045 = vmatpush1.msra.mxu0 0.0
    %2046 = vmatprep.subr.mxu0 0.0
    %2047 = vmatpush1.msra.mxu0 0.0
    %2048 = vmatprep.subr.mxu0 0.0
    %2049 = vmatpush1.msra.mxu0 0.0
    %2050 = vmatprep.subr.mxu0 0.0
    %2051 = vmatpush1.msra.mxu0 0.0
    %2052 = vmatprep.subr.mxu0 0.0
    %2053 = vmatpush1.msra.mxu0 0.0
    %2054 = vmatprep.subr.mxu0 0.0
    %2055 = vmatpush1.msra.mxu0 0.0
    %2056 = vmatprep.subr.mxu0 0.0
    %2057 = vmatpush1.msra.mxu0 0.0
    %2058 = vmatprep.subr.mxu0 0.0
    %2059 = vmatpush1.msra.mxu0 0.0
    %2060 = vmatprep.subr.mxu0 0.0
    %2061 = vmatpush1.msra.mxu0 0.0
    %2062 = vmatprep.subr.mxu0 0.0
    %2063 = vmatpush1.msra.mxu0 0.0
    %2064 = vmatprep.subr.mxu0 0.0
    %2065 = vmatpush1.msra.mxu0 0.0
    %2066 = vmatprep.subr.mxu0 0.0
    %2067 = vmatpush1.msra.mxu0 0.0
    %2068 = vmatprep.mubr.f32.mxu0 0.0
    %2069 = vmatmul.mubr.f32.gmra.mrb[0].mxu0 %v2002
    %v2070 = vpop.f32.mrb[0].mxu0
    %v2071 = vadd.f32 0.0, %v2070
    %v2072 = vpop.f32.mrb[0].mxu0
    %2073 = vdwg.mxu0
    %v2074 = vadd.f32 %v361, %v2071
    %v2075 = vxor.u32 %v2074, 2147483648
    %v2076 = vmul.f32 %v2075, 1.442695
    %v2077 = vpow.pop %v2076
    %v2078 = vadd.f32 %v2077, 1.0
    %v2079 = vrcp.pop %v2078
    %v2080 = vmul.f32 1.0, %v2079
    %2081 = vmatprep.subr.mxu0 0.0
    %2082 = vmatpush1.msra.mxu0 %v738
    %2083 = vmatprep.subr.mxu0 0.0
    %2084 = vmatpush1.msra.mxu0 %v739
    %2085 = vmatprep.subr.mxu0 0.0
    %2086 = vmatpush1.msra.mxu0 %v740
    %2087 = vmatprep.subr.mxu0 0.0
    %2088 = vmatpush1.msra.mxu0 %v741
    %2089 = vmatprep.subr.mxu0 0.0
    %2090 = vmatpush1.msra.mxu0 0.0
    %2091 = vmatprep.subr.mxu0 0.0
    %2092 = vmatpush1.msra.mxu0 0.0
    %2093 = vmatprep.subr.mxu0 0.0
    %2094 = vmatpush1.msra.mxu0 0.0
    %2095 = vmatprep.subr.mxu0 0.0
    %2096 = vmatpush1.msra.mxu0 0.0
    %2097 = vmatprep.subr.mxu0 0.0
    %2098 = vmatpush1.msra.mxu0 0.0
    %2099 = vmatprep.subr.mxu0 0.0
    %2100 = vmatpush1.msra.mxu0 0.0
    %2101 = vmatprep.subr.mxu0 0.0
    %2102 = vmatpush1.msra.mxu0 0.0
    %2103 = vmatprep.subr.mxu0 0.0
    %2104 = vmatpush1.msra.mxu0 0.0
    %2105 = vmatprep.subr.mxu0 0.0
    %2106 = vmatpush1.msra.mxu0 0.0
    %2107 = vmatprep.subr.mxu0 0.0
    %2108 = vmatpush1.msra.mxu0 0.0
    %2109 = vmatprep.subr.mxu0 0.0
    %2110 = vmatpush1.msra.mxu0 0.0
    %2111 = vmatprep.subr.mxu0 0.0
    %2112 = vmatpush1.msra.mxu0 0.0
    %2113 = vmatprep.subr.mxu0 0.0
    %2114 = vmatpush1.msra.mxu0 0.0
    %2115 = vmatprep.subr.mxu0 0.0
    %2116 = vmatpush1.msra.mxu0 0.0
    %2117 = vmatprep.subr.mxu0 0.0
    %2118 = vmatpush1.msra.mxu0 0.0
    %2119 = vmatprep.subr.mxu0 0.0
    %2120 = vmatpush1.msra.mxu0 0.0
    %2121 = vmatprep.subr.mxu0 0.0
    %2122 = vmatpush1.msra.mxu0 0.0
    %2123 = vmatprep.subr.mxu0 0.0
    %2124 = vmatpush1.msra.mxu0 0.0
    %2125 = vmatprep.subr.mxu0 0.0
    %2126 = vmatpush1.msra.mxu0 0.0
    %2127 = vmatprep.subr.mxu0 0.0
    %2128 = vmatpush1.msra.mxu0 0.0
    %2129 = vmatprep.subr.mxu0 0.0
    %2130 = vmatpush1.msra.mxu0 0.0
    %2131 = vmatprep.subr.mxu0 0.0
    %2132 = vmatpush1.msra.mxu0 0.0
    %2133 = vmatprep.subr.mxu0 0.0
    %2134 = vmatpush1.msra.mxu0 0.0
    %2135 = vmatprep.subr.mxu0 0.0
    %2136 = vmatpush1.msra.mxu0 0.0
    %2137 = vmatprep.subr.mxu0 0.0
    %2138 = vmatpush1.msra.mxu0 0.0
    %2139 = vmatprep.subr.mxu0 0.0
    %2140 = vmatpush1.msra.mxu0 0.0
    %2141 = vmatprep.subr.mxu0 0.0
    %2142 = vmatpush1.msra.mxu0 0.0
    %2143 = vmatprep.subr.mxu0 0.0
    %2144 = vmatpush1.msra.mxu0 0.0
    %2145 = vmatprep.mubr.f32.mxu0 0.0
    %2146 = vmatmul.mubr.f32.gmra.mrb[0].mxu0 %v2002
    %v2147 = vpop.f32.mrb[0].mxu0
    %v2148 = vadd.f32 0.0, %v2147
    %v2149 = vpop.f32.mrb[0].mxu0
    %2150 = vdwg.mxu0
    %v2151 = vadd.f32 %v479, %v2148
    %v2152 = vxor.u32 %v2151, 2147483648
    %v2153 = vmul.f32 %v2152, 1.442695
    %v2154 = vpow.pop %v2153
    %v2155 = vadd.f32 %v2154, 1.0
    %v2156 = vrcp.pop %v2155
    %v2157 = vmul.f32 1.0, %v2156
    %2158 = vmatprep.subr.mxu0 0.0
    %2159 = vmatpush1.msra.mxu0 %v743
    %2160 = vmatprep.subr.mxu0 0.0
    %2161 = vmatpush1.msra.mxu0 %v744
    %2162 = vmatprep.subr.mxu0 0.0
    %2163 = vmatpush1.msra.mxu0 %v745
    %2164 = vmatprep.subr.mxu0 0.0
    %2165 = vmatpush1.msra.mxu0 %v746
    %2166 = vmatprep.subr.mxu0 0.0
    %2167 = vmatpush1.msra.mxu0 0.0
    %2168 = vmatprep.subr.mxu0 0.0
    %2169 = vmatpush1.msra.mxu0 0.0
    %2170 = vmatprep.subr.mxu0 0.0
    %2171 = vmatpush1.msra.mxu0 0.0
    %2172 = vmatprep.subr.mxu0 0.0
    %2173 = vmatpush1.msra.mxu0 0.0
    %2174 = vmatprep.subr.mxu0 0.0
    %2175 = vmatpush1.msra.mxu0 0.0
    %2176 = vmatprep.subr.mxu0 0.0
    %2177 = vmatpush1.msra.mxu0 0.0
    %2178 = vmatprep.subr.mxu0 0.0
    %2179 = vmatpush1.msra.mxu0 0.0
    %2180 = vmatprep.subr.mxu0 0.0
    %2181 = vmatpush1.msra.mxu0 0.0
    %2182 = vmatprep.subr.mxu0 0.0
    %2183 = vmatpush1.msra.mxu0 0.0
    %2184 = vmatprep.subr.mxu0 0.0
    %2185 = vmatpush1.msra.mxu0 0.0
    %2186 = vmatprep.subr.mxu0 0.0
    %2187 = vmatpush1.msra.mxu0 0.0
    %2188 = vmatprep.subr.mxu0 0.0
    %2189 = vmatpush1.msra.mxu0 0.0
    %2190 = vmatprep.subr.mxu0 0.0
    %2191 = vmatpush1.msra.mxu0 0.0
    %2192 = vmatprep.subr.mxu0 0.0
    %2193 = vmatpush1.msra.mxu0 0.0
    %2194 = vmatprep.subr.mxu0 0.0
    %2195 = vmatpush1.msra.mxu0 0.0
    %2196 = vmatprep.subr.mxu0 0.0
    %2197 = vmatpush1.msra.mxu0 0.0
    %2198 = vmatprep.subr.mxu0 0.0
    %2199 = vmatpush1.msra.mxu0 0.0
    %2200 = vmatprep.subr.mxu0 0.0
    %2201 = vmatpush1.msra.mxu0 0.0
    %2202 = vmatprep.subr.mxu0 0.0
    %2203 = vmatpush1.msra.mxu0 0.0
    %2204 = vmatprep.subr.mxu0 0.0
    %2205 = vmatpush1.msra.mxu0 0.0
    %2206 = vmatprep.subr.mxu0 0.0
    %2207 = vmatpush1.msra.mxu0 0.0
    %2208 = vmatprep.subr.mxu0 0.0
    %2209 = vmatpush1.msra.mxu0 0.0
    %2210 = vmatprep.subr.mxu0 0.0
    %2211 = vmatpush1.msra.mxu0 0.0
    %2212 = vmatprep.subr.mxu0 0.0
    %2213 = vmatpush1.msra.mxu0 0.0
    %2214 = vmatprep.subr.mxu0 0.0
    %2215 = vmatpush1.msra.mxu0 0.0
    %2216 = vmatprep.subr.mxu0 0.0
    %2217 = vmatpush1.msra.mxu0 0.0
    %2218 = vmatprep.subr.mxu0 0.0
    %2219 = vmatpush1.msra.mxu0 0.0
    %2220 = vmatprep.subr.mxu0 0.0
    %2221 = vmatpush1.msra.mxu0 0.0
    %2222 = vmatprep.mubr.f32.mxu0 0.0
    %2223 = vmatmul.mubr.f32.gmra.mrb[0].mxu0 %v2002
    %v2224 = vpop.f32.mrb[0].mxu0
    %v2225 = vadd.f32 0.0, %v2224
    %v2226 = vpop.f32.mrb[0].mxu0
    %2227 = vdwg.mxu0
    %v2228 = vadd.f32 %v597, %v2225
    %v2229 = vtanh.pop %v2228
    %2230 = vmatprep.subr.mxu0 0.0
    %2231 = vmatpush1.msra.mxu0 %v748
    %2232 = vmatprep.subr.mxu0 0.0
    %2233 = vmatpush1.msra.mxu0 %v749
    %2234 = vmatprep.subr.mxu0 0.0
    %2235 = vmatpush1.msra.mxu0 %v750
    %2236 = vmatprep.subr.mxu0 0.0
    %2237 = vmatpush1.msra.mxu0 %v751
    %2238 = vmatprep.subr.mxu0 0.0
    %2239 = vmatpush1.msra.mxu0 0.0
    %2240 = vmatprep.subr.mxu0 0.0
    %2241 = vmatpush1.msra.mxu0 0.0
    %2242 = vmatprep.subr.mxu0 0.0
    %2243 = vmatpush1.msra.mxu0 0.0
    %2244 = vmatprep.subr.mxu0 0.0
    %2245 = vmatpush1.msra.mxu0 0.0
    %2246 = vmatprep.subr.mxu0 0.0
    %2247 = vmatpush1.msra.mxu0 0.0
    %2248 = vmatprep.subr.mxu0 0.0
    %2249 = vmatpush1.msra.mxu0 0.0
    %2250 = vmatprep.subr.mxu0 0.0
    %2251 = vmatpush1.msra.mxu0 0.0
    %2252 = vmatprep.subr.mxu0 0.0
    %2253 = vmatpush1.msra.mxu0 0.0
    %2254 = vmatprep.subr.mxu0 0.0
    %2255 = vmatpush1.msra.mxu0 0.0
    %2256 = vmatprep.subr.mxu0 0.0
    %2257 = vmatpush1.msra.mxu0 0.0
    %2258 = vmatprep.subr.mxu0 0.0
    %2259 = vmatpush1.msra.mxu0 0.0
    %2260 = vmatprep.subr.mxu0 0.0
    %2261 = vmatpush1.msra.mxu0 0.0
    %2262 = vmatprep.subr.mxu0 0.0
    %2263 = vmatpush1.msra.mxu0 0.0
    %2264 = vmatprep.subr.mxu0 0.0
    %2265 = vmatpush1.msra.mxu0 0.0
    %2266 = vmatprep.subr.mxu0 0.0
    %2267 = vmatpush1.msra.mxu0 0.0
    %2268 = vmatprep.subr.mxu0 0.0
    %2269 = vmatpush1.msra.mxu0 0.0
    %2270 = vmatprep.subr.mxu0 0.0
    %2271 = vmatpush1.msra.mxu0 0.0
    %2272 = vmatprep.subr.mxu0 0.0
    %2273 = vmatpush1.msra.mxu0 0.0
    %2274 = vmatprep.subr.mxu0 0.0
    %2275 = vmatpush1.msra.mxu0 0.0
    %2276 = vmatprep.subr.mxu0 0.0
    %2277 = vmatpush1.msra.mxu0 0.0
    %2278 = vmatprep.subr.mxu0 0.0
    %2279 = vmatpush1.msra.mxu0 0.0
    %2280 = vmatprep.subr.mxu0 0.0
    %2281 = vmatpush1.msra.mxu0 0.0
    %2282 = vmatprep.subr.mxu0 0.0
    %2283 = vmatpush1.msra.mxu0 0.0
    %2284 = vmatprep.subr.mxu0 0.0
    %2285 = vmatpush1.msra.mxu0 0.0
    %2286 = vmatprep.subr.mxu0 0.0
    %2287 = vmatpush1.msra.mxu0 0.0
    %2288 = vmatprep.subr.mxu0 0.0
    %2289 = vmatpush1.msra.mxu0 0.0
    %2290 = vmatprep.subr.mxu0 0.0
    %2291 = vmatpush1.msra.mxu0 0.0
    %2292 = vmatprep.subr.mxu0 0.0
    %2293 = vmatpush1.msra.mxu0 0.0
    %2294 = vmatprep.mubr.f32.mxu0 0.0
    %2295 = vmatmul.mubr.f32.gmra.mrb[0].mxu0 %v2002
    %v2296 = vpop.f32.mrb[0].mxu0
    %v2297 = vadd.f32 0.0, %v2296
    %v2298 = vpop.f32.mrb[0].mxu0
    %2299 = vdwg.mxu0
    %v2300 = vadd.f32 %v715, %v2297
    %v2301 = vxor.u32 %v2300, 2147483648
    %v2302 = vmul.f32 %v2301, 1.442695
    %v2303 = vpow.pop %v2302
    %v2304 = vadd.f32 %v2303, 1.0
    %v2305 = vrcp.pop %v2304
    %v2306 = vmul.f32 1.0, %v2305
    %v2307 = vmul.f32 %v2157, %v1996
    %v2308 = vmul.f32 %v2080, %v2229
    %v2309 = vadd.f32 %v2307, %v2308
    %v2310 = vtanh.pop %v2309
    %v2311 = vmul.f32 %v2306, %v2310
    %v2312 = vmul.f32 %v1687, 0.5
    %v2313 = vadd.f32 %v2311, %v2312
    %v2315 = vsel %vm752, %v2313, 0
    %2317 = vmatprep.subr.mxu0 0.0
    %2318 = vmatpush1.msra.mxu0 %v733
    %2319 = vmatprep.subr.mxu0 0.0
    %2320 = vmatpush1.msra.mxu0 %v734
    %2321 = vmatprep.subr.mxu0 0.0
    %2322 = vmatpush1.msra.mxu0 %v735
    %2323 = vmatprep.subr.mxu0 0.0
    %2324 = vmatpush1.msra.mxu0 %v736
    %2325 = vmatprep.subr.mxu0 0.0
    %2326 = vmatpush1.msra.mxu0 0.0
    %2327 = vmatprep.subr.mxu0 0.0
    %2328 = vmatpush1.msra.mxu0 0.0
    %2329 = vmatprep.subr.mxu0 0.0
    %2330 = vmatpush1.msra.mxu0 0.0
    %2331 = vmatprep.subr.mxu0 0.0
    %2332 = vmatpush1.msra.mxu0 0.0
    %2333 = vmatprep.subr.mxu0 0.0
    %2334 = vmatpush1.msra.mxu0 0.0
    %2335 = vmatprep.subr.mxu0 0.0
    %2336 = vmatpush1.msra.mxu0 0.0
    %2337 = vmatprep.subr.mxu0 0.0
    %2338 = vmatpush1.msra.mxu0 0.0
    %2339 = vmatprep.subr.mxu0 0.0
    %2340 = vmatpush1.msra.mxu0 0.0
    %2341 = vmatprep.subr.mxu0 0.0
    %2342 = vmatpush1.msra.mxu0 0.0
    %2343 = vmatprep.subr.mxu0 0.0
    %2344 = vmatpush1.msra.mxu0 0.0
    %2345 = vmatprep.subr.mxu0 0.0
    %2346 = vmatpush1.msra.mxu0 0.0
    %2347 = vmatprep.subr.mxu0 0.0
    %2348 = vmatpush1.msra.mxu0 0.0
    %2349 = vmatprep.subr.mxu0 0.0
    %2350 = vmatpush1.msra.mxu0 0.0
    %2351 = vmatprep.subr.mxu0 0.0
    %2352 = vmatpush1.msra.mxu0 0.0
    %2353 = vmatprep.subr.mxu0 0.0
    %2354 = vmatpush1.msra.mxu0 0.0
    %2355 = vmatprep.subr.mxu0 0.0
    %2356 = vmatpush1.msra.mxu0 0.0
    %2357 = vmatprep.subr.mxu0 0.0
    %2358 = vmatpush1.msra.mxu0 0.0
    %2359 = vmatprep.subr.mxu0 0.0
    %2360 = vmatpush1.msra.mxu0 0.0
    %2361 = vmatprep.subr.mxu0 0.0
    %2362 = vmatpush1.msra.mxu0 0.0
    %2363 = vmatprep.subr.mxu0 0.0
    %2364 = vmatpush1.msra.mxu0 0.0
    %2365 = vmatprep.subr.mxu0 0.0
    %2366 = vmatpush1.msra.mxu0 0.0
    %2367 = vmatprep.subr.mxu0 0.0
    %2368 = vmatpush1.msra.mxu0 0.0
    %2369 = vmatprep.subr.mxu0 0.0
    %2370 = vmatpush1.msra.mxu0 0.0
    %2371 = vmatprep.subr.mxu0 0.0
    %2372 = vmatpush1.msra.mxu0 0.0
    %2373 = vmatprep.subr.mxu0 0.0
    %2374 = vmatpush1.msra.mxu0 0.0
    %2375 = vmatprep.subr.mxu0 0.0
    %2376 = vmatpush1.msra.mxu0 0.0
    %2377 = vmatprep.subr.mxu0 0.0
    %2378 = vmatpush1.msra.mxu0 0.0
    %2379 = vmatprep.subr.mxu0 0.0
    %2380 = vmatpush1.msra.mxu0 0.0
    %2381 = vmatprep.mubr.f32.mxu0 0.0
    %2382 = vmatmul.mubr.f32.gmra.mrb[0].mxu0 %v2315
    %v2383 = vpop.f32.mrb[0].mxu0
    %v2384 = vadd.f32 0.0, %v2383
    %v2385 = vpop.f32.mrb[0].mxu0
    %2386 = vdwg.mxu0
    %v2387 = vadd.f32 %v366, %v2384
    %v2388 = vxor.u32 %v2387, 2147483648
    %v2389 = vmul.f32 %v2388, 1.442695
    %v2390 = vpow.pop %v2389
    %v2391 = vadd.f32 %v2390, 1.0
    %v2392 = vrcp.pop %v2391
    %v2393 = vmul.f32 1.0, %v2392
    %2394 = vmatprep.subr.mxu0 0.0
    %2395 = vmatpush1.msra.mxu0 %v738
    %2396 = vmatprep.subr.mxu0 0.0
    %2397 = vmatpush1.msra.mxu0 %v739
    %2398 = vmatprep.subr.mxu0 0.0
    %2399 = vmatpush1.msra.mxu0 %v740
    %2400 = vmatprep.subr.mxu0 0.0
    %2401 = vmatpush1.msra.mxu0 %v741
    %2402 = vmatprep.subr.mxu0 0.0
    %2403 = vmatpush1.msra.mxu0 0.0
    %2404 = vmatprep.subr.mxu0 0.0
    %2405 = vmatpush1.msra.mxu0 0.0
    %2406 = vmatprep.subr.mxu0 0.0
    %2407 = vmatpush1.msra.mxu0 0.0
    %2408 = vmatprep.subr.mxu0 0.0
    %2409 = vmatpush1.msra.mxu0 0.0
    %2410 = vmatprep.subr.mxu0 0.0
    %2411 = vmatpush1.msra.mxu0 0.0
    %2412 = vmatprep.subr.mxu0 0.0
    %2413 = vmatpush1.msra.mxu0 0.0
    %2414 = vmatprep.subr.mxu0 0.0
    %2415 = vmatpush1.msra.mxu0 0.0
    %2416 = vmatprep.subr.mxu0 0.0
    %2417 = vmatpush1.msra.mxu0 0.0
    %2418 = vmatprep.subr.mxu0 0.0
    %2419 = vmatpush1.msra.mxu0 0.0
    %2420 = vmatprep.subr.mxu0 0.0
    %2421 = vmatpush1.msra.mxu0 0.0
    %2422 = vmatprep.subr.mxu0 0.0
    %2423 = vmatpush1.msra.mxu0 0.0
    %2424 = vmatprep.subr.mxu0 0.0
    %2425 = vmatpush1.msra.mxu0 0.0
    %2426 = vmatprep.subr.mxu0 0.0
    %2427 = vmatpush1.msra.mxu0 0.0
    %2428 = vmatprep.subr.mxu0 0.0
    %2429 = vmatpush1.msra.mxu0 0.0
    %2430 = vmatprep.subr.mxu0 0.0
    %2431 = vmatpush1.msra.mxu0 0.0
    %2432 = vmatprep.subr.mxu0 0.0
    %2433 = vmatpush1.msra.mxu0 0.0
    %2434 = vmatprep.subr.mxu0 0.0
    %2435 = vmatpush1.msra.mxu0 0.0
    %2436 = vmatprep.subr.mxu0 0.0
    %2437 = vmatpush1.msra.mxu0 0.0
    %2438 = vmatprep.subr.mxu0 0.0
    %2439 = vmatpush1.msra.mxu0 0.0
    %2440 = vmatprep.subr.mxu0 0.0
    %2441 = vmatpush1.msra.mxu0 0.0
    %2442 = vmatprep.subr.mxu0 0.0
    %2443 = vmatpush1.msra.mxu0 0.0
    %2444 = vmatprep.subr.mxu0 0.0
    %2445 = vmatpush1.msra.mxu0 0.0
    %2446 = vmatprep.subr.mxu0 0.0
    %2447 = vmatpush1.msra.mxu0 0.0
    %2448 = vmatprep.subr.mxu0 0.0
    %2449 = vmatpush1.msra.mxu0 0.0
    %2450 = vmatprep.subr.mxu0 0.0
    %2451 = vmatpush1.msra.mxu0 0.0
    %2452 = vmatprep.subr.mxu0 0.0
    %2453 = vmatpush1.msra.mxu0 0.0
    %2454 = vmatprep.subr.mxu0 0.0
    %2455 = vmatpush1.msra.mxu0 0.0
    %2456 = vmatprep.subr.mxu0 0.0
    %2457 = vmatpush1.msra.mxu0 0.0
    %2458 = vmatprep.mubr.f32.mxu0 0.0
    %2459 = vmatmul.mubr.f32.gmra.mrb[0].mxu0 %v2315
    %v2460 = vpop.f32.mrb[0].mxu0
    %v2461 = vadd.f32 0.0, %v2460
    %v2462 = vpop.f32.mrb[0].mxu0
    %2463 = vdwg.mxu0
    %v2464 = vadd.f32 %v484, %v2461
    %v2465 = vxor.u32 %v2464, 2147483648
    %v2466 = vmul.f32 %v2465, 1.442695
    %v2467 = vpow.pop %v2466
    %v2468 = vadd.f32 %v2467, 1.0
    %v2469 = vrcp.pop %v2468
    %v2470 = vmul.f32 1.0, %v2469
    %2471 = vmatprep.subr.mxu0 0.0
    %2472 = vmatpush1.msra.mxu0 %v743
    %2473 = vmatprep.subr.mxu0 0.0
    %2474 = vmatpush1.msra.mxu0 %v744
    %2475 = vmatprep.subr.mxu0 0.0
    %2476 = vmatpush1.msra.mxu0 %v745
    %2477 = vmatprep.subr.mxu0 0.0
    %2478 = vmatpush1.msra.mxu0 %v746
    %2479 = vmatprep.subr.mxu0 0.0
    %2480 = vmatpush1.msra.mxu0 0.0
    %2481 = vmatprep.subr.mxu0 0.0
    %2482 = vmatpush1.msra.mxu0 0.0
    %2483 = vmatprep.subr.mxu0 0.0
    %2484 = vmatpush1.msra.mxu0 0.0
    %2485 = vmatprep.subr.mxu0 0.0
    %2486 = vmatpush1.msra.mxu0 0.0
    %2487 = vmatprep.subr.mxu0 0.0
    %2488 = vmatpush1.msra.mxu0 0.0
    %2489 = vmatprep.subr.mxu0 0.0
    %2490 = vmatpush1.msra.mxu0 0.0
    %2491 = vmatprep.subr.mxu0 0.0
    %2492 = vmatpush1.msra.mxu0 0.0
    %2493 = vmatprep.subr.mxu0 0.0
    %2494 = vmatpush1.msra.mxu0 0.0
    %2495 = vmatprep.subr.mxu0 0.0
    %2496 = vmatpush1.msra.mxu0 0.0
    %2497 = vmatprep.subr.mxu0 0.0
    %2498 = vmatpush1.msra.mxu0 0.0
    %2499 = vmatprep.subr.mxu0 0.0
    %2500 = vmatpush1.msra.mxu0 0.0
    %2501 = vmatprep.subr.mxu0 0.0
    %2502 = vmatpush1.msra.mxu0 0.0
    %2503 = vmatprep.subr.mxu0 0.0
    %2504 = vmatpush1.msra.mxu0 0.0
    %2505 = vmatprep.subr.mxu0 0.0
    %2506 = vmatpush1.msra.mxu0 0.0
    %2507 = vmatprep.subr.mxu0 0.0
    %2508 = vmatpush1.msra.mxu0 0.0
    %2509 = vmatprep.subr.mxu0 0.0
    %2510 = vmatpush1.msra.mxu0 0.0
    %2511 = vmatprep.subr.mxu0 0.0
    %2512 = vmatpush1.msra.mxu0 0.0
    %2513 = vmatprep.subr.mxu0 0.0
    %2514 = vmatpush1.msra.mxu0 0.0
    %2515 = vmatprep.subr.mxu0 0.0
    %2516 = vmatpush1.msra.mxu0 0.0
    %2517 = vmatprep.subr.mxu0 0.0
    %2518 = vmatpush1.msra.mxu0 0.0
    %2519 = vmatprep.subr.mxu0 0.0
    %2520 = vmatpush1.msra.mxu0 0.0
    %2521 = vmatprep.subr.mxu0 0.0
    %2522 = vmatpush1.msra.mxu0 0.0
    %2523 = vmatprep.subr.mxu0 0.0
    %2524 = vmatpush1.msra.mxu0 0.0
    %2525 = vmatprep.subr.mxu0 0.0
    %2526 = vmatpush1.msra.mxu0 0.0
    %2527 = vmatprep.subr.mxu0 0.0
    %2528 = vmatpush1.msra.mxu0 0.0
    %2529 = vmatprep.subr.mxu0 0.0
    %2530 = vmatpush1.msra.mxu0 0.0
    %2531 = vmatprep.subr.mxu0 0.0
    %2532 = vmatpush1.msra.mxu0 0.0
    %2533 = vmatprep.subr.mxu0 0.0
    %2534 = vmatpush1.msra.mxu0 0.0
    %2535 = vmatprep.mubr.f32.mxu0 0.0
    %2536 = vmatmul.mubr.f32.gmra.mrb[0].mxu0 %v2315
    %v2537 = vpop.f32.mrb[0].mxu0
    %v2538 = vadd.f32 0.0, %v2537
    %v2539 = vpop.f32.mrb[0].mxu0
    %2540 = vdwg.mxu0
    %v2541 = vadd.f32 %v602, %v2538
    %v2542 = vtanh.pop %v2541
    %2543 = vmatprep.subr.mxu0 0.0
    %2544 = vmatpush1.msra.mxu0 %v748
    %2545 = vmatprep.subr.mxu0 0.0
    %2546 = vmatpush1.msra.mxu0 %v749
    %2547 = vmatprep.subr.mxu0 0.0
    %2548 = vmatpush1.msra.mxu0 %v750
    %2549 = vmatprep.subr.mxu0 0.0
    %2550 = vmatpush1.msra.mxu0 %v751
    %2551 = vmatprep.subr.mxu0 0.0
    %2552 = vmatpush1.msra.mxu0 0.0
    %2553 = vmatprep.subr.mxu0 0.0
    %2554 = vmatpush1.msra.mxu0 0.0
    %2555 = vmatprep.subr.mxu0 0.0
    %2556 = vmatpush1.msra.mxu0 0.0
    %2557 = vmatprep.subr.mxu0 0.0
    %2558 = vmatpush1.msra.mxu0 0.0
    %2559 = vmatprep.subr.mxu0 0.0
    %2560 = vmatpush1.msra.mxu0 0.0
    %2561 = vmatprep.subr.mxu0 0.0
    %2562 = vmatpush1.msra.mxu0 0.0
    %2563 = vmatprep.subr.mxu0 0.0
    %2564 = vmatpush1.msra.mxu0 0.0
    %2565 = vmatprep.subr.mxu0 0.0
    %2566 = vmatpush1.msra.mxu0 0.0
    %2567 = vmatprep.subr.mxu0 0.0
    %2568 = vmatpush1.msra.mxu0 0.0
    %2569 = vmatprep.subr.mxu0 0.0
    %2570 = vmatpush1.msra.mxu0 0.0
    %2571 = vmatprep.subr.mxu0 0.0
    %2572 = vmatpush1.msra.mxu0 0.0
    %2573 = vmatprep.subr.mxu0 0.0
    %2574 = vmatpush1.msra.mxu0 0.0
    %2575 = vmatprep.subr.mxu0 0.0
    %2576 = vmatpush1.msra.mxu0 0.0
    %2577 = vmatprep.subr.mxu0 0.0
    %2578 = vmatpush1.msra.mxu0 0.0
    %2579 = vmatprep.subr.mxu0 0.0
    %2580 = vmatpush1.msra.mxu0 0.0
    %2581 = vmatprep.subr.mxu0 0.0
    %2582 = vmatpush1.msra.mxu0 0.0
    %2583 = vmatprep.subr.mxu0 0.0
    %2584 = vmatpush1.msra.mxu0 0.0
    %2585 = vmatprep.subr.mxu0 0.0
    %2586 = vmatpush1.msra.mxu0 0.0
    %2587 = vmatprep.subr.mxu0 0.0
    %2588 = vmatpush1.msra.mxu0 0.0
    %2589 = vmatprep.subr.mxu0 0.0
    %2590 = vmatpush1.msra.mxu0 0.0
    %2591 = vmatprep.subr.mxu0 0.0
    %2592 = vmatpush1.msra.mxu0 0.0
    %2593 = vmatprep.subr.mxu0 0.0
    %2594 = vmatpush1.msra.mxu0 0.0
    %2595 = vmatprep.subr.mxu0 0.0
    %2596 = vmatpush1.msra.mxu0 0.0
    %2597 = vmatprep.subr.mxu0 0.0
    %2598 = vmatpush1.msra.mxu0 0.0
    %2599 = vmatprep.subr.mxu0 0.0
    %2600 = vmatpush1.msra.mxu0 0.0
    %2601 = vmatprep.subr.mxu0 0.0
    %2602 = vmatpush1.msra.mxu0 0.0
    %2603 = vmatprep.subr.mxu0 0.0
    %2604 = vmatpush1.msra.mxu0 0.0
    %2605 = vmatprep.subr.mxu0 0.0
    %2606 = vmatpush1.msra.mxu0 0.0
    %2607 = vmatprep.mubr.f32.mxu0 0.0
    %2608 = vmatmul.mubr.f32.gmra.mrb[0].mxu0 %v2315
    %v2609 = vpop.f32.mrb[0].mxu0
    %v2610 = vadd.f32 0.0, %v2609
    %v2611 = vpop.f32.mrb[0].mxu0
    %2612 = vdwg.mxu0
    %v2613 = vadd.f32 %v720, %v2610
    %v2614 = vxor.u32 %v2613, 2147483648
    %v2615 = vmul.f32 %v2614, 1.442695
    %v2616 = vpow.pop %v2615
    %v2617 = vadd.f32 %v2616, 1.0
    %v2618 = vrcp.pop %v2617
    %v2619 = vmul.f32 1.0, %v2618
    %v2620 = vmul.f32 %v2470, %v2309
    %v2621 = vmul.f32 %v2393, %v2542
    %v2622 = vadd.f32 %v2620, %v2621
    %v2623 = vtanh.pop %v2622
    %v2624 = vmul.f32 %v2619, %v2623
    %v2625 = vmul.f32 %v2000, 0.5
    %v2626 = vadd.f32 %v2624, %v2625
    %v2628 = vsel %vm752, %v2626, 0
    %2630 = vmatprep.subr.mxu0 0.0
    %2631 = vmatpush1.msra.mxu0 %v733
    %2632 = vmatprep.subr.mxu0 0.0
    %2633 = vmatpush1.msra.mxu0 %v734
    %2634 = vmatprep.subr.mxu0 0.0
    %2635 = vmatpush1.msra.mxu0 %v735
    %2636 = vmatprep.subr.mxu0 0.0
    %2637 = vmatpush1.msra.mxu0 %v736
    %2638 = vmatprep.subr.mxu0 0.0
    %2639 = vmatpush1.msra.mxu0 0.0
    %2640 = vmatprep.subr.mxu0 0.0
    %2641 = vmatpush1.msra.mxu0 0.0
    %2642 = vmatprep.subr.mxu0 0.0
    %2643 = vmatpush1.msra.mxu0 0.0
    %2644 = vmatprep.subr.mxu0 0.0
    %2645 = vmatpush1.msra.mxu0 0.0
    %2646 = vmatprep.subr.mxu0 0.0
    %2647 = vmatpush1.msra.mxu0 0.0
    %2648 = vmatprep.subr.mxu0 0.0
    %2649 = vmatpush1.msra.mxu0 0.0
    %2650 = vmatprep.subr.mxu0 0.0
    %2651 = vmatpush1.msra.mxu0 0.0
    %2652 = vmatprep.subr.mxu0 0.0
    %2653 = vmatpush1.msra.mxu0 0.0
    %2654 = vmatprep.subr.mxu0 0.0
    %2655 = vmatpush1.msra.mxu0 0.0
    %2656 = vmatprep.subr.mxu0 0.0
    %2657 = vmatpush1.msra.mxu0 0.0
    %2658 = vmatprep.subr.mxu0 0.0
    %2659 = vmatpush1.msra.mxu0 0.0
    %2660 = vmatprep.subr.mxu0 0.0
    %2661 = vmatpush1.msra.mxu0 0.0
    %2662 = vmatprep.subr.mxu0 0.0
    %2663 = vmatpush1.msra.mxu0 0.0
    %2664 = vmatprep.subr.mxu0 0.0
    %2665 = vmatpush1.msra.mxu0 0.0
    %2666 = vmatprep.subr.mxu0 0.0
    %2667 = vmatpush1.msra.mxu0 0.0
    %2668 = vmatprep.subr.mxu0 0.0
    %2669 = vmatpush1.msra.mxu0 0.0
    %2670 = vmatprep.subr.mxu0 0.0
    %2671 = vmatpush1.msra.mxu0 0.0
    %2672 = vmatprep.subr.mxu0 0.0
    %2673 = vmatpush1.msra.mxu0 0.0
    %2674 = vmatprep.subr.mxu0 0.0
    %2675 = vmatpush1.msra.mxu0 0.0
    %2676 = vmatprep.subr.mxu0 0.0
    %2677 = vmatpush1.msra.mxu0 0.0
    %2678 = vmatprep.subr.mxu0 0.0
    %2679 = vmatpush1.msra.mxu0 0.0
    %2680 = vmatprep.subr.mxu0 0.0
    %2681 = vmatpush1.msra.mxu0 0.0
    %2682 = vmatprep.subr.mxu0 0.0
    %2683 = vmatpush1.msra.mxu0 0.0
    %2684 = vmatprep.subr.mxu0 0.0
    %2685 = vmatpush1.msra.mxu0 0.0
    %2686 = vmatprep.subr.mxu0 0.0
    %2687 = vmatpush1.msra.mxu0 0.0
    %2688 = vmatprep.subr.mxu0 0.0
    %2689 = vmatpush1.msra.mxu0 0.0
    %2690 = vmatprep.subr.mxu0 0.0
    %2691 = vmatpush1.msra.mxu0 0.0
    %2692 = vmatprep.subr.mxu0 0.0
    %2693 = vmatpush1.msra.mxu0 0.0
    %2694 = vmatprep.mubr.f32.mxu0 0.0
    %2695 = vmatmul.mubr.f32.gmra.mrb[0].mxu0 %v2628
    %v2696 = vpop.f32.mrb[0].mxu0
    %v2697 = vadd.f32 0.0, %v2696
    %v2698 = vpop.f32.mrb[0].mxu0
    %2699 = vdwg.mxu0
    %v2700 = vadd.f32 %v371, %v2697
    %v2701 = vxor.u32 %v2700, 2147483648
    %v2702 = vmul.f32 %v2701, 1.442695
    %v2703 = vpow.pop %v2702
    %v2704 = vadd.f32 %v2703, 1.0
    %v2705 = vrcp.pop %v2704
    %v2706 = vmul.f32 1.0, %v2705
    %2707 = vmatprep.subr.mxu0 0.0
    %2708 = vmatpush1.msra.mxu0 %v738
    %2709 = vmatprep.subr.mxu0 0.0
    %2710 = vmatpush1.msra.mxu0 %v739
    %2711 = vmatprep.subr.mxu0 0.0
    %2712 = vmatpush1.msra.mxu0 %v740
    %2713 = vmatprep.subr.mxu0 0.0
    %2714 = vmatpush1.msra.mxu0 %v741
    %2715 = vmatprep.subr.mxu0 0.0
    %2716 = vmatpush1.msra.mxu0 0.0
    %2717 = vmatprep.subr.mxu0 0.0
    %2718 = vmatpush1.msra.mxu0 0.0
    %2719 = vmatprep.subr.mxu0 0.0
    %2720 = vmatpush1.msra.mxu0 0.0
    %2721 = vmatprep.subr.mxu0 0.0
    %2722 = vmatpush1.msra.mxu0 0.0
    %2723 = vmatprep.subr.mxu0 0.0
    %2724 = vmatpush1.msra.mxu0 0.0
    %2725 = vmatprep.subr.mxu0 0.0
    %2726 = vmatpush1.msra.mxu0 0.0
    %2727 = vmatprep.subr.mxu0 0.0
    %2728 = vmatpush1.msra.mxu0 0.0
    %2729 = vmatprep.subr.mxu0 0.0
    %2730 = vmatpush1.msra.mxu0 0.0
    %2731 = vmatprep.subr.mxu0 0.0
    %2732 = vmatpush1.msra.mxu0 0.0
    %2733 = vmatprep.subr.mxu0 0.0
    %2734 = vmatpush1.msra.mxu0 0.0
    %2735 = vmatprep.subr.mxu0 0.0
    %2736 = vmatpush1.msra.mxu0 0.0
    %2737 = vmatprep.subr.mxu0 0.0
    %2738 = vmatpush1.msra.mxu0 0.0
    %2739 = vmatprep.subr.mxu0 0.0
    %2740 = vmatpush1.msra.mxu0 0.0
    %2741 = vmatprep.subr.mxu0 0.0
    %2742 = vmatpush1.msra.mxu0 0.0
    %2743 = vmatprep.subr.mxu0 0.0
    %2744 = vmatpush1.msra.mxu0 0.0
    %2745 = vmatprep.subr.mxu0 0.0
    %2746 = vmatpush1.msra.mxu0 0.0
    %2747 = vmatprep.subr.mxu0 0.0
    %2748 = vmatpush1.msra.mxu0 0.0
    %2749 = vmatprep.subr.mxu0 0.0
    %2750 = vmatpush1.msra.mxu0 0.0
    %2751 = vmatprep.subr.mxu0 0.0
    %2752 = vmatpush1.msra.mxu0 0.0
    %2753 = vmatprep.subr.mxu0 0.0
    %2754 = vmatpush1.msra.mxu0 0.0
    %2755 = vmatprep.subr.mxu0 0.0
    %2756 = vmatpush1.msra.mxu0 0.0
    %2757 = vmatprep.subr.mxu0 0.0
    %2758 = vmatpush1.msra.mxu0 0.0
    %2759 = vmatprep.subr.mxu0 0.0
    %2760 = vmatpush1.msra.mxu0 0.0
    %2761 = vmatprep.subr.mxu0 0.0
    %2762 = vmatpush1.msra.mxu0 0.0
    %2763 = vmatprep.subr.mxu0 0.0
    %2764 = vmatpush1.msra.mxu0 0.0
    %2765 = vmatprep.subr.mxu0 0.0
    %2766 = vmatpush1.msra.mxu0 0.0
    %2767 = vmatprep.subr.mxu0 0.0
    %2768 = vmatpush1.msra.mxu0 0.0
    %2769 = vmatprep.subr.mxu0 0.0
    %2770 = vmatpush1.msra.mxu0 0.0
    %2771 = vmatprep.mubr.f32.mxu0 0.0
    %2772 = vmatmul.mubr.f32.gmra.mrb[0].mxu0 %v2628
    %v2773 = vpop.f32.mrb[0].mxu0
    %v2774 = vadd.f32 0.0, %v2773
    %v2775 = vpop.f32.mrb[0].mxu0
    %2776 = vdwg.mxu0
    %v2777 = vadd.f32 %v489, %v2774
    %v2778 = vxor.u32 %v2777, 2147483648
    %v2779 = vmul.f32 %v2778, 1.442695
    %v2780 = vpow.pop %v2779
    %v2781 = vadd.f32 %v2780, 1.0
    %v2782 = vrcp.pop %v2781
    %v2783 = vmul.f32 1.0, %v2782
    %2784 = vmatprep.subr.mxu0 0.0
    %2785 = vmatpush1.msra.mxu0 %v743
    %2786 = vmatprep.subr.mxu0 0.0
    %2787 = vmatpush1.msra.mxu0 %v744
    %2788 = vmatprep.subr.mxu0 0.0
    %2789 = vmatpush1.msra.mxu0 %v745
    %2790 = vmatprep.subr.mxu0 0.0
    %2791 = vmatpush1.msra.mxu0 %v746
    %2792 = vmatprep.subr.mxu0 0.0
    %2793 = vmatpush1.msra.mxu0 0.0
    %2794 = vmatprep.subr.mxu0 0.0
    %2795 = vmatpush1.msra.mxu0 0.0
    %2796 = vmatprep.subr.mxu0 0.0
    %2797 = vmatpush1.msra.mxu0 0.0
    %2798 = vmatprep.subr.mxu0 0.0
    %2799 = vmatpush1.msra.mxu0 0.0
    %2800 = vmatprep.subr.mxu0 0.0
    %2801 = vmatpush1.msra.mxu0 0.0
    %2802 = vmatprep.subr.mxu0 0.0
    %2803 = vmatpush1.msra.mxu0 0.0
    %2804 = vmatprep.subr.mxu0 0.0
    %2805 = vmatpush1.msra.mxu0 0.0
    %2806 = vmatprep.subr.mxu0 0.0
    %2807 = vmatpush1.msra.mxu0 0.0
    %2808 = vmatprep.subr.mxu0 0.0
    %2809 = vmatpush1.msra.mxu0 0.0
    %2810 = vmatprep.subr.mxu0 0.0
    %2811 = vmatpush1.msra.mxu0 0.0
    %2812 = vmatprep.subr.mxu0 0.0
    %2813 = vmatpush1.msra.mxu0 0.0
    %2814 = vmatprep.subr.mxu0 0.0
    %2815 = vmatpush1.msra.mxu0 0.0
    %2816 = vmatprep.subr.mxu0 0.0
    %2817 = vmatpush1.msra.mxu0 0.0
    %2818 = vmatprep.subr.mxu0 0.0
    %2819 = vmatpush1.msra.mxu0 0.0
    %2820 = vmatprep.subr.mxu0 0.0
    %2821 = vmatpush1.msra.mxu0 0.0
    %2822 = vmatprep.subr.mxu0 0.0
    %2823 = vmatpush1.msra.mxu0 0.0
    %2824 = vmatprep.subr.mxu0 0.0
    %2825 = vmatpush1.msra.mxu0 0.0
    %2826 = vmatprep.subr.mxu0 0.0
    %2827 = vmatpush1.msra.mxu0 0.0
    %2828 = vmatprep.subr.mxu0 0.0
    %2829 = vmatpush1.msra.mxu0 0.0
    %2830 = vmatprep.subr.mxu0 0.0
    %2831 = vmatpush1.msra.mxu0 0.0
    %2832 = vmatprep.subr.mxu0 0.0
    %2833 = vmatpush1.msra.mxu0 0.0
    %2834 = vmatprep.subr.mxu0 0.0
    %2835 = vmatpush1.msra.mxu0 0.0
    %2836 = vmatprep.subr.mxu0 0.0
    %2837 = vmatpush1.msra.mxu0 0.0
    %2838 = vmatprep.subr.mxu0 0.0
    %2839 = vmatpush1.msra.mxu0 0.0
    %2840 = vmatprep.subr.mxu0 0.0
    %2841 = vmatpush1.msra.mxu0 0.0
    %2842 = vmatprep.subr.mxu0 0.0
    %2843 = vmatpush1.msra.mxu0 0.0
    %2844 = vmatprep.subr.mxu0 0.0
    %2845 = vmatpush1.msra.mxu0 0.0
    %2846 = vmatprep.subr.mxu0 0.0
    %2847 = vmatpush1.msra.mxu0 0.0
    %2848 = vmatprep.mubr.f32.mxu0 0.0
    %2849 = vmatmul.mubr.f32.gmra.mrb[0].mxu0 %v2628
    %v2850 = vpop.f32.mrb[0].mxu0
    %v2851 = vadd.f32 0.0, %v2850
    %v2852 = vpop.f32.mrb[0].mxu0
    %2853 = vdwg.mxu0
    %v2854 = vadd.f32 %v607, %v2851
    %v2855 = vtanh.pop %v2854
    %2856 = vmatprep.subr.mxu0 0.0
    %2857 = vmatpush1.msra.mxu0 %v748
    %2858 = vmatprep.subr.mxu0 0.0
    %2859 = vmatpush1.msra.mxu0 %v749
    %2860 = vmatprep.subr.mxu0 0.0
    %2861 = vmatpush1.msra.mxu0 %v750
    %2862 = vmatprep.subr.mxu0 0.0
    %2863 = vmatpush1.msra.mxu0 %v751
    %2864 = vmatprep.subr.mxu0 0.0
    %2865 = vmatpush1.msra.mxu0 0.0
    %2866 = vmatprep.subr.mxu0 0.0
    %2867 = vmatpush1.msra.mxu0 0.0
    %2868 = vmatprep.subr.mxu0 0.0
    %2869 = vmatpush1.msra.mxu0 0.0
    %2870 = vmatprep.subr.mxu0 0.0
    %2871 = vmatpush1.msra.mxu0 0.0
    %2872 = vmatprep.subr.mxu0 0.0
    %2873 = vmatpush1.msra.mxu0 0.0
    %2874 = vmatprep.subr.mxu0 0.0
    %2875 = vmatpush1.msra.mxu0 0.0
    %2876 = vmatprep.subr.mxu0 0.0
    %2877 = vmatpush1.msra.mxu0 0.0
    %2878 = vmatprep.subr.mxu0 0.0
    %2879 = vmatpush1.msra.mxu0 0.0
    %2880 = vmatprep.subr.mxu0 0.0
    %2881 = vmatpush1.msra.mxu0 0.0
    %2882 = vmatprep.subr.mxu0 0.0
    %2883 = vmatpush1.msra.mxu0 0.0
    %2884 = vmatprep.subr.mxu0 0.0
    %2885 = vmatpush1.msra.mxu0 0.0
    %2886 = vmatprep.subr.mxu0 0.0
    %2887 = vmatpush1.msra.mxu0 0.0
    %2888 = vmatprep.subr.mxu0 0.0
    %2889 = vmatpush1.msra.mxu0 0.0
    %2890 = vmatprep.subr.mxu0 0.0
    %2891 = vmatpush1.msra.mxu0 0.0
    %2892 = vmatprep.subr.mxu0 0.0
    %2893 = vmatpush1.msra.mxu0 0.0
    %2894 = vmatprep.subr.mxu0 0.0
    %2895 = vmatpush1.msra.mxu0 0.0
    %2896 = vmatprep.subr.mxu0 0.0
    %2897 = vmatpush1.msra.mxu0 0.0
    %2898 = vmatprep.subr.mxu0 0.0
    %2899 = vmatpush1.msra.mxu0 0.0
    %2900 = vmatprep.subr.mxu0 0.0
    %2901 = vmatpush1.msra.mxu0 0.0
    %2902 = vmatprep.subr.mxu0 0.0
    %2903 = vmatpush1.msra.mxu0 0.0
    %2904 = vmatprep.subr.mxu0 0.0
    %2905 = vmatpush1.msra.mxu0 0.0
    %2906 = vmatprep.subr.mxu0 0.0
    %2907 = vmatpush1.msra.mxu0 0.0
    %2908 = vmatprep.subr.mxu0 0.0
    %2909 = vmatpush1.msra.mxu0 0.0
    %2910 = vmatprep.subr.mxu0 0.0
    %2911 = vmatpush1.msra.mxu0 0.0
    %2912 = vmatprep.subr.mxu0 0.0
    %2913 = vmatpush1.msra.mxu0 0.0
    %2914 = vmatprep.subr.mxu0 0.0
    %2915 = vmatpush1.msra.mxu0 0.0
    %2916 = vmatprep.subr.mxu0 0.0
    %2917 = vmatpush1.msra.mxu0 0.0
    %2918 = vmatprep.subr.mxu0 0.0
    %2919 = vmatpush1.msra.mxu0 0.0
    %2920 = vmatprep.mubr.f32.mxu0 0.0
    %2921 = vmatmul.mubr.f32.gmra.mrb[0].mxu0 %v2628
    %v2922 = vpop.f32.mrb[0].mxu0
    %v2923 = vadd.f32 0.0, %v2922
    %v2924 = vpop.f32.mrb[0].mxu0
    %2925 = vdwg.mxu0
    %v2926 = vadd.f32 %v725, %v2923
    %v2927 = vxor.u32 %v2926, 2147483648
    %v2928 = vmul.f32 %v2927, 1.442695
    %v2929 = vpow.pop %v2928
    %v2930 = vadd.f32 %v2929, 1.0
    %v2931 = vrcp.pop %v2930
    %v2932 = vmul.f32 1.0, %v2931
    %v2933 = vmul.f32 %v2783, %v2622
    %v2934 = vmul.f32 %v2706, %v2855
    %v2935 = vadd.f32 %v2933, %v2934
    %v2936 = vtanh.pop %v2935
    %v2937 = vmul.f32 %v2932, %v2936
    %v2938 = vmul.f32 %v2313, 0.5
    %v2939 = vadd.f32 %v2937, %v2938
    %v2941 = vsel %vm752, %v2939, 0
    %2943 = vmatprep.subr.mxu0 0.0
    %2944 = vmatpush1.msra.mxu0 %v733
    %2945 = vmatprep.subr.mxu0 0.0
    %2946 = vmatpush1.msra.mxu0 %v734
    %2947 = vmatprep.subr.mxu0 0.0
    %2948 = vmatpush1.msra.mxu0 %v735
    %2949 = vmatprep.subr.mxu0 0.0
    %2950 = vmatpush1.msra.mxu0 %v736
    %2951 = vmatprep.subr.mxu0 0.0
    %2952 = vmatpush1.msra.mxu0 0.0
    %2953 = vmatprep.subr.mxu0 0.0
    %2954 = vmatpush1.msra.mxu0 0.0
    %2955 = vmatprep.subr.mxu0 0.0
    %2956 = vmatpush1.msra.mxu0 0.0
    %2957 = vmatprep.subr.mxu0 0.0
    %2958 = vmatpush1.msra.mxu0 0.0
    %2959 = vmatprep.subr.mxu0 0.0
    %2960 = vmatpush1.msra.mxu0 0.0
    %2961 = vmatprep.subr.mxu0 0.0
    %2962 = vmatpush1.msra.mxu0 0.0
    %2963 = vmatprep.subr.mxu0 0.0
    %2964 = vmatpush1.msra.mxu0 0.0
    %2965 = vmatprep.subr.mxu0 0.0
    %2966 = vmatpush1.msra.mxu0 0.0
    %2967 = vmatprep.subr.mxu0 0.0
    %2968 = vmatpush1.msra.mxu0 0.0
    %2969 = vmatprep.subr.mxu0 0.0
    %2970 = vmatpush1.msra.mxu0 0.0
    %2971 = vmatprep.subr.mxu0 0.0
    %2972 = vmatpush1.msra.mxu0 0.0
    %2973 = vmatprep.subr.mxu0 0.0
    %2974 = vmatpush1.msra.mxu0 0.0
    %2975 = vmatprep.subr.mxu0 0.0
    %2976 = vmatpush1.msra.mxu0 0.0
    %2977 = vmatprep.subr.mxu0 0.0
    %2978 = vmatpush1.msra.mxu0 0.0
    %2979 = vmatprep.subr.mxu0 0.0
    %2980 = vmatpush1.msra.mxu0 0.0
    %2981 = vmatprep.subr.mxu0 0.0
    %2982 = vmatpush1.msra.mxu0 0.0
    %2983 = vmatprep.subr.mxu0 0.0
    %2984 = vmatpush1.msra.mxu0 0.0
    %2985 = vmatprep.subr.mxu0 0.0
    %2986 = vmatpush1.msra.mxu0 0.0
    %2987 = vmatprep.subr.mxu0 0.0
    %2988 = vmatpush1.msra.mxu0 0.0
    %2989 = vmatprep.subr.mxu0 0.0
    %2990 = vmatpush1.msra.mxu0 0.0
    %2991 = vmatprep.subr.mxu0 0.0
    %2992 = vmatpush1.msra.mxu0 0.0
    %2993 = vmatprep.subr.mxu0 0.0
    %2994 = vmatpush1.msra.mxu0 0.0
    %2995 = vmatprep.subr.mxu0 0.0
    %2996 = vmatpush1.msra.mxu0 0.0
    %2997 = vmatprep.subr.mxu0 0.0
    %2998 = vmatpush1.msra.mxu0 0.0
    %2999 = vmatprep.subr.mxu0 0.0
    %3000 = vmatpush1.msra.mxu0 0.0
    %3001 = vmatprep.subr.mxu0 0.0
    %3002 = vmatpush1.msra.mxu0 0.0
    %3003 = vmatprep.subr.mxu0 0.0
    %3004 = vmatpush1.msra.mxu0 0.0
    %3005 = vmatprep.subr.mxu0 0.0
    %3006 = vmatpush1.msra.mxu0 0.0
    %3007 = vmatprep.mubr.f32.mxu0 0.0
    %3008 = vmatmul.mubr.f32.gmra.mrb[0].mxu0 %v2941
    %v3009 = vpop.f32.mrb[0].mxu0
    %v3010 = vadd.f32 0.0, %v3009
    %v3011 = vpop.f32.mrb[0].mxu0
    %3012 = vdwg.mxu0
    %v3013 = vadd.f32 %v376, %v3010
    %v3014 = vxor.u32 %v3013, 2147483648
    %v3015 = vmul.f32 %v3014, 1.442695
    %v3016 = vpow.pop %v3015
    %v3017 = vadd.f32 %v3016, 1.0
    %v3018 = vrcp.pop %v3017
    %v3019 = vmul.f32 1.0, %v3018
    %3020 = vmatprep.subr.mxu0 0.0
    %3021 = vmatpush1.msra.mxu0 %v738
    %3022 = vmatprep.subr.mxu0 0.0
    %3023 = vmatpush1.msra.mxu0 %v739
    %3024 = vmatprep.subr.mxu0 0.0
    %3025 = vmatpush1.msra.mxu0 %v740
    %3026 = vmatprep.subr.mxu0 0.0
    %3027 = vmatpush1.msra.mxu0 %v741
    %3028 = vmatprep.subr.mxu0 0.0
    %3029 = vmatpush1.msra.mxu0 0.0
    %3030 = vmatprep.subr.mxu0 0.0
    %3031 = vmatpush1.msra.mxu0 0.0
    %3032 = vmatprep.subr.mxu0 0.0
    %3033 = vmatpush1.msra.mxu0 0.0
    %3034 = vmatprep.subr.mxu0 0.0
    %3035 = vmatpush1.msra.mxu0 0.0
    %3036 = vmatprep.subr.mxu0 0.0
    %3037 = vmatpush1.msra.mxu0 0.0
    %3038 = vmatprep.subr.mxu0 0.0
    %3039 = vmatpush1.msra.mxu0 0.0
    %3040 = vmatprep.subr.mxu0 0.0
    %3041 = vmatpush1.msra.mxu0 0.0
    %3042 = vmatprep.subr.mxu0 0.0
    %3043 = vmatpush1.msra.mxu0 0.0
    %3044 = vmatprep.subr.mxu0 0.0
    %3045 = vmatpush1.msra.mxu0 0.0
    %3046 = vmatprep.subr.mxu0 0.0
    %3047 = vmatpush1.msra.mxu0 0.0
    %3048 = vmatprep.subr.mxu0 0.0
    %3049 = vmatpush1.msra.mxu0 0.0
    %3050 = vmatprep.subr.mxu0 0.0
    %3051 = vmatpush1.msra.mxu0 0.0
    %3052 = vmatprep.subr.mxu0 0.0
    %3053 = vmatpush1.msra.mxu0 0.0
    %3054 = vmatprep.subr.mxu0 0.0
    %3055 = vmatpush1.msra.mxu0 0.0
    %3056 = vmatprep.subr.mxu0 0.0
    %3057 = vmatpush1.msra.mxu0 0.0
    %3058 = vmatprep.subr.mxu0 0.0
    %3059 = vmatpush1.msra.mxu0 0.0
    %3060 = vmatprep.subr.mxu0 0.0
    %3061 = vmatpush1.msra.mxu0 0.0
    %3062 = vmatprep.subr.mxu0 0.0
    %3063 = vmatpush1.msra.mxu0 0.0
    %3064 = vmatprep.subr.mxu0 0.0
    %3065 = vmatpush1.msra.mxu0 0.0
    %3066 = vmatprep.subr.mxu0 0.0
    %3067 = vmatpush1.msra.mxu0 0.0
    %3068 = vmatprep.subr.mxu0 0.0
    %3069 = vmatpush1.msra.mxu0 0.0
    %3070 = vmatprep.subr.mxu0 0.0
    %3071 = vmatpush1.msra.mxu0 0.0
    %3072 = vmatprep.subr.mxu0 0.0
    %3073 = vmatpush1.msra.mxu0 0.0
    %3074 = vmatprep.subr.mxu0 0.0
    %3075 = vmatpush1.msra.mxu0 0.0
    %3076 = vmatprep.subr.mxu0 0.0
    %3077 = vmatpush1.msra.mxu0 0.0
    %3078 = vmatprep.subr.mxu0 0.0
    %3079 = vmatpush1.msra.mxu0 0.0
    %3080 = vmatprep.subr.mxu0 0.0
    %3081 = vmatpush1.msra.mxu0 0.0
    %3082 = vmatprep.subr.mxu0 0.0
    %3083 = vmatpush1.msra.mxu0 0.0
    %3084 = vmatprep.mubr.f32.mxu0 0.0
    %3085 = vmatmul.mubr.f32.gmra.mrb[0].mxu0 %v2941
    %v3086 = vpop.f32.mrb[0].mxu0
    %v3087 = vadd.f32 0.0, %v3086
    %v3088 = vpop.f32.mrb[0].mxu0
    %3089 = vdwg.mxu0
    %v3090 = vadd.f32 %v494, %v3087
    %v3091 = vxor.u32 %v3090, 2147483648
    %v3092 = vmul.f32 %v3091, 1.442695
    %v3093 = vpow.pop %v3092
    %v3094 = vadd.f32 %v3093, 1.0
    %v3095 = vrcp.pop %v3094
    %v3096 = vmul.f32 1.0, %v3095
    %3097 = vmatprep.subr.mxu0 0.0
    %3098 = vmatpush1.msra.mxu0 %v743
    %3099 = vmatprep.subr.mxu0 0.0
    %3100 = vmatpush1.msra.mxu0 %v744
    %3101 = vmatprep.subr.mxu0 0.0
    %3102 = vmatpush1.msra.mxu0 %v745
    %3103 = vmatprep.subr.mxu0 0.0
    %3104 = vmatpush1.msra.mxu0 %v746
    %3105 = vmatprep.subr.mxu0 0.0
    %3106 = vmatpush1.msra.mxu0 0.0
    %3107 = vmatprep.subr.mxu0 0.0
    %3108 = vmatpush1.msra.mxu0 0.0
    %3109 = vmatprep.subr.mxu0 0.0
    %3110 = vmatpush1.msra.mxu0 0.0
    %3111 = vmatprep.subr.mxu0 0.0
    %3112 = vmatpush1.msra.mxu0 0.0
    %3113 = vmatprep.subr.mxu0 0.0
    %3114 = vmatpush1.msra.mxu0 0.0
    %3115 = vmatprep.subr.mxu0 0.0
    %3116 = vmatpush1.msra.mxu0 0.0
    %3117 = vmatprep.subr.mxu0 0.0
    %3118 = vmatpush1.msra.mxu0 0.0
    %3119 = vmatprep.subr.mxu0 0.0
    %3120 = vmatpush1.msra.mxu0 0.0
    %3121 = vmatprep.subr.mxu0 0.0
    %3122 = vmatpush1.msra.mxu0 0.0
    %3123 = vmatprep.subr.mxu0 0.0
    %3124 = vmatpush1.msra.mxu0 0.0
    %3125 = vmatprep.subr.mxu0 0.0
    %3126 = vmatpush1.msra.mxu0 0.0
    %3127 = vmatprep.subr.mxu0 0.0
    %3128 = vmatpush1.msra.mxu0 0.0
    %3129 = vmatprep.subr.mxu0 0.0
    %3130 = vmatpush1.msra.mxu0 0.0
    %3131 = vmatprep.subr.mxu0 0.0
    %3132 = vmatpush1.msra.mxu0 0.0
    %3133 = vmatprep.subr.mxu0 0.0
    %3134 = vmatpush1.msra.mxu0 0.0
    %3135 = vmatprep.subr.mxu0 0.0
    %3136 = vmatpush1.msra.mxu0 0.0
    %3137 = vmatprep.subr.mxu0 0.0
    %3138 = vmatpush1.msra.mxu0 0.0
    %3139 = vmatprep.subr.mxu0 0.0
    %3140 = vmatpush1.msra.mxu0 0.0
    %3141 = vmatprep.subr.mxu0 0.0
    %3142 = vmatpush1.msra.mxu0 0.0
    %3143 = vmatprep.subr.mxu0 0.0
    %3144 = vmatpush1.msra.mxu0 0.0
    %3145 = vmatprep.subr.mxu0 0.0
    %3146 = vmatpush1.msra.mxu0 0.0
    %3147 = vmatprep.subr.mxu0 0.0
    %3148 = vmatpush1.msra.mxu0 0.0
    %3149 = vmatprep.subr.mxu0 0.0
    %3150 = vmatpush1.msra.mxu0 0.0
    %3151 = vmatprep.subr.mxu0 0.0
    %3152 = vmatpush1.msra.mxu0 0.0
    %3153 = vmatprep.subr.mxu0 0.0
    %3154 = vmatpush1.msra.mxu0 0.0
    %3155 = vmatprep.subr.mxu0 0.0
    %3156 = vmatpush1.msra.mxu0 0.0
    %3157 = vmatprep.subr.mxu0 0.0
    %3158 = vmatpush1.msra.mxu0 0.0
    %3159 = vmatprep.subr.mxu0 0.0
    %3160 = vmatpush1.msra.mxu0 0.0
    %3161 = vmatprep.mubr.f32.mxu0 0.0
    %3162 = vmatmul.mubr.f32.gmra.mrb[0].mxu0 %v2941
    %v3163 = vpop.f32.mrb[0].mxu0
    %v3164 = vadd.f32 0.0, %v3163
    %v3165 = vpop.f32.mrb[0].mxu0
    %3166 = vdwg.mxu0
    %v3167 = vadd.f32 %v612, %v3164
    %v3168 = vtanh.pop %v3167
    %3169 = vmatprep.subr.mxu0 0.0
    %3170 = vmatpush1.msra.mxu0 %v748
    %3171 = vmatprep.subr.mxu0 0.0
    %3172 = vmatpush1.msra.mxu0 %v749
    %3173 = vmatprep.subr.mxu0 0.0
    %3174 = vmatpush1.msra.mxu0 %v750
    %3175 = vmatprep.subr.mxu0 0.0
    %3176 = vmatpush1.msra.mxu0 %v751
    %3177 = vmatprep.subr.mxu0 0.0
    %3178 = vmatpush1.msra.mxu0 0.0
    %3179 = vmatprep.subr.mxu0 0.0
    %3180 = vmatpush1.msra.mxu0 0.0
    %3181 = vmatprep.subr.mxu0 0.0
    %3182 = vmatpush1.msra.mxu0 0.0
    %3183 = vmatprep.subr.mxu0 0.0
    %3184 = vmatpush1.msra.mxu0 0.0
    %3185 = vmatprep.subr.mxu0 0.0
    %3186 = vmatpush1.msra.mxu0 0.0
    %3187 = vmatprep.subr.mxu0 0.0
    %3188 = vmatpush1.msra.mxu0 0.0
    %3189 = vmatprep.subr.mxu0 0.0
    %3190 = vmatpush1.msra.mxu0 0.0
    %3191 = vmatprep.subr.mxu0 0.0
    %3192 = vmatpush1.msra.mxu0 0.0
    %3193 = vmatprep.subr.mxu0 0.0
    %3194 = vmatpush1.msra.mxu0 0.0
    %3195 = vmatprep.subr.mxu0 0.0
    %3196 = vmatpush1.msra.mxu0 0.0
    %3197 = vmatprep.subr.mxu0 0.0
    %3198 = vmatpush1.msra.mxu0 0.0
    %3199 = vmatprep.subr.mxu0 0.0
    %3200 = vmatpush1.msra.mxu0 0.0
    %3201 = vmatprep.subr.mxu0 0.0
    %3202 = vmatpush1.msra.mxu0 0.0
    %3203 = vmatprep.subr.mxu0 0.0
    %3204 = vmatpush1.msra.mxu0 0.0
    %3205 = vmatprep.subr.mxu0 0.0
    %3206 = vmatpush1.msra.mxu0 0.0
    %3207 = vmatprep.subr.mxu0 0.0
    %3208 = vmatpush1.msra.mxu0 0.0
    %3209 = vmatprep.subr.mxu0 0.0
    %3210 = vmatpush1.msra.mxu0 0.0
    %3211 = vmatprep.subr.mxu0 0.0
    %3212 = vmatpush1.msra.mxu0 0.0
    %3213 = vmatprep.subr.mxu0 0.0
    %3214 = vmatpush1.msra.mxu0 0.0
    %3215 = vmatprep.subr.mxu0 0.0
    %3216 = vmatpush1.msra.mxu0 0.0
    %3217 = vmatprep.subr.mxu0 0.0
    %3218 = vmatpush1.msra.mxu0 0.0
    %3219 = vmatprep.subr.mxu0 0.0
    %3220 = vmatpush1.msra.mxu0 0.0
    %3221 = vmatprep.subr.mxu0 0.0
    %3222 = vmatpush1.msra.mxu0 0.0
    %3223 = vmatprep.subr.mxu0 0.0
    %3224 = vmatpush1.msra.mxu0 0.0
    %3225 = vmatprep.subr.mxu0 0.0
    %3226 = vmatpush1.msra.mxu0 0.0
    %3227 = vmatprep.subr.mxu0 0.0
    %3228 = vmatpush1.msra.mxu0 0.0
    %3229 = vmatprep.subr.mxu0 0.0
    %3230 = vmatpush1.msra.mxu0 0.0
    %3231 = vmatprep.subr.mxu0 0.0
    %3232 = vmatpush1.msra.mxu0 0.0
    %3233 = vmatprep.mubr.f32.mxu0 0.0
    %3234 = vmatmul.mubr.f32.gmra.mrb[0].mxu0 %v2941
    %v3235 = vpop.f32.mrb[0].mxu0
    %v3236 = vadd.f32 0.0, %v3235
    %v3237 = vpop.f32.mrb[0].mxu0
    %3238 = vdwg.mxu0
    %v3239 = vadd.f32 %v730, %v3236
    %v3240 = vxor.u32 %v3239, 2147483648
    %v3241 = vmul.f32 %v3240, 1.442695
    %v3242 = vpow.pop %v3241
    %v3243 = vadd.f32 %v3242, 1.0
    %v3244 = vrcp.pop %v3243
    %v3245 = vmul.f32 1.0, %v3244
    %v3246 = vmul.f32 %v3096, %v2935
    %v3247 = vmul.f32 %v3019, %v3168
    %v3248 = vadd.f32 %v3246, %v3247
    %v3249 = vtanh.pop %v3248
    %v3250 = vmul.f32 %v3245, %v3249
    %v3251 = vmul.f32 %v2626, 0.5
    %v3252 = vadd.f32 %v3250, %v3251
    %v3253 = vld [vmem:[%s6] sm:$0xff]
    %v3254 = vld [vmem:[%s6 + $0x8] sm:$0xff]
    %v3255 = vld [vmem:[%s6 + $0x10] sm:$0xff]
    %v3256 = vld [vmem:[%s6 + $0x18] sm:$0xff]
    %v3257 = vld [vmem:[%s7] sm:$0x1]
    %v3259 = vlaneseq
    %v3260 = vshrl.u32 %v3259, 7
    %v3261 = vsub.s32 0, %v3260
    %v3262 = vrot.slane %v3257, %v3261
    %v3265 = vsel %vm752, %v3252, 0
    %3267 = vmatprep.subr.mxu0 0.0
    %3268 = vmatpush1.msra.mxu0 %v3253
    %3269 = vmatprep.subr.mxu0 0.0
    %3270 = vmatpush1.msra.mxu0 %v3254
    %3271 = vmatprep.subr.mxu0 0.0
    %3272 = vmatpush1.msra.mxu0 %v3255
    %3273 = vmatprep.subr.mxu0 0.0
    %3274 = vmatpush1.msra.mxu0 %v3256
    %3275 = vmatprep.subr.mxu0 0.0
    %3276 = vmatpush1.msra.mxu0 0.0
    %3277 = vmatprep.subr.mxu0 0.0
    %3278 = vmatpush1.msra.mxu0 0.0
    %3279 = vmatprep.subr.mxu0 0.0
    %3280 = vmatpush1.msra.mxu0 0.0
    %3281 = vmatprep.subr.mxu0 0.0
    %3282 = vmatpush1.msra.mxu0 0.0
    %3283 = vmatprep.subr.mxu0 0.0
    %3284 = vmatpush1.msra.mxu0 0.0
    %3285 = vmatprep.subr.mxu0 0.0
    %3286 = vmatpush1.msra.mxu0 0.0
    %3287 = vmatprep.subr.mxu0 0.0
    %3288 = vmatpush1.msra.mxu0 0.0
    %3289 = vmatprep.subr.mxu0 0.0
    %3290 = vmatpush1.msra.mxu0 0.0
    %3291 = vmatprep.subr.mxu0 0.0
    %3292 = vmatpush1.msra.mxu0 0.0
    %3293 = vmatprep.subr.mxu0 0.0
    %3294 = vmatpush1.msra.mxu0 0.0
    %3295 = vmatprep.subr.mxu0 0.0
    %3296 = vmatpush1.msra.mxu0 0.0
    %3297 = vmatprep.subr.mxu0 0.0
    %3298 = vmatpush1.msra.mxu0 0.0
    %3299 = vmatprep.subr.mxu0 0.0
    %3300 = vmatpush1.msra.mxu0 0.0
    %3301 = vmatprep.subr.mxu0 0.0
    %3302 = vmatpush1.msra.mxu0 0.0
    %3303 = vmatprep.subr.mxu0 0.0
    %3304 = vmatpush1.msra.mxu0 0.0
    %3305 = vmatprep.subr.mxu0 0.0
    %3306 = vmatpush1.msra.mxu0 0.0
    %3307 = vmatprep.subr.mxu0 0.0
    %3308 = vmatpush1.msra.mxu0 0.0
    %3309 = vmatprep.subr.mxu0 0.0
    %3310 = vmatpush1.msra.mxu0 0.0
    %3311 = vmatprep.subr.mxu0 0.0
    %3312 = vmatpush1.msra.mxu0 0.0
    %3313 = vmatprep.subr.mxu0 0.0
    %3314 = vmatpush1.msra.mxu0 0.0
    %3315 = vmatprep.subr.mxu0 0.0
    %3316 = vmatpush1.msra.mxu0 0.0
    %3317 = vmatprep.subr.mxu0 0.0
    %3318 = vmatpush1.msra.mxu0 0.0
    %3319 = vmatprep.subr.mxu0 0.0
    %3320 = vmatpush1.msra.mxu0 0.0
    %3321 = vmatprep.subr.mxu0 0.0
    %3322 = vmatpush1.msra.mxu0 0.0
    %3323 = vmatprep.subr.mxu0 0.0
    %3324 = vmatpush1.msra.mxu0 0.0
    %3325 = vmatprep.subr.mxu0 0.0
    %3326 = vmatpush1.msra.mxu0 0.0
    %3327 = vmatprep.subr.mxu0 0.0
    %3328 = vmatpush1.msra.mxu0 0.0
    %3329 = vmatprep.subr.mxu0 0.0
    %3330 = vmatpush1.msra.mxu0 0.0
    %3331 = vmatprep.mubr.f32.mxu0 0.0
    %3332 = vmatmul.mubr.f32.gmra.mrb[0].mxu0 %v1065
    %v3333 = vpop.f32.mrb[0].mxu0
    %v3334 = vadd.f32 %v3262, %v3333
    %v3335 = vpop.f32.mrb[0].mxu0
    %3336 = vmatprep.mubr.f32.mxu0 0.0
    %3337 = vmatmul.mubr.f32.gmra.mrb[0].mxu0 %v1376
    %v3338 = vpop.f32.mrb[0].mxu0
    %v3339 = vadd.f32 %v3262, %v3338
    %v3340 = vpop.f32.mrb[0].mxu0
    %3341 = vmatprep.mubr.f32.mxu0 0.0
    %3342 = vmatmul.mubr.f32.gmra.mrb[0].mxu0 %v1689
    %v3343 = vpop.f32.mrb[0].mxu0
    %v3344 = vadd.f32 %v3262, %v3343
    %v3345 = vpop.f32.mrb[0].mxu0
    %3346 = vmatprep.mubr.f32.mxu0 0.0
    %3347 = vmatmul.mubr.f32.gmra.mrb[0].mxu0 %v2002
    %v3348 = vpop.f32.mrb[0].mxu0
    %v3349 = vadd.f32 %v3262, %v3348
    %v3350 = vpop.f32.mrb[0].mxu0
    %3351 = vmatprep.mubr.f32.mxu0 0.0
    %3352 = vmatmul.mubr.f32.gmra.mrb[0].mxu0 %v2315
    %v3353 = vpop.f32.mrb[0].mxu0
    %v3354 = vadd.f32 %v3262, %v3353
    %v3355 = vpop.f32.mrb[0].mxu0
    %3356 = vmatprep.mubr.f32.mxu0 0.0
    %3357 = vmatmul.mubr.f32.gmra.mrb[0].mxu0 %v2628
    %v3358 = vpop.f32.mrb[0].mxu0
    %v3359 = vadd.f32 %v3262, %v3358
    %v3360 = vpop.f32.mrb[0].mxu0
    %3361 = vmatprep.mubr.f32.mxu0 0.0
    %3362 = vmatmul.mubr.f32.gmra.mrb[0].mxu0 %v2941
    %v3363 = vpop.f32.mrb[0].mxu0
    %v3364 = vadd.f32 %v3262, %v3363
    %v3365 = vpop.f32.mrb[0].mxu0
    %3366 = vmatprep.mubr.f32.mxu0 0.0
    %3367 = vmatmul.mubr.f32.gmra.mrb[0].mxu0 %v3265
    %v3368 = vpop.f32.mrb[0].mxu0
    %v3369 = vadd.f32 %v3262, %v3368
    %v3370 = vpop.f32.mrb[0].mxu0
    %3371 = vdwg.mxu0
    %v3372 = vadd.f32 %v199, %v3334
    %v3373 = vadd.f32 %v204, %v3339
    %v3374 = vadd.f32 %v209, %v3344
    %v3375 = vadd.f32 %v214, %v3349
    %v3376 = vadd.f32 %v219, %v3354
    %v3377 = vadd.f32 %v224, %v3359
    %v3378 = vadd.f32 %v229, %v3364
    %v3379 = vadd.f32 %v234, %v3369
    %3380 = vst.msk [vmem:[%s8] sm:$0xff] %vm245, %v3372
    %3381 = vst.msk [vmem:[%s8 + $0x8] sm:$0xff] %vm245, %v3373
    %3382 = vst.msk [vmem:[%s8 + $0x10] sm:$0xff] %vm245, %v3374
    %3383 = vst.msk [vmem:[%s8 + $0x18] sm:$0xff] %vm245, %v3375
    %3384 = vst.msk [vmem:[%s8 + $0x20] sm:$0xff] %vm245, %v3376
    %3385 = vst.msk [vmem:[%s8 + $0x28] sm:$0xff] %vm245, %v3377
    %3386 = vst.msk [vmem:[%s8 + $0x30] sm:$0xff] %vm245, %v3378
    %3387 = vst.msk [vmem:[%s8 + $0x38] sm:$0xff] %vm245, %v3379
    // Predicated region
    $region38: #{tpu_custom_call.1} parent=1 // pred_check
      _
    $region39: #{tpu_custom_call.1} parent=1 // pred_check_branch
      %3389 = sbr.rel (0) target = $region41
    $region40: #{tpu_custom_call.1} parent=1 // pred_region
      _
    $region41: #{tpu_custom_call.1} parent=1 // pred_fallthru
      _
    // Predicated region
    $region42: #{tpu_custom_call.1} parent=1 // pred_check
      _
    $region43: #{tpu_custom_call.1} parent=1 // pred_check_branch
      %3391 = sbr.rel (0) target = $region45
    $region44: #{tpu_custom_call.1} parent=1 // pred_region
      _
    $region45: #{tpu_custom_call.1} parent=1 // pred_fallthru
      _
    %3392 = vsyncpa [#allocation3], 1

</llo_original>
